<compile_context>
chip_gen: v5e
topology: v5e:2x2
jax: 0.10.0
libtpu: 0.0.40
codegen_flags: <defaults>
</compile_context>

<pallas_src>
import math
from functools import partial

import jax
import jax.numpy as jnp
from jax.experimental import pallas as pl
from jax.experimental.pallas import tpu as pltpu


# ---------------------------------------------------------------------------
# config / helpers
# ---------------------------------------------------------------------------

# Set to jnp.bfloat16 for ~4x MXU throughput on v6e/v7x (numerics delta ~1e-2
# vs the f32 PyTorch reference); f32 accumulation is kept either way.
_COMPUTE_DTYPE = jnp.float32

# 32 MiB scoped VMEM is safe across v5e/v6e (128 MiB phys) and v7x (64 MiB phys,
# 32 MiB default scoped).  All tile choices below stay within this budget.
_VMEM_LIMIT = 32 * 1024 * 1024


def _round_up(x, m):
    return ((x + m - 1) // m) * m


def _tile(d, unit, max_t):
    """Pick (tile, padded_dim): tile divides padded_dim; tile is either the full
    (unpadded) dim or a multiple of `unit` (so blocks satisfy TPU tiling)."""
    if d <= max_t:
        return d, d
    dp = _round_up(d, unit)
    t = (max_t // unit) * unit
    while dp % t:
        t -= unit
    return t, dp


# ---------------------------------------------------------------------------
# kernels
# ---------------------------------------------------------------------------

def _matmul_bias_kernel(x_ref, w_ref, b_ref, o_ref, acc_ref):
    k = pl.program_id(2)

    @pl.when(k == 0)
    def _():
        acc_ref[...] = jnp.zeros_like(acc_ref)

    acc_ref[...] += jnp.dot(x_ref[...].astype(_COMPUTE_DTYPE),
                            w_ref[...].astype(_COMPUTE_DTYPE),
                            preferred_element_type=jnp.float32)

    @pl.when(k == pl.num_programs(2) - 1)
    def _():
        o_ref[...] = (acc_ref[...] + b_ref[...]).astype(o_ref.dtype)


def _linear_res_ln_kernel(x_ref, w_ref, b_ref, r_ref, g_ref, bt_ref, o_ref,
                          acc_ref, *, eps):
    # out = LayerNorm(x @ w + b + residual) fused in the matmul epilogue.
    k = pl.program_id(1)

    @pl.when(k == 0)
    def _():
        acc_ref[...] = jnp.zeros_like(acc_ref)

    acc_ref[...] += jnp.dot(x_ref[...].astype(_COMPUTE_DTYPE),
                            w_ref[...].astype(_COMPUTE_DTYPE),
                            preferred_element_type=jnp.float32)

    @pl.when(k == pl.num_programs(1) - 1)
    def _():
        z = acc_ref[...] + b_ref[...] + r_ref[...].astype(jnp.float32)
        mean = jnp.mean(z, axis=-1, keepdims=True)
        zc = z - mean
        var = jnp.mean(zc * zc, axis=-1, keepdims=True)   # biased, like torch
        o_ref[...] = (zc * jax.lax.rsqrt(var + eps) * g_ref[...]
                      + bt_ref[...]).astype(o_ref.dtype)


def _ffn_res_ln_kernel(x_ref, w1_ref, b1_ref, w2_ref, b2_ref, g_ref, bt_ref,
                       o_ref, acc_ref, *, eps):
    # out = LayerNorm(relu(x @ W1 + b1) @ W2 + b2 + x), streaming the hidden
    # dim H as the grid reduction axis so the 4x intermediate never hits HBM.
    j = pl.program_id(1)

    @pl.when(j == 0)
    def _():
        acc_ref[...] = jnp.zeros_like(acc_ref)

    h = jnp.dot(x_ref[...].astype(_COMPUTE_DTYPE),
                w1_ref[...].astype(_COMPUTE_DTYPE),
                preferred_element_type=jnp.float32)
    h = jnp.maximum(h + b1_ref[...], 0.0)
    acc_ref[...] += jnp.dot(h.astype(_COMPUTE_DTYPE),
                            w2_ref[...].astype(_COMPUTE_DTYPE),
                            preferred_element_type=jnp.float32)

    @pl.when(j == pl.num_programs(1) - 1)
    def _():
        z = acc_ref[...] + b2_ref[...] + x_ref[...].astype(jnp.float32)
        mean = jnp.mean(z, axis=-1, keepdims=True)
        zc = z - mean
        var = jnp.mean(zc * zc, axis=-1, keepdims=True)
        o_ref[...] = (zc * jax.lax.rsqrt(var + eps) * g_ref[...]
                      + bt_ref[...]).astype(o_ref.dtype)


def _flash_attn_kernel(q_ref, k_ref, v_ref, mask_ref, o_ref,
                       m_sc, l_sc, acc_sc, *, scale):
    # One (batch, head, q-tile) per output block; online softmax over kv tiles.
    ki = pl.program_id(3)

    @pl.when(ki == 0)
    def _():
        m_sc[...] = jnp.full_like(m_sc, -jnp.inf)
        l_sc[...] = jnp.zeros_like(l_sc)
        acc_sc[...] = jnp.zeros_like(acc_sc)

    q = q_ref[0, :, 0, 0, :].astype(_COMPUTE_DTYPE)   # (tq, Dh)
    k = k_ref[0, :, 0, 0, :].astype(_COMPUTE_DTYPE)   # (tk, Dh)
    v = v_ref[0, :, 0, 0, :].astype(_COMPUTE_DTYPE)   # (tk, Dh)
    msk = mask_ref[0, 0]                              # (tq or 1, tk) f32

    # contract last dims directly (no explicit K transpose)
    s = jax.lax.dot_general(q, k, (((1,), (1,)), ((), ())),
                            preferred_element_type=jnp.float32)   # (tq, tk)
    # masked_fill(mask==0, -1e20) BEFORE scaling by 1/sqrt(emb_dim) (reference)
    s = jnp.where(msk == 0.0, -1e20, s) * scale

    m_prev = m_sc[...]
    m_new = jnp.maximum(m_prev, jnp.max(s, axis=-1, keepdims=True))
    alpha = jnp.exp(m_prev - m_new)
    p = jnp.exp(s - m_new)
    l_sc[...] = alpha * l_sc[...] + jnp.sum(p, axis=-1, keepdims=True)
    acc_sc[...] = alpha * acc_sc[...] + jnp.dot(
        p.astype(_COMPUTE_DTYPE), v, preferred_element_type=jnp.float32)
    m_sc[...] = m_new

    @pl.when(ki == pl.num_programs(3) - 1)
    def _():
        inv_l = pl.reciprocal(l_sc[...], approx=True)
        o_ref[0, :, 0, 0, :] = (acc_sc[...] * inv_l).astype(o_ref.dtype)


# ---------------------------------------------------------------------------
# pallas_call wrappers
# ---------------------------------------------------------------------------

def pallas_linear(x, w, b, *, max_tm=512, max_tn=1024, max_tk=1024):
    M, K = x.shape
    N = w.shape[1]
    tm, Mp = _tile(M, 8, max_tm)
    tk, Kp = _tile(K, 128, max_tk)
    tn, Np = _tile(N, 128, max_tn)

    # TODO(synk): for very large non-128-aligned weights, pre-pad once at init;
    # at these model sizes all pads below are no-ops.
    xp = x if (Mp == M and Kp == K) else jnp.pad(x, ((0, Mp - M), (0, Kp - K)))
    wp = w if (Kp == K and Np == N) else jnp.pad(w, ((0, Kp - K), (0, Np - N)))
    bp = (b if Np == N else jnp.pad(b, (0, Np - N))).reshape(1, Np)

    out = pl.pallas_call(
        _matmul_bias_kernel,
        out_shape=jax.ShapeDtypeStruct((Mp, Np), x.dtype),
        grid=(Mp // tm, Np // tn, Kp // tk),
        in_specs=[pl.BlockSpec((tm, tk), lambda i, j, k: (i, k)),
                  pl.BlockSpec((tk, tn), lambda i, j, k: (k, j)),
                  pl.BlockSpec((1, tn), lambda i, j, k: (0, j))],
        out_specs=pl.BlockSpec((tm, tn), lambda i, j, k: (i, j)),
        scratch_shapes=[pltpu.VMEM((tm, tn), jnp.float32)],
        compiler_params=pltpu.CompilerParams(
            dimension_semantics=("parallel", "parallel", "arbitrary"),
            vmem_limit_bytes=_VMEM_LIMIT),
    )(xp, wp, bp)
    if Mp != M or Np != N:
        out = out[:M, :N]
    return out


def pallas_linear_res_ln(x, w, b, res, gamma, beta, *, eps=1e-5,
                         max_tm=512, max_tk=1024):
    """LayerNorm(x @ w + b + res) with the add+LN fused into the matmul epilogue.
    Requires full output width per tile (needed for the row statistics)."""
    M, K = x.shape
    N = w.shape[1]
    tm, Mp = _tile(M, 8, max_tm)
    tk, Kp = _tile(K, 128, max_tk)

    xp = x if (Mp == M and Kp == K) else jnp.pad(x, ((0, Mp - M), (0, Kp - K)))
    wp = w if Kp == K else jnp.pad(w, ((0, Kp - K), (0, 0)))
    rp = res if Mp == M else jnp.pad(res, ((0, Mp - M), (0, 0)))

    out = pl.pallas_call(
        partial(_linear_res_ln_kernel, eps=eps),
        out_shape=jax.ShapeDtypeStruct((Mp, N), x.dtype),
        grid=(Mp // tm, Kp // tk),
        in_specs=[pl.BlockSpec((tm, tk), lambda i, k: (i, k)),
                  pl.BlockSpec((tk, N), lambda i, k: (k, 0)),
                  pl.BlockSpec((1, N), lambda i, k: (0, 0)),
                  pl.BlockSpec((tm, N), lambda i, k: (i, 0)),
                  pl.BlockSpec((1, N), lambda i, k: (0, 0)),
                  pl.BlockSpec((1, N), lambda i, k: (0, 0))],
        out_specs=pl.BlockSpec((tm, N), lambda i, k: (i, 0)),
        scratch_shapes=[pltpu.VMEM((tm, N), jnp.float32)],
        compiler_params=pltpu.CompilerParams(
            dimension_semantics=("parallel", "arbitrary"),
            vmem_limit_bytes=_VMEM_LIMIT),
    )(xp, wp, b.reshape(1, N), rp, gamma.reshape(1, N), beta.reshape(1, N))
    return out[:M] if Mp != M else out


def pallas_ffn_res_ln(x, w1, b1, w2, b2, gamma, beta, *, eps=1e-5,
                      max_tm=256, max_th=512):
    """LayerNorm(relu(x@W1+b1)@W2 + b2 + x). The hidden dim is streamed as a
    grid reduction axis, so the 4x intermediate never touches HBM."""
    M, D = x.shape
    H = w1.shape[1]
    tm, Mp = _tile(M, 8, max_tm)
    th, Hp = _tile(H, 128, max_th)

    xp = x if Mp == M else jnp.pad(x, ((0, Mp - M), (0, 0)))
    w1p = w1 if Hp == H else jnp.pad(w1, ((0, 0), (0, Hp - H)))
    b1p = b1 if Hp == H else jnp.pad(b1, (0, Hp - H))
    w2p = w2 if Hp == H else jnp.pad(w2, ((0, Hp - H), (0, 0)))

    out = pl.pallas_call(
        partial(_ffn_res_ln_kernel, eps=eps),
        out_shape=jax.ShapeDtypeStruct((Mp, D), x.dtype),
        grid=(Mp // tm, Hp // th),
        in_specs=[pl.BlockSpec((tm, D), lambda i, j: (i, 0)),
                  pl.BlockSpec((D, th), lambda i, j: (0, j)),
                  pl.BlockSpec((1, th), lambda i, j: (0, j)),
                  pl.BlockSpec((th, D), lambda i, j: (j, 0)),
                  pl.BlockSpec((1, D), lambda i, j: (0, 0)),
                  pl.BlockSpec((1, D), lambda i, j: (0, 0)),
                  pl.BlockSpec((1, D), lambda i, j: (0, 0))],
        out_specs=pl.BlockSpec((tm, D), lambda i, j: (i, 0)),
        scratch_shapes=[pltpu.VMEM((tm, D), jnp.float32)],
        compiler_params=pltpu.CompilerParams(
            dimension_semantics=("parallel", "arbitrary"),
            vmem_limit_bytes=_VMEM_LIMIT),
    )(xp, w1p, b1p.reshape(1, Hp), w2p, b2.reshape(1, D),
      gamma.reshape(1, D), beta.reshape(1, D))
    return out[:M] if Mp != M else out


def pallas_flash_attention(q3, kv3, mask, n_heads, emb_dim, scale,
                           k_chunk, v_chunk, *, max_tq=256, max_tk=512):
    """Flash-style multi-head attention.

    q3  : (B, Sq, Cq*emb_dim)  -- the query columns are the first emb_dim cols
    kv3 : (B, Sk, Ck*emb_dim)  -- K columns start at chunk k_chunk, V at v_chunk
    mask: (B, 1, mq, Sk) with mq in {1, Sq};  masked_fill(mask==0, -1e20)

    Heads are selected through BlockSpec index_maps on a free reshape to
    (B, S, chunks*heads, 1, head_dim), so the fused QKV/KV projection outputs
    are never sliced on the XLA side.
    """
    B, Sq, Wq = q3.shape
    _, Sk, Wk = kv3.shape
    Dh = emb_dim // n_heads
    nh = n_heads
    mq = mask.shape[2]

    tq, Sqp = _tile(Sq, 8, max_tq)
    tk, Skp = _tile(Sk, 128, max_tk)

    if Sqp != Sq:
        q3 = jnp.pad(q3, ((0, 0), (0, Sqp - Sq), (0, 0)))
    if Skp != Sk:
        # padded keys/values are zero; padded mask columns are 0 => masked out
        kv3 = jnp.pad(kv3, ((0, 0), (0, Skp - Sk), (0, 0)))
    pad_rows = (Sqp - Sq) if mq == Sq else 0
    if Skp != Sk or pad_rows:
        mask = jnp.pad(mask, ((0, 0), (0, 0), (0, pad_rows), (0, Skp - Sk)))
    mq_p = mask.shape[2]

    q5 = q3.reshape(B, Sqp, Wq // Dh, 1, Dh)
    kv5 = kv3.reshape(B, Skp, Wk // Dh, 1, Dh)
    kb, vb = k_chunk * nh, v_chunk * nh

    # TODO(synk): mask still ships as dense f32; int8 / length-based masks would
    # further cut HBM traffic for very long sequences.
    if mq_p == 1:
        mask_spec = pl.BlockSpec((1, 1, 1, tk), lambda b, h, qi, ki: (b, 0, 0, ki))
    else:
        mask_spec = pl.BlockSpec((1, 1, tq, tk), lambda b, h, qi, ki: (b, 0, qi, ki))

    out = pl.pallas_call(
        partial(_flash_attn_kernel, scale=scale),
        out_shape=jax.ShapeDtypeStruct((B, Sqp, nh, 1, Dh), q3.dtype),
        grid=(B, nh, Sqp // tq, Skp // tk),
        in_specs=[
            pl.BlockSpec((1, tq, 1, 1, Dh), lambda b, h, qi, ki: (b, qi, h, 0, 0)),
            pl.BlockSpec((1, tk, 1, 1, Dh), lambda b, h, qi, ki: (b, ki, kb + h, 0, 0)),
            pl.BlockSpec((1, tk, 1, 1, Dh), lambda b, h, qi, ki: (b, ki, vb + h, 0, 0)),
            mask_spec,
        ],
        out_specs=pl.BlockSpec((1, tq, 1, 1, Dh),
                               lambda b, h, qi, ki: (b, qi, h, 0, 0)),
        scratch_shapes=[pltpu.VMEM((tq, 1), jnp.float32),
                        pltpu.VMEM((tq, 1), jnp.float32),
                        pltpu.VMEM((tq, Dh), jnp.float32)],
        compiler_params=pltpu.CompilerParams(
            dimension_semantics=("parallel", "parallel", "parallel", "arbitrary"),
            vmem_limit_bytes=_VMEM_LIMIT),
    )(q5, kv5, kv5, mask.astype(jnp.float32))

    out = out.reshape(B, Sqp, emb_dim)
    return out[:, :Sq] if Sqp != Sq else out


# ---------------------------------------------------------------------------
# Model glue (embedding lookup / reshapes in plain JAX)
# ---------------------------------------------------------------------------

def transformer_block(p, enc, query, mask, n_heads):
    B, Sq, D = query.shape
    Sk = enc.shape[1]
    ap = p["attn"]
    # cross attention: Q from decoder stream, fused K|V from encoder stream
    q = pallas_linear(query.reshape(B * Sq, D), ap["wq"], ap["bq"]).reshape(B, Sq, D)
    kv = pallas_linear(enc.reshape(B * Sk, D), ap["wkv"], ap["bkv"]).reshape(B, Sk, 2 * D)
    ctx = pallas_flash_attention(q, kv, mask, n_heads, D, 1.0 / math.sqrt(D),
                                 k_chunk=0, v_chunk=1)
    # out-projection + residual + LayerNorm fused
    x = pallas_linear_res_ln(ctx.reshape(B * Sq, D), ap["wo"], ap["bo"],
                             query.reshape(B * Sq, D), p["ln1_g"], p["ln1_b"])
    # FFN + residual + LayerNorm fused
    out = pallas_ffn_res_ln(x, p["ff_w1"], p["ff_b1"], p["ff_w2"], p["ff_b2"],
                            p["ln2_g"], p["ln2_b"])
    return out.reshape(B, Sq, D)


def decoder_block(p, X, enc, src_mask, trg_mask, n_heads):
    B, S, D = X.shape
    sp = p["self_attn"]
    # fused Q|K|V projection; attention reads its columns via BlockSpec index_maps
    qkv = pallas_linear(X.reshape(B * S, D), sp["w_in"], sp["b_in"]).reshape(B, S, 3 * D)
    ctx = pallas_flash_attention(qkv, qkv, trg_mask, n_heads, D, 1.0 / math.sqrt(D),
                                 k_chunk=1, v_chunk=2)
    # out-projection + residual(X) + LayerNorm fused
    h = pallas_linear_res_ln(ctx.reshape(B * S, D), sp["wo"], sp["bo"],
                             X.reshape(B * S, D), p["ln_g"], p["ln_b"])
    return transformer_block(p["transf"], enc, h.reshape(B, S, D), src_mask, n_heads)


def decoder_forward(params, X_ids, encoder, src_mask, trg_mask, n_heads):
    B, S = X_ids.shape
    # TODO(synk): embedding gather stays in XLA (jnp.take); a Pallas DMA gather
    # is not worthwhile at these sizes.
    word = jnp.take(params["word_emb"], X_ids, axis=0)                 # (B, S, D)
    pos = jnp.take(params["pos_emb"], jnp.arange(S), axis=0)[None]     # (1, S, D)
    emb = word + pos
    for blk in params["blocks"]:
        emb = decoder_block(blk, emb, encoder, src_mask, trg_mask, n_heads)
    B_, S_, D = emb.shape
    logits = pallas_linear(emb.reshape(B * S, D), params["out_w"], params["out_b"])
    return logits.reshape(B, S, -1)


# ---------------------------------------------------------------------------
# Deterministic parameter init
# ---------------------------------------------------------------------------

def init_params(key, emb_dim, n_heads, n_blocks, max_seq, vocab, ff_mult=4):
    keys = iter(jax.random.split(key, 4 + n_blocks * 16))

    def dense(i, o):
        return jax.random.normal(next(keys), (i, o), jnp.float32) * 0.02

    def zeros(n):
        return jnp.zeros((n,), jnp.float32)

    def self_attn_params():
        return {"w_in": dense(emb_dim, 3 * emb_dim), "b_in": zeros(3 * emb_dim),
                "wo": dense(emb_dim, emb_dim), "bo": zeros(emb_dim)}

    def cross_attn_params():
        return {"wq": dense(emb_dim, emb_dim), "bq": zeros(emb_dim),
                "wkv": dense(emb_dim, 2 * emb_dim), "bkv": zeros(2 * emb_dim),
                "wo": dense(emb_dim, emb_dim), "bo": zeros(emb_dim)}

    blocks = []
    for _ in range(n_blocks):
        blocks.append({
            "self_attn": self_attn_params(),
            "ln_g": jnp.ones((emb_dim,), jnp.float32),
            "ln_b": zeros(emb_dim),
            "transf": {
                "attn": cross_attn_params(),
                "ln1_g": jnp.ones((emb_dim,), jnp.float32),
                "ln1_b": zeros(emb_dim),
                "ff_w1": dense(emb_dim, ff_mult * emb_dim),
                "ff_b1": zeros(ff_mult * emb_dim),
                "ff_w2": dense(ff_mult * emb_dim, emb_dim),
                "ff_b2": zeros(emb_dim),
                "ln2_g": jnp.ones((emb_dim,), jnp.float32),
                "ln2_b": zeros(emb_dim),
            },
        })
    return {
        "word_emb": jax.random.normal(next(keys), (vocab, emb_dim), jnp.float32) * 0.02,
        "pos_emb": jax.random.normal(next(keys), (max_seq, emb_dim), jnp.float32) * 0.02,
        "blocks": blocks,
        "out_w": dense(emb_dim, vocab),
        "out_b": zeros(vocab),
    }


# ---------------------------------------------------------------------------
# Driver
# ---------------------------------------------------------------------------

if __name__ == "__main__":
    B, S_dec, S_enc = 2, 8, 8
    emb_dim, n_heads, n_blocks = 32, 4, 2
    max_seq, vocab = 16, 50

    key = jax.random.PRNGKey(0)
    k_p, k_x, k_enc = jax.random.split(key, 3)

    params = init_params(k_p, emb_dim, n_heads, n_blocks, max_seq, vocab)
    X = jax.random.randint(k_x, (B, S_dec), 0, vocab, dtype=jnp.int32)
    encoder = jax.random.normal(k_enc, (B, S_enc, emb_dim), jnp.float32)
    src_mask = jnp.ones((B, 1, 1, S_enc), jnp.float32)
    trg_mask = jnp.broadcast_to(
        jnp.tril(jnp.ones((S_dec, S_dec), jnp.float32))[None, None],
        (B, 1, S_dec, S_dec))

    fwd = jax.jit(partial(decoder_forward, n_heads=n_heads))
    logits = fwd(params, X, encoder, src_mask, trg_mask)
    logits = jax.block_until_ready(logits)
    assert logits.shape == (B, S_dec, vocab)
    assert bool(jnp.all(jnp.isfinite(logits)))
    print("KERNEL_OK")
</pallas_src>

<mosaic_0001>
module attributes {stable_mosaic.version = 11 : i64} {
  func.func @_matmul_bias_kernel(%arg0: i32, %arg1: i32, %arg2: i32, %arg3: memref<16x32xf32, #tpu.memory_space<vmem>>, %arg4: memref<32x96xf32, #tpu.memory_space<vmem>>, %arg5: memref<1x96xf32, #tpu.memory_space<vmem>>, %arg6: memref<16x96xf32, #tpu.memory_space<vmem>>, %arg7: memref<16x96xf32, #tpu.memory_space<vmem>>) attributes {dimension_semantics = [#tpu.dimension_semantics<parallel>, #tpu.dimension_semantics<parallel>, #tpu.dimension_semantics<arbitrary>], iteration_bounds = array<i64: 1, 1, 1>, scalar_prefetch = 0 : i64, scratch_operands = 1 : i64, tpu.core_type = #tpu.core_type<tc>, window_params = [{transform_indices = @transform_0, window_bounds = array<i64: 16, 32>}, {transform_indices = @transform_1, window_bounds = array<i64: 32, 96>}, {transform_indices = @transform_2, window_bounds = array<i64: 1, 96>}, {transform_indices = @transform_3, window_bounds = array<i64: 16, 96>}]} {
    %c0_i32 = arith.constant 0 : i32
    %0 = arith.cmpi eq, %arg2, %c0_i32 : i32
    %1 = arith.extui %0 : i1 to i32
    %c0_i32_0 = arith.constant 0 : i32
    %2 = arith.cmpi ne, %1, %c0_i32_0 : i32
    scf.if %2 {
      %cst_10 = arith.constant 0.000000e+00 : f32
      %12 = vector.broadcast %cst_10 : f32 to vector<16x96xf32>
      %c0_11 = arith.constant 0 : index
      %c0_12 = arith.constant 0 : index
      %13 = vector.load %arg7[%c0_11, %c0_12] : memref<16x96xf32, #tpu.memory_space<vmem>>, vector<16x96xf32>
      tpu.vector_store %arg7[%c0_11, %c0_12], %12 {strides = array<i32>} : memref<16x96xf32, #tpu.memory_space<vmem>>, vector<16x96xf32>,
    } else {
    }
    %c0 = arith.constant 0 : index
    %c0_1 = arith.constant 0 : index
    %3 = vector.load %arg7[%c0, %c0_1] : memref<16x96xf32, #tpu.memory_space<vmem>>, vector<16x96xf32>
    %c0_2 = arith.constant 0 : index
    %c0_3 = arith.constant 0 : index
    %4 = vector.load %arg3[%c0_2, %c0_3] : memref<16x32xf32, #tpu.memory_space<vmem>>, vector<16x32xf32>
    %c0_4 = arith.constant 0 : index
    %c0_5 = arith.constant 0 : index
    %5 = vector.load %arg4[%c0_4, %c0_5] : memref<32x96xf32, #tpu.memory_space<vmem>>, vector<32x96xf32>
    %cst = arith.constant dense<0.000000e+00> : vector<16x96xf32>
    %6 = tpu.matmul %4, %5, %cst {dimension_numbers = #tpu.dot_dimension_numbers<[1], [0], [0], [1], [0, 0, 1, 1], [], []>} : vector<16x32xf32>, vector<32x96xf32>, vector<16x96xf32> -> vector<16x96xf32>
    %7 = arith.addf %3, %6 : vector<16x96xf32>
    %c0_6 = arith.constant 0 : index
    %c0_7 = arith.constant 0 : index
    %8 = vector.load %arg7[%c0_6, %c0_7] : memref<16x96xf32, #tpu.memory_space<vmem>>, vector<16x96xf32>
    tpu.vector_store %arg7[%c0_6, %c0_7], %7 {strides = array<i32>} : memref<16x96xf32, #tpu.memory_space<vmem>>, vector<16x96xf32>,
    %c0_i32_8 = arith.constant 0 : i32
    %9 = arith.cmpi eq, %arg2, %c0_i32_8 : i32
    %10 = arith.extui %9 : i1 to i32
    %c0_i32_9 = arith.constant 0 : i32
    %11 = arith.cmpi ne, %10, %c0_i32_9 : i32
    scf.if %11 {
      %c0_10 = arith.constant 0 : index
      %c0_11 = arith.constant 0 : index
      %12 = vector.load %arg7[%c0_10, %c0_11] : memref<16x96xf32, #tpu.memory_space<vmem>>, vector<16x96xf32>
      %c0_12 = arith.constant 0 : index
      %c0_13 = arith.constant 0 : index
      %13 = vector.load %arg5[%c0_12, %c0_13] : memref<1x96xf32, #tpu.memory_space<vmem>>, vector<1x96xf32>
      %14 = vector.broadcast %13 : vector<1x96xf32> to vector<16x96xf32>
      %15 = arith.addf %12, %14 : vector<16x96xf32>
      %c0_14 = arith.constant 0 : index
      %c0_15 = arith.constant 0 : index
      %16 = vector.load %arg6[%c0_14, %c0_15] : memref<16x96xf32, #tpu.memory_space<vmem>>, vector<16x96xf32>
      tpu.vector_store %arg6[%c0_14, %c0_15], %15 {strides = array<i32>} : memref<16x96xf32, #tpu.memory_space<vmem>>, vector<16x96xf32>,
    } else {
    }
    return
  }
  func.func @transform_0(%arg0: i32, %arg1: i32, %arg2: i32) -> (i32, i32) {
    %c0_i32 = arith.constant 0 : i32
    return %arg0, %arg2 : i32, i32
  }
  func.func @transform_1(%arg0: i32, %arg1: i32, %arg2: i32) -> (i32, i32) {
    %c0_i32 = arith.constant 0 : i32
    return %arg2, %arg1 : i32, i32
  }
  func.func @transform_2(%arg0: i32, %arg1: i32, %arg2: i32) -> (i32, i32) {
    %c0_i32 = arith.constant 0 : i32
    %c0_i32_0 = arith.constant 0 : i32
    return %c0_i32, %arg1 : i32, i32
  }
  func.func @transform_3(%arg0: i32, %arg1: i32, %arg2: i32) -> (i32, i32) {
    %c0_i32 = arith.constant 0 : i32
    return %arg0, %arg1 : i32, i32
  }
}

module attributes {stable_mosaic.version = 11 : i64} {
  func.func @_flash_attn_kernel(%arg0: i32, %arg1: i32, %arg2: i32, %arg3: i32, %arg4: memref<1x8x1x1x8xf32, #tpu.memory_space<vmem>>, %arg5: memref<1x8x1x1x8xf32, #tpu.memory_space<vmem>>, %arg6: memref<1x8x1x1x8xf32, #tpu.memory_space<vmem>>, %arg7: memref<1x1x8x8xf32, #tpu.memory_space<vmem>>, %arg8: memref<1x8x1x1x8xf32, #tpu.memory_space<vmem>>, %arg9: memref<8x1xf32, #tpu.memory_space<vmem>>, %arg10: memref<8x1xf32, #tpu.memory_space<vmem>>, %arg11: memref<8x8xf32, #tpu.memory_space<vmem>>) attributes {dimension_semantics = [#tpu.dimension_semantics<parallel>, #tpu.dimension_semantics<parallel>, #tpu.dimension_semantics<parallel>, #tpu.dimension_semantics<arbitrary>], iteration_bounds = array<i64: 2, 4, 1, 1>, scalar_prefetch = 0 : i64, scratch_operands = 3 : i64, tpu.core_type = #tpu.core_type<tc>, window_params = [{transform_indices = @transform_0, window_bounds = array<i64: 1, 8, 1, 1, 8>}, {transform_indices = @transform_1, window_bounds = array<i64: 1, 8, 1, 1, 8>}, {transform_indices = @transform_2, window_bounds = array<i64: 1, 8, 1, 1, 8>}, {transform_indices = @transform_3, window_bounds = array<i64: 1, 1, 8, 8>}, {transform_indices = @transform_4, window_bounds = array<i64: 1, 8, 1, 1, 8>}]} {
    %c0_i32 = arith.constant 0 : i32
    %0 = arith.cmpi eq, %arg3, %c0_i32 : i32
    %1 = arith.extui %0 : i1 to i32
    %c0_i32_0 = arith.constant 0 : i32
    %2 = arith.cmpi ne, %1, %c0_i32_0 : i32
    scf.if %2 {
      %cst_39 = arith.constant 0xFF800000 : f32
      %43 = vector.broadcast %cst_39 : f32 to vector<8x1xf32>
      %c0_40 = arith.constant 0 : index
      %c0_41 = arith.constant 0 : index
      %44 = vector.load %arg9[%c0_40, %c0_41] : memref<8x1xf32, #tpu.memory_space<vmem>>, vector<8x1xf32>
      tpu.vector_store %arg9[%c0_40, %c0_41], %43 {strides = array<i32>} : memref<8x1xf32, #tpu.memory_space<vmem>>, vector<8x1xf32>,
      %cst_42 = arith.constant 0.000000e+00 : f32
      %45 = vector.broadcast %cst_42 : f32 to vector<8x1xf32>
      %c0_43 = arith.constant 0 : index
      %c0_44 = arith.constant 0 : index
      %46 = vector.load %arg10[%c0_43, %c0_44] : memref<8x1xf32, #tpu.memory_space<vmem>>, vector<8x1xf32>
      tpu.vector_store %arg10[%c0_43, %c0_44], %45 {strides = array<i32>} : memref<8x1xf32, #tpu.memory_space<vmem>>, vector<8x1xf32>,
      %cst_45 = arith.constant 0.000000e+00 : f32
      %47 = vector.broadcast %cst_45 : f32 to vector<8x8xf32>
      %c0_46 = arith.constant 0 : index
      %c0_47 = arith.constant 0 : index
      %48 = vector.load %arg11[%c0_46, %c0_47] : memref<8x8xf32, #tpu.memory_space<vmem>>, vector<8x8xf32>
      tpu.vector_store %arg11[%c0_46, %c0_47], %47 {strides = array<i32>} : memref<8x8xf32, #tpu.memory_space<vmem>>, vector<8x8xf32>,
    } else {
    }
    %c0 = arith.constant 0 : index
    %c0_1 = arith.constant 0 : index
    %c0_2 = arith.constant 0 : index
    %c0_3 = arith.constant 0 : index
    %c0_4 = arith.constant 0 : index
    %3 = vector.load %arg4[%c0, %c0_1, %c0_2, %c0_3, %c0_4] : memref<1x8x1x1x8xf32, #tpu.memory_space<vmem>>, vector<1x8x1x1x8xf32>
    %4 = vector.shape_cast %3 : vector<1x8x1x1x8xf32> to vector<8x8xf32>
    %c0_5 = arith.constant 0 : index
    %c0_6 = arith.constant 0 : index
    %c0_7 = arith.constant 0 : index
    %c0_8 = arith.constant 0 : index
    %c0_9 = arith.constant 0 : index
    %5 = vector.load %arg5[%c0_5, %c0_6, %c0_7, %c0_8, %c0_9] : memref<1x8x1x1x8xf32, #tpu.memory_space<vmem>>, vector<1x8x1x1x8xf32>
    %6 = vector.shape_cast %5 : vector<1x8x1x1x8xf32> to vector<8x8xf32>
    %c0_10 = arith.constant 0 : index
    %c0_11 = arith.constant 0 : index
    %c0_12 = arith.constant 0 : index
    %c0_13 = arith.constant 0 : index
    %c0_14 = arith.constant 0 : index
    %7 = vector.load %arg6[%c0_10, %c0_11, %c0_12, %c0_13, %c0_14] : memref<1x8x1x1x8xf32, #tpu.memory_space<vmem>>, vector<1x8x1x1x8xf32>
    %8 = vector.shape_cast %7 : vector<1x8x1x1x8xf32> to vector<8x8xf32>
    %c0_15 = arith.constant 0 : index
    %c0_16 = arith.constant 0 : index
    %c0_17 = arith.constant 0 : index
    %c0_18 = arith.constant 0 : index
    %9 = vector.load %arg7[%c0_15, %c0_16, %c0_17, %c0_18] : memref<1x1x8x8xf32, #tpu.memory_space<vmem>>, vector<1x1x8x8xf32>
    %10 = vector.shape_cast %9 : vector<1x1x8x8xf32> to vector<8x8xf32>
    %cst = arith.constant dense<0.000000e+00> : vector<8x8xf32>
    %11 = tpu.matmul %4, %6, %cst {dimension_numbers = #tpu.dot_dimension_numbers<[1], [1], [0], [0], [0, 0, 1, 0], [], []>} : vector<8x8xf32>, vector<8x8xf32>, vector<8x8xf32> -> vector<8x8xf32>
    %cst_19 = arith.constant 0.000000e+00 : f32
    %12 = vector.broadcast %cst_19 : f32 to vector<8x8xf32>
    %13 = arith.cmpf oeq, %10, %12 : vector<8x8xf32>
    %cst_20 = arith.constant -1.000000e+20 : f32
    %14 = vector.broadcast %cst_20 : f32 to vector<8x8xf32>
    %15 = arith.select %13, %14, %11 : vector<8x8xi1>, vector<8x8xf32>
    %cst_21 = arith.constant 0.176776692 : f32
    %16 = vector.broadcast %cst_21 : f32 to vector<8x8xf32>
    %17 = arith.mulf %15, %16 : vector<8x8xf32>
    %c0_22 = arith.constant 0 : index
    %c0_23 = arith.constant 0 : index
    %18 = vector.load %arg9[%c0_22, %c0_23] : memref<8x1xf32, #tpu.memory_space<vmem>>, vector<8x1xf32>
    %cst_24 = arith.constant dense<0xFF800000> : vector<8xf32>
    %19 = vector.multi_reduction <maximumf>, %17, %cst_24 [1] : vector<8x8xf32> to vector<8xf32>
    %20 = vector.shape_cast %19 : vector<8xf32> to vector<8x1xf32>
    %21 = arith.maximumf %18, %20 : vector<8x1xf32>
    %22 = arith.subf %18, %21 : vector<8x1xf32>
    %23 = math.exp %22 : vector<8x1xf32>
    %24 = vector.broadcast %21 : vector<8x1xf32> to vector<8x8xf32>
    %25 = arith.subf %17, %24 : vector<8x8xf32>
    %26 = math.exp %25 : vector<8x8xf32>
    %c0_25 = arith.constant 0 : index
    %c0_26 = arith.constant 0 : index
    %27 = vector.load %arg10[%c0_25, %c0_26] : memref<8x1xf32, #tpu.memory_space<vmem>>, vector<8x1xf32>
    %28 = arith.mulf %23, %27 : vector<8x1xf32>
    %cst_27 = arith.constant dense<0.000000e+00> : vector<8xf32>
    %29 = vector.multi_reduction <add>, %26, %cst_27 [1] : vector<8x8xf32> to vector<8xf32>
    %30 = vector.shape_cast %29 : vector<8xf32> to vector<8x1xf32>
    %31 = arith.addf %28, %30 : vector<8x1xf32>
    %c0_28 = arith.constant 0 : index
    %c0_29 = arith.constant 0 : index
    %32 = vector.load %arg10[%c0_28, %c0_29] : memref<8x1xf32, #tpu.memory_space<vmem>>, vector<8x1xf32>
    tpu.vector_store %arg10[%c0_28, %c0_29], %31 {strides = array<i32>} : memref<8x1xf32, #tpu.memory_space<vmem>>, vector<8x1xf32>,
    %c0_30 = arith.constant 0 : index
    %c0_31 = arith.constant 0 : index
    %33 = vector.load %arg11[%c0_30, %c0_31] : memref<8x8xf32, #tpu.memory_space<vmem>>, vector<8x8xf32>
    %34 = vector.broadcast %23 : vector<8x1xf32> to vector<8x8xf32>
    %35 = arith.mulf %34, %33 : vector<8x8xf32>
    %cst_32 = arith.constant dense<0.000000e+00> : vector<8x8xf32>
    %36 = tpu.matmul %26, %8, %cst_32 {dimension_numbers = #tpu.dot_dimension_numbers<[1], [0], [0], [1], [0, 0, 1, 1], [], []>} : vector<8x8xf32>, vector<8x8xf32>, vector<8x8xf32> -> vector<8x8xf32>
    %37 = arith.addf %35, %36 : vector<8x8xf32>
    %c0_33 = arith.constant 0 : index
    %c0_34 = arith.constant 0 : index
    %38 = vector.load %arg11[%c0_33, %c0_34] : memref<8x8xf32, #tpu.memory_space<vmem>>, vector<8x8xf32>
    tpu.vector_store %arg11[%c0_33, %c0_34], %37 {strides = array<i32>} : memref<8x8xf32, #tpu.memory_space<vmem>>, vector<8x8xf32>,
    %c0_35 = arith.constant 0 : index
    %c0_36 = arith.constant 0 : index
    %39 = vector.load %arg9[%c0_35, %c0_36] : memref<8x1xf32, #tpu.memory_space<vmem>>, vector<8x1xf32>
    tpu.vector_store %arg9[%c0_35, %c0_36], %21 {strides = array<i32>} : memref<8x1xf32, #tpu.memory_space<vmem>>, vector<8x1xf32>,
    %c0_i32_37 = arith.constant 0 : i32
    %40 = arith.cmpi eq, %arg3, %c0_i32_37 : i32
    %41 = arith.extui %40 : i1 to i32
    %c0_i32_38 = arith.constant 0 : i32
    %42 = arith.cmpi ne, %41, %c0_i32_38 : i32
    scf.if %42 {
      %c0_39 = arith.constant 0 : index
      %c0_40 = arith.constant 0 : index
      %43 = vector.load %arg10[%c0_39, %c0_40] : memref<8x1xf32, #tpu.memory_space<vmem>>, vector<8x1xf32>
      %44 = tpu.reciprocal %43 {approx = true} : vector<8x1xf32> -> vector<8x1xf32>
      %c0_41 = arith.constant 0 : index
      %c0_42 = arith.constant 0 : index
      %45 = vector.load %arg11[%c0_41, %c0_42] : memref<8x8xf32, #tpu.memory_space<vmem>>, vector<8x8xf32>
      %46 = vector.broadcast %44 : vector<8x1xf32> to vector<8x8xf32>
      %47 = arith.mulf %45, %46 : vector<8x8xf32>
      %c0_43 = arith.constant 0 : index
      %c0_44 = arith.constant 0 : index
      %c0_45 = arith.constant 0 : index
      %c0_46 = arith.constant 0 : index
      %c0_47 = arith.constant 0 : index
      %48 = vector.load %arg8[%c0_43, %c0_44, %c0_45, %c0_46, %c0_47] : memref<1x8x1x1x8xf32, #tpu.memory_space<vmem>>, vector<1x8x1x1x8xf32>
      %49 = vector.shape_cast %48 : vector<1x8x1x1x8xf32> to vector<8x8xf32>
      %50 = vector.shape_cast %47 : vector<8x8xf32> to vector<1x8x1x1x8xf32>
      tpu.vector_store %arg8[%c0_43, %c0_44, %c0_45, %c0_46, %c0_47], %50 {strides = array<i32>} : memref<1x8x1x1x8xf32, #tpu.memory_space<vmem>>, vector<1x8x1x1x8xf32>,
    } else {
    }
    return
  }
  func.func @transform_0(%arg0: i32, %arg1: i32, %arg2: i32, %arg3: i32) -> (i32, i32, i32, i32, i32) {
    %c0_i32 = arith.constant 0 : i32
    %c0_i32_0 = arith.constant 0 : i32
    %c0_i32_1 = arith.constant 0 : i32
    return %arg0, %arg2, %arg1, %c0_i32, %c0_i32_0 : i32, i32, i32, i32, i32
  }
  func.func @transform_1(%arg0: i32, %arg1: i32, %arg2: i32, %arg3: i32) -> (i32, i32, i32, i32, i32) {
    %c4_i32 = arith.constant 4 : i32
    %0 = arith.addi %c4_i32, %arg1 : i32
    %c0_i32 = arith.constant 0 : i32
    %c0_i32_0 = arith.constant 0 : i32
    %c0_i32_1 = arith.constant 0 : i32
    return %arg0, %arg3, %0, %c0_i32, %c0_i32_0 : i32, i32, i32, i32, i32
  }
  func.func @transform_2(%arg0: i32, %arg1: i32, %arg2: i32, %arg3: i32) -> (i32, i32, i32, i32, i32) {
    %c8_i32 = arith.constant 8 : i32
    %0 = arith.addi %c8_i32, %arg1 : i32
    %c0_i32 = arith.constant 0 : i32
    %c0_i32_0 = arith.constant 0 : i32
    %c0_i32_1 = arith.constant 0 : i32
    return %arg0, %arg3, %0, %c0_i32, %c0_i32_0 : i32, i32, i32, i32, i32
  }
  func.func @transform_3(%arg0: i32, %arg1: i32, %arg2: i32, %arg3: i32) -> (i32, i32, i32, i32) {
    %c0_i32 = arith.constant 0 : i32
    %c0_i32_0 = arith.constant 0 : i32
    return %arg0, %c0_i32, %arg2, %arg3 : i32, i32, i32, i32
  }
  func.func @transform_4(%arg0: i32, %arg1: i32, %arg2: i32, %arg3: i32) -> (i32, i32, i32, i32, i32) {
    %c0_i32 = arith.constant 0 : i32
    %c0_i32_0 = arith.constant 0 : i32
    %c0_i32_1 = arith.constant 0 : i32
    return %arg0, %arg2, %arg1, %c0_i32, %c0_i32_0 : i32, i32, i32, i32, i32
  }
}

module attributes {stable_mosaic.version = 11 : i64} {
  func.func @_linear_res_ln_kernel(%arg0: i32, %arg1: i32, %arg2: memref<16x32xf32, #tpu.memory_space<vmem>>, %arg3: memref<32x32xf32, #tpu.memory_space<vmem>>, %arg4: memref<1x32xf32, #tpu.memory_space<vmem>>, %arg5: memref<16x32xf32, #tpu.memory_space<vmem>>, %arg6: memref<1x32xf32, #tpu.memory_space<vmem>>, %arg7: memref<1x32xf32, #tpu.memory_space<vmem>>, %arg8: memref<16x32xf32, #tpu.memory_space<vmem>>, %arg9: memref<16x32xf32, #tpu.memory_space<vmem>>) attributes {dimension_semantics = [#tpu.dimension_semantics<parallel>, #tpu.dimension_semantics<arbitrary>], iteration_bounds = array<i64: 1, 1>, scalar_prefetch = 0 : i64, scratch_operands = 1 : i64, tpu.core_type = #tpu.core_type<tc>, window_params = [{transform_indices = @transform_0, window_bounds = array<i64: 16, 32>}, {transform_indices = @transform_1, window_bounds = array<i64: 32, 32>}, {pipeline_mode = #tpu.pipeline_mode<synchronous>, transform_indices = @transform_2, window_bounds = array<i64: 1, 32>}, {transform_indices = @transform_3, window_bounds = array<i64: 16, 32>}, {pipeline_mode = #tpu.pipeline_mode<synchronous>, transform_indices = @transform_4, window_bounds = array<i64: 1, 32>}, {pipeline_mode = #tpu.pipeline_mode<synchronous>, transform_indices = @transform_5, window_bounds = array<i64: 1, 32>}, {transform_indices = @transform_6, window_bounds = array<i64: 16, 32>}]} {
    %c0_i32 = arith.constant 0 : i32
    %0 = arith.cmpi eq, %arg1, %c0_i32 : i32
    %1 = arith.extui %0 : i1 to i32
    %c0_i32_0 = arith.constant 0 : i32
    %2 = arith.cmpi ne, %1, %c0_i32_0 : i32
    scf.if %2 {
      %cst_10 = arith.constant 0.000000e+00 : f32
      %12 = vector.broadcast %cst_10 : f32 to vector<16x32xf32>
      %c0_11 = arith.constant 0 : index
      %c0_12 = arith.constant 0 : index
      %13 = vector.load %arg9[%c0_11, %c0_12] : memref<16x32xf32, #tpu.memory_space<vmem>>, vector<16x32xf32>
      tpu.vector_store %arg9[%c0_11, %c0_12], %12 {strides = array<i32>} : memref<16x32xf32, #tpu.memory_space<vmem>>, vector<16x32xf32>,
    } else {
    }
    %c0 = arith.constant 0 : index
    %c0_1 = arith.constant 0 : index
    %3 = vector.load %arg9[%c0, %c0_1] : memref<16x32xf32, #tpu.memory_space<vmem>>, vector<16x32xf32>
    %c0_2 = arith.constant 0 : index
    %c0_3 = arith.constant 0 : index
    %4 = vector.load %arg2[%c0_2, %c0_3] : memref<16x32xf32, #tpu.memory_space<vmem>>, vector<16x32xf32>
    %c0_4 = arith.constant 0 : index
    %c0_5 = arith.constant 0 : index
    %5 = vector.load %arg3[%c0_4, %c0_5] : memref<32x32xf32, #tpu.memory_space<vmem>>, vector<32x32xf32>
    %cst = arith.constant dense<0.000000e+00> : vector<16x32xf32>
    %6 = tpu.matmul %4, %5, %cst {dimension_numbers = #tpu.dot_dimension_numbers<[1], [0], [0], [1], [0, 0, 1, 1], [], []>} : vector<16x32xf32>, vector<32x32xf32>, vector<16x32xf32> -> vector<16x32xf32>
    %7 = arith.addf %3, %6 : vector<16x32xf32>
    %c0_6 = arith.constant 0 : index
    %c0_7 = arith.constant 0 : index
    %8 = vector.load %arg9[%c0_6, %c0_7] : memref<16x32xf32, #tpu.memory_space<vmem>>, vector<16x32xf32>
    tpu.vector_store %arg9[%c0_6, %c0_7], %7 {strides = array<i32>} : memref<16x32xf32, #tpu.memory_space<vmem>>, vector<16x32xf32>,
    %c0_i32_8 = arith.constant 0 : i32
    %9 = arith.cmpi eq, %arg1, %c0_i32_8 : i32
    %10 = arith.extui %9 : i1 to i32
    %c0_i32_9 = arith.constant 0 : i32
    %11 = arith.cmpi ne, %10, %c0_i32_9 : i32
    scf.if %11 {
      %c0_10 = arith.constant 0 : index
      %c0_11 = arith.constant 0 : index
      %12 = vector.load %arg9[%c0_10, %c0_11] : memref<16x32xf32, #tpu.memory_space<vmem>>, vector<16x32xf32>
      %c0_12 = arith.constant 0 : index
      %c0_13 = arith.constant 0 : index
      %13 = vector.load %arg4[%c0_12, %c0_13] : memref<1x32xf32, #tpu.memory_space<vmem>>, vector<1x32xf32>
      %14 = vector.broadcast %13 : vector<1x32xf32> to vector<16x32xf32>
      %15 = arith.addf %12, %14 : vector<16x32xf32>
      %c0_14 = arith.constant 0 : index
      %c0_15 = arith.constant 0 : index
      %16 = vector.load %arg5[%c0_14, %c0_15] : memref<16x32xf32, #tpu.memory_space<vmem>>, vector<16x32xf32>
      %17 = arith.addf %15, %16 : vector<16x32xf32>
      %cst_16 = arith.constant dense<0.000000e+00> : vector<16xf32>
      %18 = vector.multi_reduction <add>, %17, %cst_16 [1] : vector<16x32xf32> to vector<16xf32>
      %19 = vector.shape_cast %18 : vector<16xf32> to vector<16x1xf32>
      %cst_17 = arith.constant 3.200000e+01 : f32
      %20 = vector.broadcast %cst_17 : f32 to vector<16x1xf32>
      %21 = arith.divf %19, %20 : vector<16x1xf32>
      %22 = vector.broadcast %21 : vector<16x1xf32> to vector<16x32xf32>
      %23 = arith.subf %17, %22 : vector<16x32xf32>
      %24 = arith.mulf %23, %23 : vector<16x32xf32>
      %cst_18 = arith.constant dense<0.000000e+00> : vector<16xf32>
      %25 = vector.multi_reduction <add>, %24, %cst_18 [1] : vector<16x32xf32> to vector<16xf32>
      %26 = vector.shape_cast %25 : vector<16xf32> to vector<16x1xf32>
      %cst_19 = arith.constant 3.200000e+01 : f32
      %27 = vector.broadcast %cst_19 : f32 to vector<16x1xf32>
      %28 = arith.divf %26, %27 : vector<16x1xf32>
      %cst_20 = arith.constant 9.99999974E-6 : f32
      %29 = vector.broadcast %cst_20 : f32 to vector<16x1xf32>
      %30 = arith.addf %28, %29 : vector<16x1xf32>
      %31 = math.rsqrt %30 : vector<16x1xf32>
      %32 = vector.broadcast %31 : vector<16x1xf32> to vector<16x32xf32>
      %33 = arith.mulf %23, %32 : vector<16x32xf32>
      %c0_21 = arith.constant 0 : index
      %c0_22 = arith.constant 0 : index
      %34 = vector.load %arg6[%c0_21, %c0_22] : memref<1x32xf32, #tpu.memory_space<vmem>>, vector<1x32xf32>
      %35 = vector.broadcast %34 : vector<1x32xf32> to vector<16x32xf32>
      %36 = arith.mulf %33, %35 : vector<16x32xf32>
      %c0_23 = arith.constant 0 : index
      %c0_24 = arith.constant 0 : index
      %37 = vector.load %arg7[%c0_23, %c0_24] : memref<1x32xf32, #tpu.memory_space<vmem>>, vector<1x32xf32>
      %38 = vector.broadcast %37 : vector<1x32xf32> to vector<16x32xf32>
      %39 = arith.addf %36, %38 : vector<16x32xf32>
      %c0_25 = arith.constant 0 : index
      %c0_26 = arith.constant 0 : index
      %40 = vector.load %arg8[%c0_25, %c0_26] : memref<16x32xf32, #tpu.memory_space<vmem>>, vector<16x32xf32>
      tpu.vector_store %arg8[%c0_25, %c0_26], %39 {strides = array<i32>} : memref<16x32xf32, #tpu.memory_space<vmem>>, vector<16x32xf32>,
    } else {
    }
    return
  }
  func.func @transform_0(%arg0: i32, %arg1: i32) -> (i32, i32) {
    %c0_i32 = arith.constant 0 : i32
    return %arg0, %arg1 : i32, i32
  }
  func.func @transform_1(%arg0: i32, %arg1: i32) -> (i32, i32) {
    %c0_i32 = arith.constant 0 : i32
    %c0_i32_0 = arith.constant 0 : i32
    return %arg1, %c0_i32 : i32, i32
  }
  func.func @transform_2(%arg0: i32, %arg1: i32) -> (i32, i32) {
    %c0_i32 = arith.constant 0 : i32
    %c0_i32_0 = arith.constant 0 : i32
    %c0_i32_1 = arith.constant 0 : i32
    return %c0_i32, %c0_i32_0 : i32, i32
  }
  func.func @transform_3(%arg0: i32, %arg1: i32) -> (i32, i32) {
    %c0_i32 = arith.constant 0 : i32
    %c0_i32_0 = arith.constant 0 : i32
    return %arg0, %c0_i32 : i32, i32
  }
  func.func @transform_4(%arg0: i32, %arg1: i32) -> (i32, i32) {
    %c0_i32 = arith.constant 0 : i32
    %c0_i32_0 = arith.constant 0 : i32
    %c0_i32_1 = arith.constant 0 : i32
    return %c0_i32, %c0_i32_0 : i32, i32
  }
  func.func @transform_5(%arg0: i32, %arg1: i32) -> (i32, i32) {
    %c0_i32 = arith.constant 0 : i32
    %c0_i32_0 = arith.constant 0 : i32
    %c0_i32_1 = arith.constant 0 : i32
    return %c0_i32, %c0_i32_0 : i32, i32
  }
  func.func @transform_6(%arg0: i32, %arg1: i32) -> (i32, i32) {
    %c0_i32 = arith.constant 0 : i32
    %c0_i32_0 = arith.constant 0 : i32
    return %arg0, %c0_i32 : i32, i32
  }
}

module attributes {stable_mosaic.version = 11 : i64} {
  func.func @_matmul_bias_kernel(%arg0: i32, %arg1: i32, %arg2: i32, %arg3: memref<16x32xf32, #tpu.memory_space<vmem>>, %arg4: memref<32x32xf32, #tpu.memory_space<vmem>>, %arg5: memref<1x32xf32, #tpu.memory_space<vmem>>, %arg6: memref<16x32xf32, #tpu.memory_space<vmem>>, %arg7: memref<16x32xf32, #tpu.memory_space<vmem>>) attributes {dimension_semantics = [#tpu.dimension_semantics<parallel>, #tpu.dimension_semantics<parallel>, #tpu.dimension_semantics<arbitrary>], iteration_bounds = array<i64: 1, 1, 1>, scalar_prefetch = 0 : i64, scratch_operands = 1 : i64, tpu.core_type = #tpu.core_type<tc>, window_params = [{transform_indices = @transform_0, window_bounds = array<i64: 16, 32>}, {transform_indices = @transform_1, window_bounds = array<i64: 32, 32>}, {transform_indices = @transform_2, window_bounds = array<i64: 1, 32>}, {transform_indices = @transform_3, window_bounds = array<i64: 16, 32>}]} {
    %c0_i32 = arith.constant 0 : i32
    %0 = arith.cmpi eq, %arg2, %c0_i32 : i32
    %1 = arith.extui %0 : i1 to i32
    %c0_i32_0 = arith.constant 0 : i32
    %2 = arith.cmpi ne, %1, %c0_i32_0 : i32
    scf.if %2 {
      %cst_10 = arith.constant 0.000000e+00 : f32
      %12 = vector.broadcast %cst_10 : f32 to vector<16x32xf32>
      %c0_11 = arith.constant 0 : index
      %c0_12 = arith.constant 0 : index
      %13 = vector.load %arg7[%c0_11, %c0_12] : memref<16x32xf32, #tpu.memory_space<vmem>>, vector<16x32xf32>
      tpu.vector_store %arg7[%c0_11, %c0_12], %12 {strides = array<i32>} : memref<16x32xf32, #tpu.memory_space<vmem>>, vector<16x32xf32>,
    } else {
    }
    %c0 = arith.constant 0 : index
    %c0_1 = arith.constant 0 : index
    %3 = vector.load %arg7[%c0, %c0_1] : memref<16x32xf32, #tpu.memory_space<vmem>>, vector<16x32xf32>
    %c0_2 = arith.constant 0 : index
    %c0_3 = arith.constant 0 : index
    %4 = vector.load %arg3[%c0_2, %c0_3] : memref<16x32xf32, #tpu.memory_space<vmem>>, vector<16x32xf32>
    %c0_4 = arith.constant 0 : index
    %c0_5 = arith.constant 0 : index
    %5 = vector.load %arg4[%c0_4, %c0_5] : memref<32x32xf32, #tpu.memory_space<vmem>>, vector<32x32xf32>
    %cst = arith.constant dense<0.000000e+00> : vector<16x32xf32>
    %6 = tpu.matmul %4, %5, %cst {dimension_numbers = #tpu.dot_dimension_numbers<[1], [0], [0], [1], [0, 0, 1, 1], [], []>} : vector<16x32xf32>, vector<32x32xf32>, vector<16x32xf32> -> vector<16x32xf32>
    %7 = arith.addf %3, %6 : vector<16x32xf32>
    %c0_6 = arith.constant 0 : index
    %c0_7 = arith.constant 0 : index
    %8 = vector.load %arg7[%c0_6, %c0_7] : memref<16x32xf32, #tpu.memory_space<vmem>>, vector<16x32xf32>
    tpu.vector_store %arg7[%c0_6, %c0_7], %7 {strides = array<i32>} : memref<16x32xf32, #tpu.memory_space<vmem>>, vector<16x32xf32>,
    %c0_i32_8 = arith.constant 0 : i32
    %9 = arith.cmpi eq, %arg2, %c0_i32_8 : i32
    %10 = arith.extui %9 : i1 to i32
    %c0_i32_9 = arith.constant 0 : i32
    %11 = arith.cmpi ne, %10, %c0_i32_9 : i32
    scf.if %11 {
      %c0_10 = arith.constant 0 : index
      %c0_11 = arith.constant 0 : index
      %12 = vector.load %arg7[%c0_10, %c0_11] : memref<16x32xf32, #tpu.memory_space<vmem>>, vector<16x32xf32>
      %c0_12 = arith.constant 0 : index
      %c0_13 = arith.constant 0 : index
      %13 = vector.load %arg5[%c0_12, %c0_13] : memref<1x32xf32, #tpu.memory_space<vmem>>, vector<1x32xf32>
      %14 = vector.broadcast %13 : vector<1x32xf32> to vector<16x32xf32>
      %15 = arith.addf %12, %14 : vector<16x32xf32>
      %c0_14 = arith.constant 0 : index
      %c0_15 = arith.constant 0 : index
      %16 = vector.load %arg6[%c0_14, %c0_15] : memref<16x32xf32, #tpu.memory_space<vmem>>, vector<16x32xf32>
      tpu.vector_store %arg6[%c0_14, %c0_15], %15 {strides = array<i32>} : memref<16x32xf32, #tpu.memory_space<vmem>>, vector<16x32xf32>,
    } else {
    }
    return
  }
  func.func @transform_0(%arg0: i32, %arg1: i32, %arg2: i32) -> (i32, i32) {
    %c0_i32 = arith.constant 0 : i32
    return %arg0, %arg2 : i32, i32
  }
  func.func @transform_1(%arg0: i32, %arg1: i32, %arg2: i32) -> (i32, i32) {
    %c0_i32 = arith.constant 0 : i32
    return %arg2, %arg1 : i32, i32
  }
  func.func @transform_2(%arg0: i32, %arg1: i32, %arg2: i32) -> (i32, i32) {
    %c0_i32 = arith.constant 0 : i32
    %c0_i32_0 = arith.constant 0 : i32
    return %c0_i32, %arg1 : i32, i32
  }
  func.func @transform_3(%arg0: i32, %arg1: i32, %arg2: i32) -> (i32, i32) {
    %c0_i32 = arith.constant 0 : i32
    return %arg0, %arg1 : i32, i32
  }
}

module attributes {stable_mosaic.version = 11 : i64} {
  func.func @_matmul_bias_kernel(%arg0: i32, %arg1: i32, %arg2: i32, %arg3: memref<16x32xf32, #tpu.memory_space<vmem>>, %arg4: memref<32x64xf32, #tpu.memory_space<vmem>>, %arg5: memref<1x64xf32, #tpu.memory_space<vmem>>, %arg6: memref<16x64xf32, #tpu.memory_space<vmem>>, %arg7: memref<16x64xf32, #tpu.memory_space<vmem>>) attributes {dimension_semantics = [#tpu.dimension_semantics<parallel>, #tpu.dimension_semantics<parallel>, #tpu.dimension_semantics<arbitrary>], iteration_bounds = array<i64: 1, 1, 1>, scalar_prefetch = 0 : i64, scratch_operands = 1 : i64, tpu.core_type = #tpu.core_type<tc>, window_params = [{transform_indices = @transform_0, window_bounds = array<i64: 16, 32>}, {transform_indices = @transform_1, window_bounds = array<i64: 32, 64>}, {transform_indices = @transform_2, window_bounds = array<i64: 1, 64>}, {transform_indices = @transform_3, window_bounds = array<i64: 16, 64>}]} {
    %c0_i32 = arith.constant 0 : i32
    %0 = arith.cmpi eq, %arg2, %c0_i32 : i32
    %1 = arith.extui %0 : i1 to i32
    %c0_i32_0 = arith.constant 0 : i32
    %2 = arith.cmpi ne, %1, %c0_i32_0 : i32
    scf.if %2 {
      %cst_10 = arith.constant 0.000000e+00 : f32
      %12 = vector.broadcast %cst_10 : f32 to vector<16x64xf32>
      %c0_11 = arith.constant 0 : index
      %c0_12 = arith.constant 0 : index
      %13 = vector.load %arg7[%c0_11, %c0_12] : memref<16x64xf32, #tpu.memory_space<vmem>>, vector<16x64xf32>
      tpu.vector_store %arg7[%c0_11, %c0_12], %12 {strides = array<i32>} : memref<16x64xf32, #tpu.memory_space<vmem>>, vector<16x64xf32>,
    } else {
    }
    %c0 = arith.constant 0 : index
    %c0_1 = arith.constant 0 : index
    %3 = vector.load %arg7[%c0, %c0_1] : memref<16x64xf32, #tpu.memory_space<vmem>>, vector<16x64xf32>
    %c0_2 = arith.constant 0 : index
    %c0_3 = arith.constant 0 : index
    %4 = vector.load %arg3[%c0_2, %c0_3] : memref<16x32xf32, #tpu.memory_space<vmem>>, vector<16x32xf32>
    %c0_4 = arith.constant 0 : index
    %c0_5 = arith.constant 0 : index
    %5 = vector.load %arg4[%c0_4, %c0_5] : memref<32x64xf32, #tpu.memory_space<vmem>>, vector<32x64xf32>
    %cst = arith.constant dense<0.000000e+00> : vector<16x64xf32>
    %6 = tpu.matmul %4, %5, %cst {dimension_numbers = #tpu.dot_dimension_numbers<[1], [0], [0], [1], [0, 0, 1, 1], [], []>} : vector<16x32xf32>, vector<32x64xf32>, vector<16x64xf32> -> vector<16x64xf32>
    %7 = arith.addf %3, %6 : vector<16x64xf32>
    %c0_6 = arith.constant 0 : index
    %c0_7 = arith.constant 0 : index
    %8 = vector.load %arg7[%c0_6, %c0_7] : memref<16x64xf32, #tpu.memory_space<vmem>>, vector<16x64xf32>
    tpu.vector_store %arg7[%c0_6, %c0_7], %7 {strides = array<i32>} : memref<16x64xf32, #tpu.memory_space<vmem>>, vector<16x64xf32>,
    %c0_i32_8 = arith.constant 0 : i32
    %9 = arith.cmpi eq, %arg2, %c0_i32_8 : i32
    %10 = arith.extui %9 : i1 to i32
    %c0_i32_9 = arith.constant 0 : i32
    %11 = arith.cmpi ne, %10, %c0_i32_9 : i32
    scf.if %11 {
      %c0_10 = arith.constant 0 : index
      %c0_11 = arith.constant 0 : index
      %12 = vector.load %arg7[%c0_10, %c0_11] : memref<16x64xf32, #tpu.memory_space<vmem>>, vector<16x64xf32>
      %c0_12 = arith.constant 0 : index
      %c0_13 = arith.constant 0 : index
      %13 = vector.load %arg5[%c0_12, %c0_13] : memref<1x64xf32, #tpu.memory_space<vmem>>, vector<1x64xf32>
      %14 = vector.broadcast %13 : vector<1x64xf32> to vector<16x64xf32>
      %15 = arith.addf %12, %14 : vector<16x64xf32>
      %c0_14 = arith.constant 0 : index
      %c0_15 = arith.constant 0 : index
      %16 = vector.load %arg6[%c0_14, %c0_15] : memref<16x64xf32, #tpu.memory_space<vmem>>, vector<16x64xf32>
      tpu.vector_store %arg6[%c0_14, %c0_15], %15 {strides = array<i32>} : memref<16x64xf32, #tpu.memory_space<vmem>>, vector<16x64xf32>,
    } else {
    }
    return
  }
  func.func @transform_0(%arg0: i32, %arg1: i32, %arg2: i32) -> (i32, i32) {
    %c0_i32 = arith.constant 0 : i32
    return %arg0, %arg2 : i32, i32
  }
  func.func @transform_1(%arg0: i32, %arg1: i32, %arg2: i32) -> (i32, i32) {
    %c0_i32 = arith.constant 0 : i32
    return %arg2, %arg1 : i32, i32
  }
  func.func @transform_2(%arg0: i32, %arg1: i32, %arg2: i32) -> (i32, i32) {
    %c0_i32 = arith.constant 0 : i32
    %c0_i32_0 = arith.constant 0 : i32
    return %c0_i32, %arg1 : i32, i32
  }
  func.func @transform_3(%arg0: i32, %arg1: i32, %arg2: i32) -> (i32, i32) {
    %c0_i32 = arith.constant 0 : i32
    return %arg0, %arg1 : i32, i32
  }
}

module attributes {stable_mosaic.version = 11 : i64} {
  func.func @_flash_attn_kernel(%arg0: i32, %arg1: i32, %arg2: i32, %arg3: i32, %arg4: memref<1x8x1x1x8xf32, #tpu.memory_space<vmem>>, %arg5: memref<1x8x1x1x8xf32, #tpu.memory_space<vmem>>, %arg6: memref<1x8x1x1x8xf32, #tpu.memory_space<vmem>>, %arg7: memref<1x1x1x8xf32, #tpu.memory_space<vmem>>, %arg8: memref<1x8x1x1x8xf32, #tpu.memory_space<vmem>>, %arg9: memref<8x1xf32, #tpu.memory_space<vmem>>, %arg10: memref<8x1xf32, #tpu.memory_space<vmem>>, %arg11: memref<8x8xf32, #tpu.memory_space<vmem>>) attributes {dimension_semantics = [#tpu.dimension_semantics<parallel>, #tpu.dimension_semantics<parallel>, #tpu.dimension_semantics<parallel>, #tpu.dimension_semantics<arbitrary>], iteration_bounds = array<i64: 2, 4, 1, 1>, scalar_prefetch = 0 : i64, scratch_operands = 3 : i64, tpu.core_type = #tpu.core_type<tc>, window_params = [{transform_indices = @transform_0, window_bounds = array<i64: 1, 8, 1, 1, 8>}, {transform_indices = @transform_1, window_bounds = array<i64: 1, 8, 1, 1, 8>}, {transform_indices = @transform_2, window_bounds = array<i64: 1, 8, 1, 1, 8>}, {transform_indices = @transform_3, window_bounds = array<i64: 1, 1, 1, 8>}, {transform_indices = @transform_4, window_bounds = array<i64: 1, 8, 1, 1, 8>}]} {
    %c0_i32 = arith.constant 0 : i32
    %0 = arith.cmpi eq, %arg3, %c0_i32 : i32
    %1 = arith.extui %0 : i1 to i32
    %c0_i32_0 = arith.constant 0 : i32
    %2 = arith.cmpi ne, %1, %c0_i32_0 : i32
    scf.if %2 {
      %cst_39 = arith.constant 0xFF800000 : f32
      %45 = vector.broadcast %cst_39 : f32 to vector<8x1xf32>
      %c0_40 = arith.constant 0 : index
      %c0_41 = arith.constant 0 : index
      %46 = vector.load %arg9[%c0_40, %c0_41] : memref<8x1xf32, #tpu.memory_space<vmem>>, vector<8x1xf32>
      tpu.vector_store %arg9[%c0_40, %c0_41], %45 {strides = array<i32>} : memref<8x1xf32, #tpu.memory_space<vmem>>, vector<8x1xf32>,
      %cst_42 = arith.constant 0.000000e+00 : f32
      %47 = vector.broadcast %cst_42 : f32 to vector<8x1xf32>
      %c0_43 = arith.constant 0 : index
      %c0_44 = arith.constant 0 : index
      %48 = vector.load %arg10[%c0_43, %c0_44] : memref<8x1xf32, #tpu.memory_space<vmem>>, vector<8x1xf32>
      tpu.vector_store %arg10[%c0_43, %c0_44], %47 {strides = array<i32>} : memref<8x1xf32, #tpu.memory_space<vmem>>, vector<8x1xf32>,
      %cst_45 = arith.constant 0.000000e+00 : f32
      %49 = vector.broadcast %cst_45 : f32 to vector<8x8xf32>
      %c0_46 = arith.constant 0 : index
      %c0_47 = arith.constant 0 : index
      %50 = vector.load %arg11[%c0_46, %c0_47] : memref<8x8xf32, #tpu.memory_space<vmem>>, vector<8x8xf32>
      tpu.vector_store %arg11[%c0_46, %c0_47], %49 {strides = array<i32>} : memref<8x8xf32, #tpu.memory_space<vmem>>, vector<8x8xf32>,
    } else {
    }
    %c0 = arith.constant 0 : index
    %c0_1 = arith.constant 0 : index
    %c0_2 = arith.constant 0 : index
    %c0_3 = arith.constant 0 : index
    %c0_4 = arith.constant 0 : index
    %3 = vector.load %arg4[%c0, %c0_1, %c0_2, %c0_3, %c0_4] : memref<1x8x1x1x8xf32, #tpu.memory_space<vmem>>, vector<1x8x1x1x8xf32>
    %4 = vector.shape_cast %3 : vector<1x8x1x1x8xf32> to vector<8x8xf32>
    %c0_5 = arith.constant 0 : index
    %c0_6 = arith.constant 0 : index
    %c0_7 = arith.constant 0 : index
    %c0_8 = arith.constant 0 : index
    %c0_9 = arith.constant 0 : index
    %5 = vector.load %arg5[%c0_5, %c0_6, %c0_7, %c0_8, %c0_9] : memref<1x8x1x1x8xf32, #tpu.memory_space<vmem>>, vector<1x8x1x1x8xf32>
    %6 = vector.shape_cast %5 : vector<1x8x1x1x8xf32> to vector<8x8xf32>
    %c0_10 = arith.constant 0 : index
    %c0_11 = arith.constant 0 : index
    %c0_12 = arith.constant 0 : index
    %c0_13 = arith.constant 0 : index
    %c0_14 = arith.constant 0 : index
    %7 = vector.load %arg6[%c0_10, %c0_11, %c0_12, %c0_13, %c0_14] : memref<1x8x1x1x8xf32, #tpu.memory_space<vmem>>, vector<1x8x1x1x8xf32>
    %8 = vector.shape_cast %7 : vector<1x8x1x1x8xf32> to vector<8x8xf32>
    %c0_15 = arith.constant 0 : index
    %c0_16 = arith.constant 0 : index
    %c0_17 = arith.constant 0 : index
    %c0_18 = arith.constant 0 : index
    %9 = vector.load %arg7[%c0_15, %c0_16, %c0_17, %c0_18] : memref<1x1x1x8xf32, #tpu.memory_space<vmem>>, vector<1x1x1x8xf32>
    %10 = vector.shape_cast %9 : vector<1x1x1x8xf32> to vector<1x8xf32>
    %cst = arith.constant dense<0.000000e+00> : vector<8x8xf32>
    %11 = tpu.matmul %4, %6, %cst {dimension_numbers = #tpu.dot_dimension_numbers<[1], [1], [0], [0], [0, 0, 1, 0], [], []>} : vector<8x8xf32>, vector<8x8xf32>, vector<8x8xf32> -> vector<8x8xf32>
    %cst_19 = arith.constant 0.000000e+00 : f32
    %12 = vector.broadcast %cst_19 : f32 to vector<1x8xf32>
    %13 = arith.cmpf oeq, %10, %12 : vector<1x8xf32>
    %cst_20 = arith.constant -1.000000e+20 : f32
    %14 = vector.shape_cast %13 : vector<1x8xi1> to vector<1x8xi1>
    %15 = vector.broadcast %14 : vector<1x8xi1> to vector<8x8xi1>
    %16 = vector.broadcast %cst_20 : f32 to vector<8x8xf32>
    %17 = arith.select %15, %16, %11 : vector<8x8xi1>, vector<8x8xf32>
    %cst_21 = arith.constant 0.176776692 : f32
    %18 = vector.broadcast %cst_21 : f32 to vector<8x8xf32>
    %19 = arith.mulf %17, %18 : vector<8x8xf32>
    %c0_22 = arith.constant 0 : index
    %c0_23 = arith.constant 0 : index
    %20 = vector.load %arg9[%c0_22, %c0_23] : memref<8x1xf32, #tpu.memory_space<vmem>>, vector<8x1xf32>
    %cst_24 = arith.constant dense<0xFF800000> : vector<8xf32>
    %21 = vector.multi_reduction <maximumf>, %19, %cst_24 [1] : vector<8x8xf32> to vector<8xf32>
    %22 = vector.shape_cast %21 : vector<8xf32> to vector<8x1xf32>
    %23 = arith.maximumf %20, %22 : vector<8x1xf32>
    %24 = arith.subf %20, %23 : vector<8x1xf32>
    %25 = math.exp %24 : vector<8x1xf32>
    %26 = vector.broadcast %23 : vector<8x1xf32> to vector<8x8xf32>
    %27 = arith.subf %19, %26 : vector<8x8xf32>
    %28 = math.exp %27 : vector<8x8xf32>
    %c0_25 = arith.constant 0 : index
    %c0_26 = arith.constant 0 : index
    %29 = vector.load %arg10[%c0_25, %c0_26] : memref<8x1xf32, #tpu.memory_space<vmem>>, vector<8x1xf32>
    %30 = arith.mulf %25, %29 : vector<8x1xf32>
    %cst_27 = arith.constant dense<0.000000e+00> : vector<8xf32>
    %31 = vector.multi_reduction <add>, %28, %cst_27 [1] : vector<8x8xf32> to vector<8xf32>
    %32 = vector.shape_cast %31 : vector<8xf32> to vector<8x1xf32>
    %33 = arith.addf %30, %32 : vector<8x1xf32>
    %c0_28 = arith.constant 0 : index
    %c0_29 = arith.constant 0 : index
    %34 = vector.load %arg10[%c0_28, %c0_29] : memref<8x1xf32, #tpu.memory_space<vmem>>, vector<8x1xf32>
    tpu.vector_store %arg10[%c0_28, %c0_29], %33 {strides = array<i32>} : memref<8x1xf32, #tpu.memory_space<vmem>>, vector<8x1xf32>,
    %c0_30 = arith.constant 0 : index
    %c0_31 = arith.constant 0 : index
    %35 = vector.load %arg11[%c0_30, %c0_31] : memref<8x8xf32, #tpu.memory_space<vmem>>, vector<8x8xf32>
    %36 = vector.broadcast %25 : vector<8x1xf32> to vector<8x8xf32>
    %37 = arith.mulf %36, %35 : vector<8x8xf32>
    %cst_32 = arith.constant dense<0.000000e+00> : vector<8x8xf32>
    %38 = tpu.matmul %28, %8, %cst_32 {dimension_numbers = #tpu.dot_dimension_numbers<[1], [0], [0], [1], [0, 0, 1, 1], [], []>} : vector<8x8xf32>, vector<8x8xf32>, vector<8x8xf32> -> vector<8x8xf32>
    %39 = arith.addf %37, %38 : vector<8x8xf32>
    %c0_33 = arith.constant 0 : index
    %c0_34 = arith.constant 0 : index
    %40 = vector.load %arg11[%c0_33, %c0_34] : memref<8x8xf32, #tpu.memory_space<vmem>>, vector<8x8xf32>
    tpu.vector_store %arg11[%c0_33, %c0_34], %39 {strides = array<i32>} : memref<8x8xf32, #tpu.memory_space<vmem>>, vector<8x8xf32>,
    %c0_35 = arith.constant 0 : index
    %c0_36 = arith.constant 0 : index
    %41 = vector.load %arg9[%c0_35, %c0_36] : memref<8x1xf32, #tpu.memory_space<vmem>>, vector<8x1xf32>
    tpu.vector_store %arg9[%c0_35, %c0_36], %23 {strides = array<i32>} : memref<8x1xf32, #tpu.memory_space<vmem>>, vector<8x1xf32>,
    %c0_i32_37 = arith.constant 0 : i32
    %42 = arith.cmpi eq, %arg3, %c0_i32_37 : i32
    %43 = arith.extui %42 : i1 to i32
    %c0_i32_38 = arith.constant 0 : i32
    %44 = arith.cmpi ne, %43, %c0_i32_38 : i32
    scf.if %44 {
      %c0_39 = arith.constant 0 : index
      %c0_40 = arith.constant 0 : index
      %45 = vector.load %arg10[%c0_39, %c0_40] : memref<8x1xf32, #tpu.memory_space<vmem>>, vector<8x1xf32>
      %46 = tpu.reciprocal %45 {approx = true} : vector<8x1xf32> -> vector<8x1xf32>
      %c0_41 = arith.constant 0 : index
      %c0_42 = arith.constant 0 : index
      %47 = vector.load %arg11[%c0_41, %c0_42] : memref<8x8xf32, #tpu.memory_space<vmem>>, vector<8x8xf32>
      %48 = vector.broadcast %46 : vector<8x1xf32> to vector<8x8xf32>
      %49 = arith.mulf %47, %48 : vector<8x8xf32>
      %c0_43 = arith.constant 0 : index
      %c0_44 = arith.constant 0 : index
      %c0_45 = arith.constant 0 : index
      %c0_46 = arith.constant 0 : index
      %c0_47 = arith.constant 0 : index
      %50 = vector.load %arg8[%c0_43, %c0_44, %c0_45, %c0_46, %c0_47] : memref<1x8x1x1x8xf32, #tpu.memory_space<vmem>>, vector<1x8x1x1x8xf32>
      %51 = vector.shape_cast %50 : vector<1x8x1x1x8xf32> to vector<8x8xf32>
      %52 = vector.shape_cast %49 : vector<8x8xf32> to vector<1x8x1x1x8xf32>
      tpu.vector_store %arg8[%c0_43, %c0_44, %c0_45, %c0_46, %c0_47], %52 {strides = array<i32>} : memref<1x8x1x1x8xf32, #tpu.memory_space<vmem>>, vector<1x8x1x1x8xf32>,
    } else {
    }
    return
  }
  func.func @transform_0(%arg0: i32, %arg1: i32, %arg2: i32, %arg3: i32) -> (i32, i32, i32, i32, i32) {
    %c0_i32 = arith.constant 0 : i32
    %c0_i32_0 = arith.constant 0 : i32
    %c0_i32_1 = arith.constant 0 : i32
    return %arg0, %arg2, %arg1, %c0_i32, %c0_i32_0 : i32, i32, i32, i32, i32
  }
  func.func @transform_1(%arg0: i32, %arg1: i32, %arg2: i32, %arg3: i32) -> (i32, i32, i32, i32, i32) {
    %c0_i32 = arith.constant 0 : i32
    %0 = arith.addi %c0_i32, %arg1 : i32
    %c0_i32_0 = arith.constant 0 : i32
    %c0_i32_1 = arith.constant 0 : i32
    %c0_i32_2 = arith.constant 0 : i32
    return %arg0, %arg3, %0, %c0_i32_0, %c0_i32_1 : i32, i32, i32, i32, i32
  }
  func.func @transform_2(%arg0: i32, %arg1: i32, %arg2: i32, %arg3: i32) -> (i32, i32, i32, i32, i32) {
    %c4_i32 = arith.constant 4 : i32
    %0 = arith.addi %c4_i32, %arg1 : i32
    %c0_i32 = arith.constant 0 : i32
    %c0_i32_0 = arith.constant 0 : i32
    %c0_i32_1 = arith.constant 0 : i32
    return %arg0, %arg3, %0, %c0_i32, %c0_i32_0 : i32, i32, i32, i32, i32
  }
  func.func @transform_3(%arg0: i32, %arg1: i32, %arg2: i32, %arg3: i32) -> (i32, i32, i32, i32) {
    %c0_i32 = arith.constant 0 : i32
    %c0_i32_0 = arith.constant 0 : i32
    %c0_i32_1 = arith.constant 0 : i32
    return %arg0, %c0_i32, %c0_i32_0, %arg3 : i32, i32, i32, i32
  }
  func.func @transform_4(%arg0: i32, %arg1: i32, %arg2: i32, %arg3: i32) -> (i32, i32, i32, i32, i32) {
    %c0_i32 = arith.constant 0 : i32
    %c0_i32_0 = arith.constant 0 : i32
    %c0_i32_1 = arith.constant 0 : i32
    return %arg0, %arg2, %arg1, %c0_i32, %c0_i32_0 : i32, i32, i32, i32, i32
  }
}

module attributes {stable_mosaic.version = 11 : i64} {
  func.func @_ffn_res_ln_kernel(%arg0: i32, %arg1: i32, %arg2: memref<16x32xf32, #tpu.memory_space<vmem>>, %arg3: memref<32x128xf32, #tpu.memory_space<vmem>>, %arg4: memref<1x128xf32, #tpu.memory_space<vmem>>, %arg5: memref<128x32xf32, #tpu.memory_space<vmem>>, %arg6: memref<1x32xf32, #tpu.memory_space<vmem>>, %arg7: memref<1x32xf32, #tpu.memory_space<vmem>>, %arg8: memref<1x32xf32, #tpu.memory_space<vmem>>, %arg9: memref<16x32xf32, #tpu.memory_space<vmem>>, %arg10: memref<16x32xf32, #tpu.memory_space<vmem>>) attributes {dimension_semantics = [#tpu.dimension_semantics<parallel>, #tpu.dimension_semantics<arbitrary>], iteration_bounds = array<i64: 1, 1>, scalar_prefetch = 0 : i64, scratch_operands = 1 : i64, tpu.core_type = #tpu.core_type<tc>, window_params = [{transform_indices = @transform_0, window_bounds = array<i64: 16, 32>}, {transform_indices = @transform_1, window_bounds = array<i64: 32, 128>}, {transform_indices = @transform_2, window_bounds = array<i64: 1, 128>}, {transform_indices = @transform_3, window_bounds = array<i64: 128, 32>}, {pipeline_mode = #tpu.pipeline_mode<synchronous>, transform_indices = @transform_4, window_bounds = array<i64: 1, 32>}, {pipeline_mode = #tpu.pipeline_mode<synchronous>, transform_indices = @transform_5, window_bounds = array<i64: 1, 32>}, {pipeline_mode = #tpu.pipeline_mode<synchronous>, transform_indices = @transform_6, window_bounds = array<i64: 1, 32>}, {transform_indices = @transform_7, window_bounds = array<i64: 16, 32>}]} {
    %c0_i32 = arith.constant 0 : i32
    %0 = arith.cmpi eq, %arg1, %c0_i32 : i32
    %1 = arith.extui %0 : i1 to i32
    %c0_i32_0 = arith.constant 0 : i32
    %2 = arith.cmpi ne, %1, %c0_i32_0 : i32
    scf.if %2 {
      %cst_16 = arith.constant 0.000000e+00 : f32
      %19 = vector.broadcast %cst_16 : f32 to vector<16x32xf32>
      %c0_17 = arith.constant 0 : index
      %c0_18 = arith.constant 0 : index
      %20 = vector.load %arg10[%c0_17, %c0_18] : memref<16x32xf32, #tpu.memory_space<vmem>>, vector<16x32xf32>
      tpu.vector_store %arg10[%c0_17, %c0_18], %19 {strides = array<i32>} : memref<16x32xf32, #tpu.memory_space<vmem>>, vector<16x32xf32>,
    } else {
    }
    %c0 = arith.constant 0 : index
    %c0_1 = arith.constant 0 : index
    %3 = vector.load %arg2[%c0, %c0_1] : memref<16x32xf32, #tpu.memory_space<vmem>>, vector<16x32xf32>
    %c0_2 = arith.constant 0 : index
    %c0_3 = arith.constant 0 : index
    %4 = vector.load %arg3[%c0_2, %c0_3] : memref<32x128xf32, #tpu.memory_space<vmem>>, vector<32x128xf32>
    %cst = arith.constant dense<0.000000e+00> : vector<16x128xf32>
    %5 = tpu.matmul %3, %4, %cst {dimension_numbers = #tpu.dot_dimension_numbers<[1], [0], [0], [1], [0, 0, 1, 1], [], []>} : vector<16x32xf32>, vector<32x128xf32>, vector<16x128xf32> -> vector<16x128xf32>
    %c0_4 = arith.constant 0 : index
    %c0_5 = arith.constant 0 : index
    %6 = vector.load %arg4[%c0_4, %c0_5] : memref<1x128xf32, #tpu.memory_space<vmem>>, vector<1x128xf32>
    %7 = vector.broadcast %6 : vector<1x128xf32> to vector<16x128xf32>
    %8 = arith.addf %5, %7 : vector<16x128xf32>
    %cst_6 = arith.constant 0.000000e+00 : f32
    %9 = vector.broadcast %cst_6 : f32 to vector<16x128xf32>
    %10 = arith.maximumf %8, %9 : vector<16x128xf32>
    %c0_7 = arith.constant 0 : index
    %c0_8 = arith.constant 0 : index
    %11 = vector.load %arg10[%c0_7, %c0_8] : memref<16x32xf32, #tpu.memory_space<vmem>>, vector<16x32xf32>
    %c0_9 = arith.constant 0 : index
    %c0_10 = arith.constant 0 : index
    %12 = vector.load %arg5[%c0_9, %c0_10] : memref<128x32xf32, #tpu.memory_space<vmem>>, vector<128x32xf32>
    %cst_11 = arith.constant dense<0.000000e+00> : vector<16x32xf32>
    %13 = tpu.matmul %10, %12, %cst_11 {dimension_numbers = #tpu.dot_dimension_numbers<[1], [0], [0], [1], [0, 0, 1, 1], [], []>} : vector<16x128xf32>, vector<128x32xf32>, vector<16x32xf32> -> vector<16x32xf32>
    %14 = arith.addf %11, %13 : vector<16x32xf32>
    %c0_12 = arith.constant 0 : index
    %c0_13 = arith.constant 0 : index
    %15 = vector.load %arg10[%c0_12, %c0_13] : memref<16x32xf32, #tpu.memory_space<vmem>>, vector<16x32xf32>
    tpu.vector_store %arg10[%c0_12, %c0_13], %14 {strides = array<i32>} : memref<16x32xf32, #tpu.memory_space<vmem>>, vector<16x32xf32>,
    %c0_i32_14 = arith.constant 0 : i32
    %16 = arith.cmpi eq, %arg1, %c0_i32_14 : i32
    %17 = arith.extui %16 : i1 to i32
    %c0_i32_15 = arith.constant 0 : i32
    %18 = arith.cmpi ne, %17, %c0_i32_15 : i32
    scf.if %18 {
      %c0_16 = arith.constant 0 : index
      %c0_17 = arith.constant 0 : index
      %19 = vector.load %arg10[%c0_16, %c0_17] : memref<16x32xf32, #tpu.memory_space<vmem>>, vector<16x32xf32>
      %c0_18 = arith.constant 0 : index
      %c0_19 = arith.constant 0 : index
      %20 = vector.load %arg6[%c0_18, %c0_19] : memref<1x32xf32, #tpu.memory_space<vmem>>, vector<1x32xf32>
      %21 = vector.broadcast %20 : vector<1x32xf32> to vector<16x32xf32>
      %22 = arith.addf %19, %21 : vector<16x32xf32>
      %c0_20 = arith.constant 0 : index
      %c0_21 = arith.constant 0 : index
      %23 = vector.load %arg2[%c0_20, %c0_21] : memref<16x32xf32, #tpu.memory_space<vmem>>, vector<16x32xf32>
      %24 = arith.addf %22, %23 : vector<16x32xf32>
      %cst_22 = arith.constant dense<0.000000e+00> : vector<16xf32>
      %25 = vector.multi_reduction <add>, %24, %cst_22 [1] : vector<16x32xf32> to vector<16xf32>
      %26 = vector.shape_cast %25 : vector<16xf32> to vector<16x1xf32>
      %cst_23 = arith.constant 3.200000e+01 : f32
      %27 = vector.broadcast %cst_23 : f32 to vector<16x1xf32>
      %28 = arith.divf %26, %27 : vector<16x1xf32>
      %29 = vector.broadcast %28 : vector<16x1xf32> to vector<16x32xf32>
      %30 = arith.subf %24, %29 : vector<16x32xf32>
      %31 = arith.mulf %30, %30 : vector<16x32xf32>
      %cst_24 = arith.constant dense<0.000000e+00> : vector<16xf32>
      %32 = vector.multi_reduction <add>, %31, %cst_24 [1] : vector<16x32xf32> to vector<16xf32>
      %33 = vector.shape_cast %32 : vector<16xf32> to vector<16x1xf32>
      %cst_25 = arith.constant 3.200000e+01 : f32
      %34 = vector.broadcast %cst_25 : f32 to vector<16x1xf32>
      %35 = arith.divf %33, %34 : vector<16x1xf32>
      %cst_26 = arith.constant 9.99999974E-6 : f32
      %36 = vector.broadcast %cst_26 : f32 to vector<16x1xf32>
      %37 = arith.addf %35, %36 : vector<16x1xf32>
      %38 = math.rsqrt %37 : vector<16x1xf32>
      %39 = vector.broadcast %38 : vector<16x1xf32> to vector<16x32xf32>
      %40 = arith.mulf %30, %39 : vector<16x32xf32>
      %c0_27 = arith.constant 0 : index
      %c0_28 = arith.constant 0 : index
      %41 = vector.load %arg7[%c0_27, %c0_28] : memref<1x32xf32, #tpu.memory_space<vmem>>, vector<1x32xf32>
      %42 = vector.broadcast %41 : vector<1x32xf32> to vector<16x32xf32>
      %43 = arith.mulf %40, %42 : vector<16x32xf32>
      %c0_29 = arith.constant 0 : index
      %c0_30 = arith.constant 0 : index
      %44 = vector.load %arg8[%c0_29, %c0_30] : memref<1x32xf32, #tpu.memory_space<vmem>>, vector<1x32xf32>
      %45 = vector.broadcast %44 : vector<1x32xf32> to vector<16x32xf32>
      %46 = arith.addf %43, %45 : vector<16x32xf32>
      %c0_31 = arith.constant 0 : index
      %c0_32 = arith.constant 0 : index
      %47 = vector.load %arg9[%c0_31, %c0_32] : memref<16x32xf32, #tpu.memory_space<vmem>>, vector<16x32xf32>
      tpu.vector_store %arg9[%c0_31, %c0_32], %46 {strides = array<i32>} : memref<16x32xf32, #tpu.memory_space<vmem>>, vector<16x32xf32>,
    } else {
    }
    return
  }
  func.func @transform_0(%arg0: i32, %arg1: i32) -> (i32, i32) {
    %c0_i32 = arith.constant 0 : i32
    %c0_i32_0 = arith.constant 0 : i32
    return %arg0, %c0_i32 : i32, i32
  }
  func.func @transform_1(%arg0: i32, %arg1: i32) -> (i32, i32) {
    %c0_i32 = arith.constant 0 : i32
    %c0_i32_0 = arith.constant 0 : i32
    return %c0_i32, %arg1 : i32, i32
  }
  func.func @transform_2(%arg0: i32, %arg1: i32) -> (i32, i32) {
    %c0_i32 = arith.constant 0 : i32
    %c0_i32_0 = arith.constant 0 : i32
    return %c0_i32, %arg1 : i32, i32
  }
  func.func @transform_3(%arg0: i32, %arg1: i32) -> (i32, i32) {
    %c0_i32 = arith.constant 0 : i32
    %c0_i32_0 = arith.constant 0 : i32
    return %arg1, %c0_i32 : i32, i32
  }
  func.func @transform_4(%arg0: i32, %arg1: i32) -> (i32, i32) {
    %c0_i32 = arith.constant 0 : i32
    %c0_i32_0 = arith.constant 0 : i32
    %c0_i32_1 = arith.constant 0 : i32
    return %c0_i32, %c0_i32_0 : i32, i32
  }
  func.func @transform_5(%arg0: i32, %arg1: i32) -> (i32, i32) {
    %c0_i32 = arith.constant 0 : i32
    %c0_i32_0 = arith.constant 0 : i32
    %c0_i32_1 = arith.constant 0 : i32
    return %c0_i32, %c0_i32_0 : i32, i32
  }
  func.func @transform_6(%arg0: i32, %arg1: i32) -> (i32, i32) {
    %c0_i32 = arith.constant 0 : i32
    %c0_i32_0 = arith.constant 0 : i32
    %c0_i32_1 = arith.constant 0 : i32
    return %c0_i32, %c0_i32_0 : i32, i32
  }
  func.func @transform_7(%arg0: i32, %arg1: i32) -> (i32, i32) {
    %c0_i32 = arith.constant 0 : i32
    %c0_i32_0 = arith.constant 0 : i32
    return %arg0, %c0_i32 : i32, i32
  }
}

module attributes {stable_mosaic.version = 11 : i64} {
  func.func @_matmul_bias_kernel(%arg0: i32, %arg1: i32, %arg2: i32, %arg3: memref<16x32xf32, #tpu.memory_space<vmem>>, %arg4: memref<32x50xf32, #tpu.memory_space<vmem>>, %arg5: memref<1x50xf32, #tpu.memory_space<vmem>>, %arg6: memref<16x50xf32, #tpu.memory_space<vmem>>, %arg7: memref<16x50xf32, #tpu.memory_space<vmem>>) attributes {dimension_semantics = [#tpu.dimension_semantics<parallel>, #tpu.dimension_semantics<parallel>, #tpu.dimension_semantics<arbitrary>], iteration_bounds = array<i64: 1, 1, 1>, scalar_prefetch = 0 : i64, scratch_operands = 1 : i64, tpu.core_type = #tpu.core_type<tc>, window_params = [{transform_indices = @transform_0, window_bounds = array<i64: 16, 32>}, {transform_indices = @transform_1, window_bounds = array<i64: 32, 50>}, {transform_indices = @transform_2, window_bounds = array<i64: 1, 50>}, {transform_indices = @transform_3, window_bounds = array<i64: 16, 50>}]} {
    %c0_i32 = arith.constant 0 : i32
    %0 = arith.cmpi eq, %arg2, %c0_i32 : i32
    %1 = arith.extui %0 : i1 to i32
    %c0_i32_0 = arith.constant 0 : i32
    %2 = arith.cmpi ne, %1, %c0_i32_0 : i32
    scf.if %2 {
      %cst_10 = arith.constant 0.000000e+00 : f32
      %12 = vector.broadcast %cst_10 : f32 to vector<16x50xf32>
      %c0_11 = arith.constant 0 : index
      %c0_12 = arith.constant 0 : index
      %13 = vector.load %arg7[%c0_11, %c0_12] : memref<16x50xf32, #tpu.memory_space<vmem>>, vector<16x50xf32>
      tpu.vector_store %arg7[%c0_11, %c0_12], %12 {strides = array<i32>} : memref<16x50xf32, #tpu.memory_space<vmem>>, vector<16x50xf32>,
    } else {
    }
    %c0 = arith.constant 0 : index
    %c0_1 = arith.constant 0 : index
    %3 = vector.load %arg7[%c0, %c0_1] : memref<16x50xf32, #tpu.memory_space<vmem>>, vector<16x50xf32>
    %c0_2 = arith.constant 0 : index
    %c0_3 = arith.constant 0 : index
    %4 = vector.load %arg3[%c0_2, %c0_3] : memref<16x32xf32, #tpu.memory_space<vmem>>, vector<16x32xf32>
    %c0_4 = arith.constant 0 : index
    %c0_5 = arith.constant 0 : index
    %5 = vector.load %arg4[%c0_4, %c0_5] : memref<32x50xf32, #tpu.memory_space<vmem>>, vector<32x50xf32>
    %cst = arith.constant dense<0.000000e+00> : vector<16x50xf32>
    %6 = tpu.matmul %4, %5, %cst {dimension_numbers = #tpu.dot_dimension_numbers<[1], [0], [0], [1], [0, 0, 1, 1], [], []>} : vector<16x32xf32>, vector<32x50xf32>, vector<16x50xf32> -> vector<16x50xf32>
    %7 = arith.addf %3, %6 : vector<16x50xf32>
    %c0_6 = arith.constant 0 : index
    %c0_7 = arith.constant 0 : index
    %8 = vector.load %arg7[%c0_6, %c0_7] : memref<16x50xf32, #tpu.memory_space<vmem>>, vector<16x50xf32>
    tpu.vector_store %arg7[%c0_6, %c0_7], %7 {strides = array<i32>} : memref<16x50xf32, #tpu.memory_space<vmem>>, vector<16x50xf32>,
    %c0_i32_8 = arith.constant 0 : i32
    %9 = arith.cmpi eq, %arg2, %c0_i32_8 : i32
    %10 = arith.extui %9 : i1 to i32
    %c0_i32_9 = arith.constant 0 : i32
    %11 = arith.cmpi ne, %10, %c0_i32_9 : i32
    scf.if %11 {
      %c0_10 = arith.constant 0 : index
      %c0_11 = arith.constant 0 : index
      %12 = vector.load %arg7[%c0_10, %c0_11] : memref<16x50xf32, #tpu.memory_space<vmem>>, vector<16x50xf32>
      %c0_12 = arith.constant 0 : index
      %c0_13 = arith.constant 0 : index
      %13 = vector.load %arg5[%c0_12, %c0_13] : memref<1x50xf32, #tpu.memory_space<vmem>>, vector<1x50xf32>
      %14 = vector.broadcast %13 : vector<1x50xf32> to vector<16x50xf32>
      %15 = arith.addf %12, %14 : vector<16x50xf32>
      %c0_14 = arith.constant 0 : index
      %c0_15 = arith.constant 0 : index
      %16 = vector.load %arg6[%c0_14, %c0_15] : memref<16x50xf32, #tpu.memory_space<vmem>>, vector<16x50xf32>
      tpu.vector_store %arg6[%c0_14, %c0_15], %15 {strides = array<i32>} : memref<16x50xf32, #tpu.memory_space<vmem>>, vector<16x50xf32>,
    } else {
    }
    return
  }
  func.func @transform_0(%arg0: i32, %arg1: i32, %arg2: i32) -> (i32, i32) {
    %c0_i32 = arith.constant 0 : i32
    return %arg0, %arg2 : i32, i32
  }
  func.func @transform_1(%arg0: i32, %arg1: i32, %arg2: i32) -> (i32, i32) {
    %c0_i32 = arith.constant 0 : i32
    return %arg2, %arg1 : i32, i32
  }
  func.func @transform_2(%arg0: i32, %arg1: i32, %arg2: i32) -> (i32, i32) {
    %c0_i32 = arith.constant 0 : i32
    %c0_i32_0 = arith.constant 0 : i32
    return %c0_i32, %arg1 : i32, i32
  }
  func.func @transform_3(%arg0: i32, %arg1: i32, %arg2: i32) -> (i32, i32) {
    %c0_i32 = arith.constant 0 : i32
    return %arg0, %arg1 : i32, i32
  }
}

</mosaic_0001>

<llo_original>
// kernel: decoder_forward.17
$region0: #{decoder_forward.17}
  #allocation0 [shape = 'u32[]', space=smem, size = 0x4, offset = 0x4, fixed_abs, tag = 'smem constant byte address 0x4 - core index']
  #allocation1 [shape = 'u32[72,128]{1,0:T(1,128)}', space=vmem, size = 0x9000, scoped, tag = 'internal scratch']
  #allocation2 [shape = 'f32[16,96]{1,0:T(8,128)}', space=vmem, size = 0x2000, scoped, tag = 'scratch operand']
  %s0 = inlined_call_operand.vmem [shape: f32[16,32], index: 0, kind: input, shape index: {}]
  %s1 = inlined_call_operand.vmem [shape: f32[32,96], index: 1, kind: input, shape index: {}]
  %s2 = inlined_call_operand.vmem [shape: f32[1,96], index: 2, kind: input, shape index: {}]
  %s3 = inlined_call_operand.vmem [shape: f32[16,96], index: 3, kind: output, shape index: {}]
  %s4 = sld [smem:[#allocation0]]
  $region30: #{decoder_forward.17} parent=0
    _
  %s6 = ssub.s32 1, %s4
  %s7 = scalar_select 0, %s6, %s4
  // Predicated region
  $region2: #{decoder_forward.17} parent=0 // pred_check
    _
  $region3: #{decoder_forward.17} parent=0 // pred_check_branch
    %9 = sbr.rel (0) target = $region5
  $region4: #{decoder_forward.17} parent=0 // pred_region
    _
  $region5: #{decoder_forward.17} parent=0 // pred_fallthru
    _
  // Predicated region
  $region6: #{decoder_forward.17} parent=0 // pred_check
    _
  $region7: #{decoder_forward.17} parent=0 // pred_check_branch
    %11 = sbr.rel (0) target = $region9
  $region8: #{decoder_forward.17} parent=0 // pred_region
    _
  $region9: #{decoder_forward.17} parent=0 // pred_fallthru
    _
  // Predicated region
  $region10: #{decoder_forward.17} parent=0 // pred_check
    _
  $region11: #{decoder_forward.17} parent=0 // pred_check_branch
    %13 = sbr.rel (0) target = $region13
  $region12: #{decoder_forward.17} parent=0 // pred_region
    _
  $region13: #{decoder_forward.17} parent=0 // pred_fallthru
    _
  %p14 = scmp.eq.s32.totalorder 0, 0
  // Predicated region
  $region14: #{decoder_forward.17} parent=0 // pred_check
    %p15 = pneg %p14
  $region15: #{decoder_forward.17} parent=0 // pred_check_branch
    %17 = sbr.rel (%p15) target = $region17
  $region16: #{decoder_forward.17} parent=0 // pred_region
    %vm18 = vcmask 785408
    %19 = vst.msk [vmem:[#allocation2] sm:$0xff] %vm18, 0.0
    %20 = vst.msk [vmem:[#allocation2 + $0x8] sm:$0xff] %vm18, 0.0
  $region17: #{decoder_forward.17} parent=0 // pred_fallthru
    _
  %v21 = vld [vmem:[#allocation2] sm:$0xff]
  %v22 = vld [vmem:[#allocation2 + $0x8] sm:$0xff]
  %v23 = vld [vmem:[%s0] sm:$0xff]
  %v24 = vld [vmem:[%s0 + $0x8] sm:$0xff]
  %v25 = vld [vmem:[%s1] sm:$0xff]
  %v26 = vld [vmem:[%s1 + $0x8] sm:$0xff]
  %v27 = vld [vmem:[%s1 + $0x10] sm:$0xff]
  %v28 = vld [vmem:[%s1 + $0x18] sm:$0xff]
  %vm29 = vcmask 261120
  %v31 = vsel %vm29, %v23, 0
  %v34 = vsel %vm29, %v24, 0
  %36 = vmatpush.msra.mxu0 0.0
  %37 = vmatpush.msra.mxu0 0.0
  %38 = vmatpush.msra.mxu0 0.0
  %39 = vmatpush.msra.mxu0 0.0
  %40 = vmatpush.msra.mxu0 0.0
  %41 = vmatpush.msra.mxu0 0.0
  %42 = vmatpush.msra.mxu0 0.0
  %43 = vmatpush.msra.mxu0 0.0
  %44 = vmatpush.msra.mxu0 0.0
  %45 = vmatpush.msra.mxu0 0.0
  %46 = vmatpush.msra.mxu0 0.0
  %47 = vmatpush.msra.mxu0 0.0
  %48 = vmatpush.msra.mxu0 %v28
  %49 = vmatpush.msra.mxu0 %v27
  %50 = vmatpush.msra.mxu0 %v26
  %51 = vmatpush.msra.mxu0 %v25
  %52 = vmatmul.f32.gmra.mxu0 %v31
  %v53 = vpop.f32.mrf.mxu0
  %v54 = vadd.f32 0.0, %v53
  %55 = vmatmul.f32.gmra.mxu0 %v34
  %v56 = vpop.f32.mrf.mxu0
  %v57 = vadd.f32 0.0, %v56
  %58 = vdwg.mxu0
  %v59 = vadd.f32 %v21, %v54
  %v60 = vadd.f32 %v22, %v57
  %vm61 = vcmask 785408
  %62 = vst.msk [vmem:[#allocation2] sm:$0xff] %vm61, %v59
  %63 = vst.msk [vmem:[#allocation2 + $0x8] sm:$0xff] %vm61, %v60
  // Predicated region
  $region18: #{decoder_forward.17} parent=0 // pred_check
    %p64 = pneg %p14
  $region19: #{decoder_forward.17} parent=0 // pred_check_branch
    %66 = sbr.rel (%p64) target = $region21
  $region20: #{decoder_forward.17} parent=0 // pred_region
    %v67 = vld [vmem:[#allocation2] sm:$0xff]
    %v68 = vld [vmem:[#allocation2 + $0x8] sm:$0xff]
    %v69 = vld [vmem:[%s2] sm:$0x1]
    %v71 = vperm.slane %v69, 0
    %v73 = vadd.f32 %v67, %v71
    %v74 = vadd.f32 %v68, %v71
    %75 = vst.msk [vmem:[%s3] sm:$0xff] %vm61, %v73
    %76 = vst.msk [vmem:[%s3 + $0x8] sm:$0xff] %vm61, %v74
  $region21: #{decoder_forward.17} parent=0 // pred_fallthru
    _
  // Predicated region
  $region22: #{decoder_forward.17} parent=0 // pred_check
    _
  $region23: #{decoder_forward.17} parent=0 // pred_check_branch
    %78 = sbr.rel (0) target = $region25
  $region24: #{decoder_forward.17} parent=0 // pred_region
    _
  $region25: #{decoder_forward.17} parent=0 // pred_fallthru
    _
  // Predicated region
  $region26: #{decoder_forward.17} parent=0 // pred_check
    _
  $region27: #{decoder_forward.17} parent=0 // pred_check_branch
    %80 = sbr.rel (0) target = $region29
  $region28: #{decoder_forward.17} parent=0 // pred_region
    _
  $region29: #{decoder_forward.17} parent=0 // pred_fallthru
    _

// kernel: decoder_forward.18
$region0: #{decoder_forward.18}
  #allocation0 [shape = 'u32[]', space=smem, size = 0x4, offset = 0x4, fixed_abs, tag = 'smem constant byte address 0x4 - core index']
  #allocation1 [shape = 'u32[72,128]{1,0:T(1,128)}', space=vmem, size = 0x9000, scoped, tag = 'internal scratch']
  #allocation2 [shape = 'f32[8,1]{1,0:T(8,128)}', space=vmem, size = 0x1000, scoped, tag = 'scratch operand']
  #allocation3 [shape = 'f32[8,1]{1,0:T(8,128)}', space=vmem, size = 0x1000, scoped, tag = 'scratch operand']
  #allocation4 [shape = 'f32[8,8]{1,0:T(8,128)}', space=vmem, size = 0x1000, scoped, tag = 'scratch operand']
  %s0 = inlined_call_operand.vmem [shape: f32[2,8,12,1,8], index: 0, kind: input, shape index: {}, may-alias: {0,1,2}]
  %s1 = inlined_call_operand.vmem [shape: f32[2,8,12,1,8], index: 1, kind: input, shape index: {}, may-alias: {0,1,2}]
  %s2 = inlined_call_operand.vmem [shape: f32[2,8,12,1,8], index: 2, kind: input, shape index: {}, may-alias: {0,1,2}]
  %s3 = inlined_call_operand.vmem [shape: f32[2,1,8,8], index: 3, kind: input, shape index: {}]
  %s4 = inlined_call_operand.vmem [shape: f32[2,8,4,1,8], index: 4, kind: output, shape index: {}]
  %s5 = sld [smem:[#allocation0]]
  $region217: #{decoder_forward.18} parent=0
    _
  %s7 = ssub.s32 1, %s5
  %s8 = scalar_select 0, %s7, %s5
  $region1: #{decoder_forward.18} parent=0
    #allocation5 [shape = 'u8[8192]{0}', space=vmem, size = 0x2000, scoped, tag = 'input window, operand 0']
    #allocation6 [shape = 'u8[8192]{0}', space=vmem, size = 0x2000, scoped, tag = 'input window, operand 1']
    #allocation7 [shape = 'u8[8192]{0}', space=vmem, size = 0x2000, scoped, tag = 'input window, operand 2']
    #allocation8 [shape = 'u8[8192]{0}', space=vmem, size = 0x2000, scoped, tag = 'output window, operand 0']
    loop: start=0, step=1, limit=10
    $region2: #{decoder_forward.18} parent=1 // loop_pre_header
      _
    $region3: #{decoder_forward.18} parent=1 // loop_header
      %s10 = sphi 0, %s14
      %p11 = scmp.ge.s32.totalorder %s10, 10
      %s17 = sphi 0, %s43
      %s18 = sphi 0, %s39
      %s19 = sphi 0, %s35
      %s20 = sphi 0, %s31
      %s21 = sphi 0, %s17
      %s22 = sphi 0, %s18
      %s23 = sphi 0, %s19
      %s24 = sphi 0, %s20
      %s25 = sphi 0, %s21
      %s26 = sphi 0, %s22
      %s27 = sphi 0, %s23
      %s28 = sphi 0, %s24
      %s50 = sphi 0, %s52
      %s53 = sphi 0, %s50
      %s54 = sphi 0, %s53
      %s70 = sphi 0, %s54
      %s82 = sphi 0, %s84
      %s85 = sphi 0, %s82
      %s86 = sphi 0, %s85
      %s102 = sphi 0, %s86
      %s114 = sphi 0, %s116
      %s117 = sphi 0, %s114
      %s118 = sphi 0, %s117
      %s134 = sphi 0, %s118
      %s144 = sphi 0, %s146
      %s147 = sphi 0, %s144
      %s148 = sphi 0, %s147
      %s164 = sphi 0, %s148
      %s174 = sphi 0, %s176
      %s177 = sphi 0, %s174
      %s178 = sphi 0, %s177
      %s194 = sphi 0, %s178
    $region4: #{decoder_forward.18} parent=1 // loop_header_branch
      %13 = sbr.rel (%p11) target = $region8
    $region5: #{decoder_forward.18} parent=1 // loop_body
      %s15 = ssub.s32 %s10, 1
      %s16 = ssub.s32 %s10, 2
      %s29 = sadd.s32 1, %s20
      %p30 = scmp.ge.s32.totalorder %s29, 1
      %s31 = scalar_select %p30, 0, %s29
      %s32 = sadd.s32 1, %s19
      %s33 = scalar_select %p30, %s32, %s19
      %p34 = scmp.ge.s32.totalorder %s33, 1
      %s35 = scalar_select %p34, 0, %s33
      %s36 = sadd.s32 1, %s18
      %s37 = scalar_select %p34, %s36, %s18
      %p38 = scmp.ge.s32.totalorder %s37, 4
      %s39 = scalar_select %p38, 0, %s37
      %s40 = sadd.s32 1, %s17
      %s41 = scalar_select %p38, %s40, %s17
      %p42 = scmp.ge.s32.totalorder %s41, 2
      %s43 = scalar_select %p42, 0, %s41
      %s44 = ssub.s32 %s17, %s43
      %s45 = ssub.s32 %s19, %s35
      %s46 = sor.u32 %s44, %s45
      %s47 = ssub.s32 %s18, %s39
      %s48 = sor.u32 %s46, %s47
      %p49 = scmp.eq.s32.totalorder %s48, 0
      %s51 = sadd.s32 %s50, 1
      %s52 = scalar_select %p49, %s50, %s51
      %p55 = pneg %p49
      %p56 = scmp.eq.s32.totalorder %s10, 7
      %p57 = por %p55, %p56
      %p58 = scmp.ne.s32.totalorder %s50, %s53
      %p59 = scmp.eq.s32.totalorder %s10, 0
      %p60 = por %p58, %p59
      %p61 = scmp.ne.s32.totalorder %s50, %s53
      %p62 = scmp.eq.s32.totalorder %s15, 7
      %p63 = por %p61, %p62
      %p64 = scmp.ne.s32.totalorder %s53, %s54
      %p65 = scmp.eq.s32.totalorder %s15, 0
      %p66 = por %p64, %p65
      %p67 = scmp.ne.s32.totalorder %s53, %s54
      %p68 = scmp.eq.s32.totalorder %s16, 7
      %p69 = por %p67, %p68
      %p71 = scmp.ne.s32.totalorder %s54, %s70
      %p72 = scmp.eq.s32.totalorder %s16, 0
      %p73 = por %p71, %p72
      %s74 = sadd.s32 %s18, 4
      %s75 = sadd.s32 %s39, 4
      %s76 = ssub.s32 %s17, %s43
      %s77 = ssub.s32 %s20, %s31
      %s78 = sor.u32 %s76, %s77
      %s79 = ssub.s32 %s74, %s75
      %s80 = sor.u32 %s78, %s79
      %p81 = scmp.eq.s32.totalorder %s80, 0
      %s83 = sadd.s32 %s82, 1
      %s84 = scalar_select %p81, %s82, %s83
      %p87 = pneg %p81
      %p88 = scmp.eq.s32.totalorder %s10, 7
      %p89 = por %p87, %p88
      %p90 = scmp.ne.s32.totalorder %s82, %s85
      %p91 = scmp.eq.s32.totalorder %s10, 0
      %p92 = por %p90, %p91
      %p93 = scmp.ne.s32.totalorder %s82, %s85
      %p94 = scmp.eq.s32.totalorder %s15, 7
      %p95 = por %p93, %p94
      %p96 = scmp.ne.s32.totalorder %s85, %s86
      %p97 = scmp.eq.s32.totalorder %s15, 0
      %p98 = por %p96, %p97
      %p99 = scmp.ne.s32.totalorder %s85, %s86
      %p100 = scmp.eq.s32.totalorder %s16, 7
      %p101 = por %p99, %p100
      %p103 = scmp.ne.s32.totalorder %s86, %s102
      %p104 = scmp.eq.s32.totalorder %s16, 0
      %p105 = por %p103, %p104
      %s106 = sadd.s32 %s18, 8
      %s107 = sadd.s32 %s39, 8
      %s108 = ssub.s32 %s17, %s43
      %s109 = ssub.s32 %s20, %s31
      %s110 = sor.u32 %s108, %s109
      %s111 = ssub.s32 %s106, %s107
      %s112 = sor.u32 %s110, %s111
      %p113 = scmp.eq.s32.totalorder %s112, 0
      %s115 = sadd.s32 %s114, 1
      %s116 = scalar_select %p113, %s114, %s115
      %p119 = pneg %p113
      %p120 = scmp.eq.s32.totalorder %s10, 7
      %p121 = por %p119, %p120
      %p122 = scmp.ne.s32.totalorder %s114, %s117
      %p123 = scmp.eq.s32.totalorder %s10, 0
      %p124 = por %p122, %p123
      %p125 = scmp.ne.s32.totalorder %s114, %s117
      %p126 = scmp.eq.s32.totalorder %s15, 7
      %p127 = por %p125, %p126
      %p128 = scmp.ne.s32.totalorder %s117, %s118
      %p129 = scmp.eq.s32.totalorder %s15, 0
      %p130 = por %p128, %p129
      %p131 = scmp.ne.s32.totalorder %s117, %s118
      %p132 = scmp.eq.s32.totalorder %s16, 7
      %p133 = por %p131, %p132
      %p135 = scmp.ne.s32.totalorder %s118, %s134
      %p136 = scmp.eq.s32.totalorder %s16, 0
      %p137 = por %p135, %p136
      %s138 = ssub.s32 %s17, %s43
      %s139 = ssub.s32 %s19, %s35
      %s140 = sor.u32 %s138, %s139
      %s141 = ssub.s32 %s20, %s31
      %s142 = sor.u32 %s140, %s141
      %p143 = scmp.eq.s32.totalorder %s142, 0
      %s145 = sadd.s32 %s144, 1
      %s146 = scalar_select %p143, %s144, %s145
      %p149 = pneg %p143
      %p150 = scmp.eq.s32.totalorder %s10, 7
      %p151 = por %p149, %p150
      %p152 = scmp.ne.s32.totalorder %s144, %s147
      %p153 = scmp.eq.s32.totalorder %s10, 0
      %p154 = por %p152, %p153
      %p155 = scmp.ne.s32.totalorder %s144, %s147
      %p156 = scmp.eq.s32.totalorder %s15, 7
      %p157 = por %p155, %p156
      %p158 = scmp.ne.s32.totalorder %s147, %s148
      %p159 = scmp.eq.s32.totalorder %s15, 0
      %p160 = por %p158, %p159
      %p161 = scmp.ne.s32.totalorder %s147, %s148
      %p162 = scmp.eq.s32.totalorder %s16, 7
      %p163 = por %p161, %p162
      %p165 = scmp.ne.s32.totalorder %s148, %s164
      %p166 = scmp.eq.s32.totalorder %s16, 0
      %p167 = por %p165, %p166
      %s168 = ssub.s32 %s17, %s43
      %s169 = ssub.s32 %s19, %s35
      %s170 = sor.u32 %s168, %s169
      %s171 = ssub.s32 %s18, %s39
      %s172 = sor.u32 %s170, %s171
      %p173 = scmp.eq.s32.totalorder %s172, 0
      %s175 = sadd.s32 %s174, 1
      %s176 = scalar_select %p173, %s174, %s175
      %p179 = pneg %p173
      %p180 = scmp.eq.s32.totalorder %s10, 7
      %p181 = por %p179, %p180
      %p182 = scmp.ne.s32.totalorder %s174, %s177
      %p183 = scmp.eq.s32.totalorder %s10, 0
      %p184 = por %p182, %p183
      %p185 = scmp.ne.s32.totalorder %s174, %s177
      %p186 = scmp.eq.s32.totalorder %s15, 7
      %p187 = por %p185, %p186
      %p188 = scmp.ne.s32.totalorder %s177, %s178
      %p189 = scmp.eq.s32.totalorder %s15, 0
      %p190 = por %p188, %p189
      %p191 = scmp.ne.s32.totalorder %s177, %s178
      %p192 = scmp.eq.s32.totalorder %s16, 7
      %p193 = por %p191, %p192
      %p195 = scmp.ne.s32.totalorder %s178, %s194
      %p196 = scmp.eq.s32.totalorder %s16, 0
      %p197 = por %p195, %p196
      %p198 = scmp.le.s32.totalorder 1, %s10
      %p199 = scmp.lt.s32.totalorder %s10, 9
      %p200 = pnand %p198, %p199
      %p201 = pneg %p200
      // Predicated region
      $region9: #{decoder_forward.18} parent=5 // pred_check
        _
      $region10: #{decoder_forward.18} parent=5 // pred_check_branch
        %203 = sbr.rel (%p200) target = $region12
      $region11: #{decoder_forward.18} parent=5 // pred_region
        %s204 = ssub.s32 %s10, 1
      $region12: #{decoder_forward.18} parent=5 // pred_fallthru
        _
      %p205 = scmp.lt.s32.totalorder %s10, 8
      // Predicated region
      $region13: #{decoder_forward.18} parent=5 // pred_check
        %p206 = pneg %p205
      $region14: #{decoder_forward.18} parent=5 // pred_check_branch
        %208 = sbr.rel (%p206) target = $region16
      $region15: #{decoder_forward.18} parent=5 // pred_region
        // Predicated region
        $region17: #{decoder_forward.18} parent=15 // pred_check
          %p209 = pneg %p60
        $region18: #{decoder_forward.18} parent=15 // pred_check_branch
          %211 = sbr.rel (%p209) target = $region20
        $region19: #{decoder_forward.18} parent=15 // pred_region
          %s212 = sand.u32 %s50, 1
          %s213 = sand.u32 %s50, 1
          %s214 = smul.addr %s213, 8
          %s215 = scalar_lea.vmem [#allocation5], %s214
          %s216 = smul.u32 8, %s19
          %s217 = smul.addr %s216, 12
          %s218 = sadd.s32 %s18, %s217
          %s219 = smul.addr %s17, 96
          %s220 = sadd.s32 %s218, %s219
          %s221 = scalar_lea.vmem %s0, %s220
          // Predicated region
          $region21: #{decoder_forward.18} parent=19 // pred_check
            _
          $region22: #{decoder_forward.18} parent=19 // pred_check_branch
            %223 = sbr.rel (0) target = $region24
          $region23: #{decoder_forward.18} parent=19 // pred_region
            // Predicated region
            $region25: #{decoder_forward.18} parent=23 // pred_check
              _
            $region26: #{decoder_forward.18} parent=23 // pred_check_branch
              %225 = sbr.rel target = $region28
            $region27: #{decoder_forward.18} parent=23 // pred_region
              // Predicated region
              $region40: #{decoder_forward.18} parent=27 // pred_check
                _
              $region41: #{decoder_forward.18} parent=27 // pred_check_branch
                %255 = sbr.rel (0) target = $region43
              $region42: #{decoder_forward.18} parent=27 // pred_region
                loop: start=0, step=1, limit=1
                $region44: #{decoder_forward.18} parent=42 // loop_pre_header
                  _
                $region45: #{decoder_forward.18} parent=42 // loop_header
                  %s257 = sphi 0, %s261
                  %p258 = scmp.ge.s32.totalorder %s257, 1
                  %s262 = sphi %s221, %s221
                  %s263 = sphi %s215, %s215
                $region46: #{decoder_forward.18} parent=42 // loop_header_branch
                  %260 = sbr.rel (%p258) target = $region50
                $region47: #{decoder_forward.18} parent=42 // loop_body
                  _
                $region48: #{decoder_forward.18} parent=42 // loop_footer
                  %s261 = sadd.s32 1, %s257
                $region49: #{decoder_forward.18} parent=42 // loop_footer_branch
                  %256 = sbr.rel target = $region45
                $region50: #{decoder_forward.18} parent=42 // loop_exit
                  _
                %s265 = ssub.s32 2, 1
                loop: start=0, step=1, limit=1
                $region51: #{decoder_forward.18} parent=42 // loop_pre_header
                  _
                $region52: #{decoder_forward.18} parent=42 // loop_header
                  %s267 = sphi 0, %s271
                  %p268 = scmp.ge.s32.totalorder %s267, 1
                  %s272 = sphi %s221, %s221
                  %s273 = sphi %s215, %s215
                $region53: #{decoder_forward.18} parent=42 // loop_header_branch
                  %270 = sbr.rel (%p268) target = $region57
                $region54: #{decoder_forward.18} parent=42 // loop_body
                  %v274 = vld [vmem:[%s272] sm:%s265]
                  %275 = vst [vmem:[%s273] sm:%s265] %v274
                  %v276 = vld [vmem:[%s272 + $0xc] sm:%s265]
                  %277 = vst [vmem:[%s273 + $0x1] sm:%s265] %v276
                  %v278 = vld [vmem:[%s272 + $0x18] sm:%s265]
                  %279 = vst [vmem:[%s273 + $0x2] sm:%s265] %v278
                  %v280 = vld [vmem:[%s272 + $0x24] sm:%s265]
                  %281 = vst [vmem:[%s273 + $0x3] sm:%s265] %v280
                  %v282 = vld [vmem:[%s272 + $0x30] sm:%s265]
                  %283 = vst [vmem:[%s273 + $0x4] sm:%s265] %v282
                  %v284 = vld [vmem:[%s272 + $0x3c] sm:%s265]
                  %285 = vst [vmem:[%s273 + $0x5] sm:%s265] %v284
                  %v286 = vld [vmem:[%s272 + $0x48] sm:%s265]
                  %287 = vst [vmem:[%s273 + $0x6] sm:%s265] %v286
                  %v288 = vld [vmem:[%s272 + $0x54] sm:%s265]
                  %289 = vst [vmem:[%s273 + $0x7] sm:%s265] %v288
                $region55: #{decoder_forward.18} parent=42 // loop_footer
                  %s271 = sadd.s32 1, %s267
                $region56: #{decoder_forward.18} parent=42 // loop_footer_branch
                  %266 = sbr.rel target = $region52
                $region57: #{decoder_forward.18} parent=42 // loop_exit
                  _
              $region43: #{decoder_forward.18} parent=27 // pred_fallthru
                _
            $region28: #{decoder_forward.18} parent=23 // pred_fallthru
              _
            // Predicated region
            $region29: #{decoder_forward.18} parent=23 // pred_check
              _
            $region30: #{decoder_forward.18} parent=23 // pred_check_branch
              %227 = sbr.rel (0) target = $region32
            $region31: #{decoder_forward.18} parent=23 // pred_region
              %s229 = ssub.s32 2, 1
              loop: start=0, step=1, limit=1
              $region33: #{decoder_forward.18} parent=31 // loop_pre_header
                _
              $region34: #{decoder_forward.18} parent=31 // loop_header
                %s231 = sphi 0, %s235
                %p232 = scmp.ge.s32.totalorder %s231, 1
                %s236 = sphi %s221, %s221
                %s237 = sphi %s215, %s215
              $region35: #{decoder_forward.18} parent=31 // loop_header_branch
                %234 = sbr.rel (%p232) target = $region39
              $region36: #{decoder_forward.18} parent=31 // loop_body
                %v238 = vld [vmem:[%s236] sm:%s229]
                %239 = vst [vmem:[%s237] sm:%s229] %v238
                %v240 = vld [vmem:[%s236 + $0xc] sm:%s229]
                %241 = vst [vmem:[%s237 + $0x1] sm:%s229] %v240
                %v242 = vld [vmem:[%s236 + $0x18] sm:%s229]
                %243 = vst [vmem:[%s237 + $0x2] sm:%s229] %v242
                %v244 = vld [vmem:[%s236 + $0x24] sm:%s229]
                %245 = vst [vmem:[%s237 + $0x3] sm:%s229] %v244
                %v246 = vld [vmem:[%s236 + $0x30] sm:%s229]
                %247 = vst [vmem:[%s237 + $0x4] sm:%s229] %v246
                %v248 = vld [vmem:[%s236 + $0x3c] sm:%s229]
                %249 = vst [vmem:[%s237 + $0x5] sm:%s229] %v248
                %v250 = vld [vmem:[%s236 + $0x48] sm:%s229]
                %251 = vst [vmem:[%s237 + $0x6] sm:%s229] %v250
                %v252 = vld [vmem:[%s236 + $0x54] sm:%s229]
                %253 = vst [vmem:[%s237 + $0x7] sm:%s229] %v252
              $region37: #{decoder_forward.18} parent=31 // loop_footer
                %s235 = sadd.s32 1, %s231
              $region38: #{decoder_forward.18} parent=31 // loop_footer_branch
                %230 = sbr.rel target = $region34
              $region39: #{decoder_forward.18} parent=31 // loop_exit
                _
            $region32: #{decoder_forward.18} parent=23 // pred_fallthru
              _
          $region24: #{decoder_forward.18} parent=19 // pred_fallthru
            _
          %290 = vnop
        $region20: #{decoder_forward.18} parent=15 // pred_fallthru
          _
        // Predicated region
        $region58: #{decoder_forward.18} parent=15 // pred_check
          %p291 = pneg %p92
        $region59: #{decoder_forward.18} parent=15 // pred_check_branch
          %293 = sbr.rel (%p291) target = $region61
        $region60: #{decoder_forward.18} parent=15 // pred_region
          %s294 = sand.u32 %s82, 1
          %s295 = sand.u32 %s82, 1
          %s296 = smul.addr %s295, 8
          %s297 = scalar_lea.vmem [#allocation6], %s296
          %s298 = sadd.s32 %s18, 4
          %s299 = smul.u32 8, %s20
          %s300 = smul.addr %s299, 12
          %s301 = sadd.s32 %s298, %s300
          %s302 = smul.addr %s17, 96
          %s303 = sadd.s32 %s301, %s302
          %s304 = scalar_lea.vmem %s1, %s303
          // Predicated region
          $region62: #{decoder_forward.18} parent=60 // pred_check
            _
          $region63: #{decoder_forward.18} parent=60 // pred_check_branch
            %306 = sbr.rel (0) target = $region65
          $region64: #{decoder_forward.18} parent=60 // pred_region
            // Predicated region
            $region66: #{decoder_forward.18} parent=64 // pred_check
              _
            $region67: #{decoder_forward.18} parent=64 // pred_check_branch
              %308 = sbr.rel target = $region69
            $region68: #{decoder_forward.18} parent=64 // pred_region
              // Predicated region
              $region81: #{decoder_forward.18} parent=68 // pred_check
                _
              $region82: #{decoder_forward.18} parent=68 // pred_check_branch
                %338 = sbr.rel (0) target = $region84
              $region83: #{decoder_forward.18} parent=68 // pred_region
                loop: start=0, step=1, limit=1
                $region85: #{decoder_forward.18} parent=83 // loop_pre_header
                  _
                $region86: #{decoder_forward.18} parent=83 // loop_header
                  %s340 = sphi 0, %s344
                  %p341 = scmp.ge.s32.totalorder %s340, 1
                  %s345 = sphi %s304, %s304
                  %s346 = sphi %s297, %s297
                $region87: #{decoder_forward.18} parent=83 // loop_header_branch
                  %343 = sbr.rel (%p341) target = $region91
                $region88: #{decoder_forward.18} parent=83 // loop_body
                  _
                $region89: #{decoder_forward.18} parent=83 // loop_footer
                  %s344 = sadd.s32 1, %s340
                $region90: #{decoder_forward.18} parent=83 // loop_footer_branch
                  %339 = sbr.rel target = $region86
                $region91: #{decoder_forward.18} parent=83 // loop_exit
                  _
                %s348 = ssub.s32 2, 1
                loop: start=0, step=1, limit=1
                $region92: #{decoder_forward.18} parent=83 // loop_pre_header
                  _
                $region93: #{decoder_forward.18} parent=83 // loop_header
                  %s350 = sphi 0, %s354
                  %p351 = scmp.ge.s32.totalorder %s350, 1
                  %s355 = sphi %s304, %s304
                  %s356 = sphi %s297, %s297
                $region94: #{decoder_forward.18} parent=83 // loop_header_branch
                  %353 = sbr.rel (%p351) target = $region98
                $region95: #{decoder_forward.18} parent=83 // loop_body
                  %v357 = vld [vmem:[%s355] sm:%s348]
                  %358 = vst [vmem:[%s356] sm:%s348] %v357
                  %v359 = vld [vmem:[%s355 + $0xc] sm:%s348]
                  %360 = vst [vmem:[%s356 + $0x1] sm:%s348] %v359
                  %v361 = vld [vmem:[%s355 + $0x18] sm:%s348]
                  %362 = vst [vmem:[%s356 + $0x2] sm:%s348] %v361
                  %v363 = vld [vmem:[%s355 + $0x24] sm:%s348]
                  %364 = vst [vmem:[%s356 + $0x3] sm:%s348] %v363
                  %v365 = vld [vmem:[%s355 + $0x30] sm:%s348]
                  %366 = vst [vmem:[%s356 + $0x4] sm:%s348] %v365
                  %v367 = vld [vmem:[%s355 + $0x3c] sm:%s348]
                  %368 = vst [vmem:[%s356 + $0x5] sm:%s348] %v367
                  %v369 = vld [vmem:[%s355 + $0x48] sm:%s348]
                  %370 = vst [vmem:[%s356 + $0x6] sm:%s348] %v369
                  %v371 = vld [vmem:[%s355 + $0x54] sm:%s348]
                  %372 = vst [vmem:[%s356 + $0x7] sm:%s348] %v371
                $region96: #{decoder_forward.18} parent=83 // loop_footer
                  %s354 = sadd.s32 1, %s350
                $region97: #{decoder_forward.18} parent=83 // loop_footer_branch
                  %349 = sbr.rel target = $region93
                $region98: #{decoder_forward.18} parent=83 // loop_exit
                  _
              $region84: #{decoder_forward.18} parent=68 // pred_fallthru
                _
            $region69: #{decoder_forward.18} parent=64 // pred_fallthru
              _
            // Predicated region
            $region70: #{decoder_forward.18} parent=64 // pred_check
              _
            $region71: #{decoder_forward.18} parent=64 // pred_check_branch
              %310 = sbr.rel (0) target = $region73
            $region72: #{decoder_forward.18} parent=64 // pred_region
              %s312 = ssub.s32 2, 1
              loop: start=0, step=1, limit=1
              $region74: #{decoder_forward.18} parent=72 // loop_pre_header
                _
              $region75: #{decoder_forward.18} parent=72 // loop_header
                %s314 = sphi 0, %s318
                %p315 = scmp.ge.s32.totalorder %s314, 1
                %s319 = sphi %s304, %s304
                %s320 = sphi %s297, %s297
              $region76: #{decoder_forward.18} parent=72 // loop_header_branch
                %317 = sbr.rel (%p315) target = $region80
              $region77: #{decoder_forward.18} parent=72 // loop_body
                %v321 = vld [vmem:[%s319] sm:%s312]
                %322 = vst [vmem:[%s320] sm:%s312] %v321
                %v323 = vld [vmem:[%s319 + $0xc] sm:%s312]
                %324 = vst [vmem:[%s320 + $0x1] sm:%s312] %v323
                %v325 = vld [vmem:[%s319 + $0x18] sm:%s312]
                %326 = vst [vmem:[%s320 + $0x2] sm:%s312] %v325
                %v327 = vld [vmem:[%s319 + $0x24] sm:%s312]
                %328 = vst [vmem:[%s320 + $0x3] sm:%s312] %v327
                %v329 = vld [vmem:[%s319 + $0x30] sm:%s312]
                %330 = vst [vmem:[%s320 + $0x4] sm:%s312] %v329
                %v331 = vld [vmem:[%s319 + $0x3c] sm:%s312]
                %332 = vst [vmem:[%s320 + $0x5] sm:%s312] %v331
                %v333 = vld [vmem:[%s319 + $0x48] sm:%s312]
                %334 = vst [vmem:[%s320 + $0x6] sm:%s312] %v333
                %v335 = vld [vmem:[%s319 + $0x54] sm:%s312]
                %336 = vst [vmem:[%s320 + $0x7] sm:%s312] %v335
              $region78: #{decoder_forward.18} parent=72 // loop_footer
                %s318 = sadd.s32 1, %s314
              $region79: #{decoder_forward.18} parent=72 // loop_footer_branch
                %313 = sbr.rel target = $region75
              $region80: #{decoder_forward.18} parent=72 // loop_exit
                _
            $region73: #{decoder_forward.18} parent=64 // pred_fallthru
              _
          $region65: #{decoder_forward.18} parent=60 // pred_fallthru
            _
          %373 = vnop
        $region61: #{decoder_forward.18} parent=15 // pred_fallthru
          _
        // Predicated region
        $region99: #{decoder_forward.18} parent=15 // pred_check
          %p374 = pneg %p124
        $region100: #{decoder_forward.18} parent=15 // pred_check_branch
          %376 = sbr.rel (%p374) target = $region102
        $region101: #{decoder_forward.18} parent=15 // pred_region
          %s377 = sand.u32 %s114, 1
          %s378 = sand.u32 %s114, 1
          %s379 = smul.addr %s378, 8
          %s380 = scalar_lea.vmem [#allocation7], %s379
          %s381 = sadd.s32 %s18, 8
          %s382 = smul.u32 8, %s20
          %s383 = smul.addr %s382, 12
          %s384 = sadd.s32 %s381, %s383
          %s385 = smul.addr %s17, 96
          %s386 = sadd.s32 %s384, %s385
          %s387 = scalar_lea.vmem %s2, %s386
          // Predicated region
          $region103: #{decoder_forward.18} parent=101 // pred_check
            _
          $region104: #{decoder_forward.18} parent=101 // pred_check_branch
            %389 = sbr.rel (0) target = $region106
          $region105: #{decoder_forward.18} parent=101 // pred_region
            // Predicated region
            $region107: #{decoder_forward.18} parent=105 // pred_check
              _
            $region108: #{decoder_forward.18} parent=105 // pred_check_branch
              %391 = sbr.rel target = $region110
            $region109: #{decoder_forward.18} parent=105 // pred_region
              // Predicated region
              $region122: #{decoder_forward.18} parent=109 // pred_check
                _
              $region123: #{decoder_forward.18} parent=109 // pred_check_branch
                %421 = sbr.rel (0) target = $region125
              $region124: #{decoder_forward.18} parent=109 // pred_region
                loop: start=0, step=1, limit=1
                $region126: #{decoder_forward.18} parent=124 // loop_pre_header
                  _
                $region127: #{decoder_forward.18} parent=124 // loop_header
                  %s423 = sphi 0, %s427
                  %p424 = scmp.ge.s32.totalorder %s423, 1
                  %s428 = sphi %s387, %s387
                  %s429 = sphi %s380, %s380
                $region128: #{decoder_forward.18} parent=124 // loop_header_branch
                  %426 = sbr.rel (%p424) target = $region132
                $region129: #{decoder_forward.18} parent=124 // loop_body
                  _
                $region130: #{decoder_forward.18} parent=124 // loop_footer
                  %s427 = sadd.s32 1, %s423
                $region131: #{decoder_forward.18} parent=124 // loop_footer_branch
                  %422 = sbr.rel target = $region127
                $region132: #{decoder_forward.18} parent=124 // loop_exit
                  _
                %s431 = ssub.s32 2, 1
                loop: start=0, step=1, limit=1
                $region133: #{decoder_forward.18} parent=124 // loop_pre_header
                  _
                $region134: #{decoder_forward.18} parent=124 // loop_header
                  %s433 = sphi 0, %s437
                  %p434 = scmp.ge.s32.totalorder %s433, 1
                  %s438 = sphi %s387, %s387
                  %s439 = sphi %s380, %s380
                $region135: #{decoder_forward.18} parent=124 // loop_header_branch
                  %436 = sbr.rel (%p434) target = $region139
                $region136: #{decoder_forward.18} parent=124 // loop_body
                  %v440 = vld [vmem:[%s438] sm:%s431]
                  %441 = vst [vmem:[%s439] sm:%s431] %v440
                  %v442 = vld [vmem:[%s438 + $0xc] sm:%s431]
                  %443 = vst [vmem:[%s439 + $0x1] sm:%s431] %v442
                  %v444 = vld [vmem:[%s438 + $0x18] sm:%s431]
                  %445 = vst [vmem:[%s439 + $0x2] sm:%s431] %v444
                  %v446 = vld [vmem:[%s438 + $0x24] sm:%s431]
                  %447 = vst [vmem:[%s439 + $0x3] sm:%s431] %v446
                  %v448 = vld [vmem:[%s438 + $0x30] sm:%s431]
                  %449 = vst [vmem:[%s439 + $0x4] sm:%s431] %v448
                  %v450 = vld [vmem:[%s438 + $0x3c] sm:%s431]
                  %451 = vst [vmem:[%s439 + $0x5] sm:%s431] %v450
                  %v452 = vld [vmem:[%s438 + $0x48] sm:%s431]
                  %453 = vst [vmem:[%s439 + $0x6] sm:%s431] %v452
                  %v454 = vld [vmem:[%s438 + $0x54] sm:%s431]
                  %455 = vst [vmem:[%s439 + $0x7] sm:%s431] %v454
                $region137: #{decoder_forward.18} parent=124 // loop_footer
                  %s437 = sadd.s32 1, %s433
                $region138: #{decoder_forward.18} parent=124 // loop_footer_branch
                  %432 = sbr.rel target = $region134
                $region139: #{decoder_forward.18} parent=124 // loop_exit
                  _
              $region125: #{decoder_forward.18} parent=109 // pred_fallthru
                _
            $region110: #{decoder_forward.18} parent=105 // pred_fallthru
              _
            // Predicated region
            $region111: #{decoder_forward.18} parent=105 // pred_check
              _
            $region112: #{decoder_forward.18} parent=105 // pred_check_branch
              %393 = sbr.rel (0) target = $region114
            $region113: #{decoder_forward.18} parent=105 // pred_region
              %s395 = ssub.s32 2, 1
              loop: start=0, step=1, limit=1
              $region115: #{decoder_forward.18} parent=113 // loop_pre_header
                _
              $region116: #{decoder_forward.18} parent=113 // loop_header
                %s397 = sphi 0, %s401
                %p398 = scmp.ge.s32.totalorder %s397, 1
                %s402 = sphi %s387, %s387
                %s403 = sphi %s380, %s380
              $region117: #{decoder_forward.18} parent=113 // loop_header_branch
                %400 = sbr.rel (%p398) target = $region121
              $region118: #{decoder_forward.18} parent=113 // loop_body
                %v404 = vld [vmem:[%s402] sm:%s395]
                %405 = vst [vmem:[%s403] sm:%s395] %v404
                %v406 = vld [vmem:[%s402 + $0xc] sm:%s395]
                %407 = vst [vmem:[%s403 + $0x1] sm:%s395] %v406
                %v408 = vld [vmem:[%s402 + $0x18] sm:%s395]
                %409 = vst [vmem:[%s403 + $0x2] sm:%s395] %v408
                %v410 = vld [vmem:[%s402 + $0x24] sm:%s395]
                %411 = vst [vmem:[%s403 + $0x3] sm:%s395] %v410
                %v412 = vld [vmem:[%s402 + $0x30] sm:%s395]
                %413 = vst [vmem:[%s403 + $0x4] sm:%s395] %v412
                %v414 = vld [vmem:[%s402 + $0x3c] sm:%s395]
                %415 = vst [vmem:[%s403 + $0x5] sm:%s395] %v414
                %v416 = vld [vmem:[%s402 + $0x48] sm:%s395]
                %417 = vst [vmem:[%s403 + $0x6] sm:%s395] %v416
                %v418 = vld [vmem:[%s402 + $0x54] sm:%s395]
                %419 = vst [vmem:[%s403 + $0x7] sm:%s395] %v418
              $region119: #{decoder_forward.18} parent=113 // loop_footer
                %s401 = sadd.s32 1, %s397
              $region120: #{decoder_forward.18} parent=113 // loop_footer_branch
                %396 = sbr.rel target = $region116
              $region121: #{decoder_forward.18} parent=113 // loop_exit
                _
            $region114: #{decoder_forward.18} parent=105 // pred_fallthru
              _
          $region106: #{decoder_forward.18} parent=101 // pred_fallthru
            _
          %456 = vnop
        $region102: #{decoder_forward.18} parent=15 // pred_fallthru
          _
        // Predicated region
        $region140: #{decoder_forward.18} parent=15 // pred_check
          %p457 = pneg %p154
        $region141: #{decoder_forward.18} parent=15 // pred_check_branch
          %459 = sbr.rel (%p457) target = $region143
        $region142: #{decoder_forward.18} parent=15 // pred_region
          %p460 = scmp.lt.s32.totalorder %s17, 1
          %s461 = scalar_select %p460, %s17, 1
          %p462 = scmp.lt.s32.totalorder %s19, 0
          %s463 = scalar_select %p462, %s19, 0
          %p464 = scmp.lt.s32.totalorder %s20, 0
          %s465 = scalar_select %p464, %s20, 0
          %s466 = sadd.s32 %s465, %s463
          %s467 = sadd.s32 %s466, %s461
          %s468 = smul.addr %s467, 8
          %s469 = scalar_lea.vmem %s3, %s468
        $region143: #{decoder_forward.18} parent=15 // pred_fallthru
          _
      $region16: #{decoder_forward.18} parent=5 // pred_fallthru
        _
      %p470 = scmp.le.s32.totalorder 1, %s10
      %p471 = scmp.lt.s32.totalorder %s10, 9
      %p472 = pnand %p470, %p471
      %p473 = pneg %p472
      // Predicated region
      $region144: #{decoder_forward.18} parent=5 // pred_check
        _
      $region145: #{decoder_forward.18} parent=5 // pred_check_branch
        %475 = sbr.rel (%p472) target = $region147
      $region146: #{decoder_forward.18} parent=5 // pred_region
        %s476 = ssub.s32 %s10, 1
        %s477 = sand.u32 %s53, 1
        %s478 = sand.u32 %s53, 1
        %s479 = smul.addr %s478, 8
        %s480 = scalar_lea.vmem [#allocation5], %s479
        // Predicated region
        $region148: #{decoder_forward.18} parent=146 // pred_check
          %p481 = pneg %p66
        $region149: #{decoder_forward.18} parent=146 // pred_check_branch
          %483 = sbr.rel (%p481) target = $region151
        $region150: #{decoder_forward.18} parent=146 // pred_region
          _
        $region151: #{decoder_forward.18} parent=146 // pred_fallthru
          _
        %s484 = sand.u32 %s85, 1
        %s485 = sand.u32 %s85, 1
        %s486 = smul.addr %s485, 8
        %s487 = scalar_lea.vmem [#allocation6], %s486
        // Predicated region
        $region152: #{decoder_forward.18} parent=146 // pred_check
          %p488 = pneg %p98
        $region153: #{decoder_forward.18} parent=146 // pred_check_branch
          %490 = sbr.rel (%p488) target = $region155
        $region154: #{decoder_forward.18} parent=146 // pred_region
          _
        $region155: #{decoder_forward.18} parent=146 // pred_fallthru
          _
        %s491 = sand.u32 %s117, 1
        %s492 = sand.u32 %s117, 1
        %s493 = smul.addr %s492, 8
        %s494 = scalar_lea.vmem [#allocation7], %s493
        // Predicated region
        $region156: #{decoder_forward.18} parent=146 // pred_check
          %p495 = pneg %p130
        $region157: #{decoder_forward.18} parent=146 // pred_check_branch
          %497 = sbr.rel (%p495) target = $region159
        $region158: #{decoder_forward.18} parent=146 // pred_region
          _
        $region159: #{decoder_forward.18} parent=146 // pred_fallthru
          _
        %s498 = sand.u32 %s53, 1
        %s499 = sand.u32 %s53, 1
        %s500 = smul.addr %s499, 8
        %s501 = scalar_lea.vmem [#allocation5], %s500
        %p502 = pneg %p66
        %p503 = pneg %p63
        %s504 = sand.u32 %s85, 1
        %s505 = sand.u32 %s85, 1
        %s506 = smul.addr %s505, 8
        %s507 = scalar_lea.vmem [#allocation6], %s506
        %p508 = pneg %p98
        %p509 = pneg %p95
        %s510 = sand.u32 %s117, 1
        %s511 = sand.u32 %s117, 1
        %s512 = smul.addr %s511, 8
        %s513 = scalar_lea.vmem [#allocation7], %s512
        %p514 = pneg %p130
        %p515 = pneg %p127
        %p516 = scmp.lt.s32.totalorder %s21, 1
        %s517 = scalar_select %p516, %s21, 1
        %p518 = scmp.lt.s32.totalorder %s23, 0
        %s519 = scalar_select %p518, %s23, 0
        %p520 = scmp.lt.s32.totalorder %s24, 0
        %s521 = scalar_select %p520, %s24, 0
        %s522 = sadd.s32 %s521, %s519
        %s523 = sadd.s32 %s522, %s517
        %s524 = smul.addr %s523, 8
        %s525 = scalar_lea.vmem %s3, %s524
        %p526 = pneg %p160
        %p527 = pneg %p157
        %p528 = pneg %p190
        %p529 = pneg %p187
        %s530 = sand.u32 %s177, 1
        %s531 = sand.u32 %s177, 1
        %s532 = smul.addr %s531, 8
        %s533 = scalar_lea.vmem [#allocation8], %s532
        %s534 = smul.u32 8, %s23
        %s535 = sadd.s32 %s22, 4
        %s536 = smul.u32 8, %s24
        %s537 = sadd.s32 %s22, 8
        %s538 = smul.u32 8, %s24
        %p539 = scmp.lt.s32.totalorder %s21, 1
        %s540 = scalar_select %p539, %s21, 1
        %p541 = scmp.lt.s32.totalorder %s23, 0
        %s542 = scalar_select %p541, %s23, 0
        %p543 = scmp.lt.s32.totalorder %s24, 0
        %s544 = scalar_select %p543, %s24, 0
        %s545 = sadd.s32 %s544, %s542
        %s546 = sadd.s32 %s545, %s540
        %s547 = smul.addr %s546, 8
        %s548 = scalar_lea.vmem %s3, %s547
        %s549 = smul.u32 8, %s23
        %p550 = scmp.eq.s32.totalorder %s24, 0
        // Predicated region
        $region160: #{decoder_forward.18} parent=146 // pred_check
          %p551 = pneg %p550
        $region161: #{decoder_forward.18} parent=146 // pred_check_branch
          %553 = sbr.rel (%p551) target = $region163
        $region162: #{decoder_forward.18} parent=146 // pred_region
          %vm554 = vcmask 7168
          %555 = vst.msk [vmem:[#allocation2] sm:$0xff] %vm554, -inf
          %556 = vst.msk [vmem:[#allocation3] sm:$0xff] %vm554, 0.0
          %vm557 = vcmask 64512
          %558 = vst.msk [vmem:[#allocation4] sm:$0xff] %vm557, 0.0
        $region163: #{decoder_forward.18} parent=146 // pred_fallthru
          _
        %v559 = vld [vmem:[%s480] sm:$0x1]
        %v560 = vld [vmem:[%s480 + $0x1] sm:$0x1]
        %v561 = vld [vmem:[%s480 + $0x2] sm:$0x1]
        %v562 = vld [vmem:[%s480 + $0x3] sm:$0x1]
        %v563 = vld [vmem:[%s480 + $0x4] sm:$0x1]
        %v564 = vld [vmem:[%s480 + $0x5] sm:$0x1]
        %v565 = vld [vmem:[%s480 + $0x6] sm:$0x1]
        %v566 = vld [vmem:[%s480 + $0x7] sm:$0x1]
        %v567 = vld [vmem:[%s487] sm:$0x1]
        %v568 = vld [vmem:[%s487 + $0x1] sm:$0x1]
        %v569 = vld [vmem:[%s487 + $0x2] sm:$0x1]
        %v570 = vld [vmem:[%s487 + $0x3] sm:$0x1]
        %v571 = vld [vmem:[%s487 + $0x4] sm:$0x1]
        %v572 = vld [vmem:[%s487 + $0x5] sm:$0x1]
        %v573 = vld [vmem:[%s487 + $0x6] sm:$0x1]
        %v574 = vld [vmem:[%s487 + $0x7] sm:$0x1]
        %v575 = vld [vmem:[%s494] sm:$0x1]
        %v576 = vld [vmem:[%s494 + $0x1] sm:$0x1]
        %v577 = vld [vmem:[%s494 + $0x2] sm:$0x1]
        %v578 = vld [vmem:[%s494 + $0x3] sm:$0x1]
        %v579 = vld [vmem:[%s494 + $0x4] sm:$0x1]
        %v580 = vld [vmem:[%s494 + $0x5] sm:$0x1]
        %v581 = vld [vmem:[%s494 + $0x6] sm:$0x1]
        %v582 = vld [vmem:[%s494 + $0x7] sm:$0x1]
        %v583 = vld [vmem:[%s548] sm:$0xff]
        %592 = vst [vmem:[#allocation1] ss:$9 sm:$0xff] %v559
        %s593 = scalar_lea.vmem [#allocation1], 1
        %594 = vst [vmem:[%s593] ss:$9 sm:$0xff] %v560
        %s595 = scalar_lea.vmem [#allocation1], 2
        %596 = vst [vmem:[%s595] ss:$9 sm:$0xff] %v561
        %s597 = scalar_lea.vmem [#allocation1], 3
        %598 = vst [vmem:[%s597] ss:$9 sm:$0xff] %v562
        %s599 = scalar_lea.vmem [#allocation1], 4
        %600 = vst [vmem:[%s599] ss:$9 sm:$0xff] %v563
        %s601 = scalar_lea.vmem [#allocation1], 5
        %602 = vst [vmem:[%s601] ss:$9 sm:$0xff] %v564
        %s603 = scalar_lea.vmem [#allocation1], 6
        %604 = vst [vmem:[%s603] ss:$9 sm:$0xff] %v565
        %s605 = scalar_lea.vmem [#allocation1], 7
        %606 = vst [vmem:[%s605] ss:$9 sm:$0xff] %v566
        %v607 = vld [vmem:[#allocation1] sm:$0xff]
        %616 = vst [vmem:[#allocation1] ss:$9 sm:$0xff] %v567
        %s617 = scalar_lea.vmem [#allocation1], 1
        %618 = vst [vmem:[%s617] ss:$9 sm:$0xff] %v568
        %s619 = scalar_lea.vmem [#allocation1], 2
        %620 = vst [vmem:[%s619] ss:$9 sm:$0xff] %v569
        %s621 = scalar_lea.vmem [#allocation1], 3
        %622 = vst [vmem:[%s621] ss:$9 sm:$0xff] %v570
        %s623 = scalar_lea.vmem [#allocation1], 4
        %624 = vst [vmem:[%s623] ss:$9 sm:$0xff] %v571
        %s625 = scalar_lea.vmem [#allocation1], 5
        %626 = vst [vmem:[%s625] ss:$9 sm:$0xff] %v572
        %s627 = scalar_lea.vmem [#allocation1], 6
        %628 = vst [vmem:[%s627] ss:$9 sm:$0xff] %v573
        %s629 = scalar_lea.vmem [#allocation1], 7
        %630 = vst [vmem:[%s629] ss:$9 sm:$0xff] %v574
        %v631 = vld [vmem:[#allocation1] sm:$0xff]
        %vm632 = vcmask 64512
        %v633 = vsel %vm632, %v607, 0
        %v635 = vsel %vm632, %v631, 0
        %637 = vmatpush.xpose.msra.mxu0 0.0
        %638 = vmatpush.xpose.msra.mxu0 0.0
        %639 = vmatpush.xpose.msra.mxu0 0.0
        %640 = vmatpush.xpose.msra.mxu0 0.0
        %641 = vmatpush.xpose.msra.mxu0 0.0
        %642 = vmatpush.xpose.msra.mxu0 0.0
        %643 = vmatpush.xpose.msra.mxu0 0.0
        %644 = vmatpush.xpose.msra.mxu0 0.0
        %645 = vmatpush.xpose.msra.mxu0 0.0
        %646 = vmatpush.xpose.msra.mxu0 0.0
        %647 = vmatpush.xpose.msra.mxu0 0.0
        %648 = vmatpush.xpose.msra.mxu0 0.0
        %649 = vmatpush.xpose.msra.mxu0 0.0
        %650 = vmatpush.xpose.msra.mxu0 0.0
        %651 = vmatpush.xpose.msra.mxu0 0.0
        %652 = vmatpush.xpose.msra.mxu0 %v635
        %653 = vmatmul.f32.gmra.mxu0 %v633
        %v654 = vpop.f32.mrf.mxu0
        %v655 = vadd.f32 0.0, %v654
        %656 = vdwg.mxu0
        %vm657 = vcmp.eq.f32.partialorder %v583, 0.0
        %v658 = vsel %vm657, -1e+20, %v655
        %v659 = vmul.f32 %v658, 0.17677669
        %v660 = vld [vmem:[#allocation2] sm:$0xff]
        %v661 = vsel %vm632, %v659, -inf
        %662 = vmax.xlane.f32.xlu0 %v661
        %v663 = vpop.xlane.xlu0 %662
        %v664 = vmax.f32 %v660, %v663
        %v665 = vsub.f32 %v660, %v664
        %v666 = vmul.f32 %v665, 1.442695
        %v667 = vpow.pop %v666
        %669 = vset.pattern.permute.xlu0 0
        %670 = vperm.xlu0 %669, %v664
        %v671 = vpop.permute.xlu0 %670
        %v673 = vsub.f32 %v659, %v671
        %v674 = vmul.f32 %v673, 1.442695
        %v675 = vpow.pop %v674
        %v676 = vld [vmem:[#allocation3] sm:$0xff]
        %v677 = vmul.f32 %v667, %v676
        %v678 = vsel %vm632, %v675, 0.0
        %679 = vadd.xlane.f32.xlu0 %v678
        %v680 = vpop.xlane.xlu0 %679
        %v681 = vadd.f32 %v677, %v680
        %vm682 = vcmask 7168
        %683 = vst.msk [vmem:[#allocation3] sm:$0xff] %vm682, %v681
        %v684 = vld [vmem:[#allocation4] sm:$0xff]
        %686 = vset.pattern.permute.xlu0 0
        %687 = vperm.xlu0 %686, %v667
        %v688 = vpop.permute.xlu0 %687
        %v690 = vmul.f32 %v688, %v684
        %699 = vst [vmem:[#allocation1] ss:$9 sm:$0xff] %v575
        %s700 = scalar_lea.vmem [#allocation1], 1
        %701 = vst [vmem:[%s700] ss:$9 sm:$0xff] %v576
        %s702 = scalar_lea.vmem [#allocation1], 2
        %703 = vst [vmem:[%s702] ss:$9 sm:$0xff] %v577
        %s704 = scalar_lea.vmem [#allocation1], 3
        %705 = vst [vmem:[%s704] ss:$9 sm:$0xff] %v578
        %s706 = scalar_lea.vmem [#allocation1], 4
        %707 = vst [vmem:[%s706] ss:$9 sm:$0xff] %v579
        %s708 = scalar_lea.vmem [#allocation1], 5
        %709 = vst [vmem:[%s708] ss:$9 sm:$0xff] %v580
        %s710 = scalar_lea.vmem [#allocation1], 6
        %711 = vst [vmem:[%s710] ss:$9 sm:$0xff] %v581
        %s712 = scalar_lea.vmem [#allocation1], 7
        %713 = vst [vmem:[%s712] ss:$9 sm:$0xff] %v582
        %v714 = vld [vmem:[#allocation1] sm:$0xff]
        %v717 = vsel %vm632, %v675, 0
        %719 = vmatpush.msra.mxu0 0.0
        %720 = vmatpush.msra.mxu0 0.0
        %721 = vmatpush.msra.mxu0 0.0
        %722 = vmatpush.msra.mxu0 0.0
        %723 = vmatpush.msra.mxu0 0.0
        %724 = vmatpush.msra.mxu0 0.0
        %725 = vmatpush.msra.mxu0 0.0
        %726 = vmatpush.msra.mxu0 0.0
        %727 = vmatpush.msra.mxu0 0.0
        %728 = vmatpush.msra.mxu0 0.0
        %729 = vmatpush.msra.mxu0 0.0
        %730 = vmatpush.msra.mxu0 0.0
        %731 = vmatpush.msra.mxu0 0.0
        %732 = vmatpush.msra.mxu0 0.0
        %733 = vmatpush.msra.mxu0 0.0
        %734 = vmatpush.msra.mxu0 %v714
        %735 = vmatmul.f32.gmra.mxu0 %v717
        %v736 = vpop.f32.mrf.mxu0
        %v737 = vadd.f32 0.0, %v736
        %738 = vdwg.mxu0
        %v739 = vadd.f32 %v690, %v737
        %740 = vst.msk [vmem:[#allocation4] sm:$0xff] %vm632, %v739
        %741 = vst.msk [vmem:[#allocation2] sm:$0xff] %vm682, %v664
        // Predicated region
        $region164: #{decoder_forward.18} parent=146 // pred_check
          %p742 = pneg %p550
        $region165: #{decoder_forward.18} parent=146 // pred_check_branch
          %744 = sbr.rel (%p742) target = $region167
        $region166: #{decoder_forward.18} parent=146 // pred_region
          %v745 = vld [vmem:[#allocation3] sm:$0xff]
          %v746 = vrcp.pop %v745
          %v747 = vld [vmem:[#allocation4] sm:$0xff]
          %749 = vset.pattern.permute.xlu0 0
          %750 = vperm.xlu0 %749, %v746
          %v751 = vpop.permute.xlu0 %750
          %v753 = vmul.f32 %v747, %v751
          %v755 = vrot.slane %v753, 1
          %v756 = vrot.slane %v753, 2
          %v757 = vrot.slane %v753, 3
          %v758 = vrot.slane %v753, 4
          %v759 = vrot.slane %v753, 5
          %v760 = vrot.slane %v753, 6
          %v761 = vrot.slane %v753, 7
          %vm769 = vcmask 57344
          %770 = vst.msk [vmem:[%s533] sm:$0x1] %vm769, %v753
          %771 = vst.msk [vmem:[%s533 + $0x1] sm:$0x1] %vm769, %v755
          %772 = vst.msk [vmem:[%s533 + $0x2] sm:$0x1] %vm769, %v756
          %773 = vst.msk [vmem:[%s533 + $0x3] sm:$0x1] %vm769, %v757
          %774 = vst.msk [vmem:[%s533 + $0x4] sm:$0x1] %vm769, %v758
          %775 = vst.msk [vmem:[%s533 + $0x5] sm:$0x1] %vm769, %v759
          %776 = vst.msk [vmem:[%s533 + $0x6] sm:$0x1] %vm769, %v760
          %777 = vst.msk [vmem:[%s533 + $0x7] sm:$0x1] %vm769, %v761
        $region167: #{decoder_forward.18} parent=146 // pred_fallthru
          _
        %s778 = sand.u32 %s177, 1
        %s779 = sand.u32 %s177, 1
        %s780 = smul.addr %s779, 8
        %s781 = scalar_lea.vmem [#allocation8], %s780
        // Predicated region
        $region168: #{decoder_forward.18} parent=146 // pred_check
          %p782 = pneg %p187
        $region169: #{decoder_forward.18} parent=146 // pred_check_branch
          %784 = sbr.rel (%p782) target = $region171
        $region170: #{decoder_forward.18} parent=146 // pred_region
          %s785 = smul.u32 8, %s23
          %s786 = smul.addr %s785, 4
          %s787 = sadd.s32 %s22, %s786
          %s788 = smul.addr %s21, 32
          %s789 = sadd.s32 %s787, %s788
          %s790 = scalar_lea.vmem %s4, %s789
          // Predicated region
          $region172: #{decoder_forward.18} parent=170 // pred_check
            _
          $region173: #{decoder_forward.18} parent=170 // pred_check_branch
            %792 = sbr.rel (0) target = $region175
          $region174: #{decoder_forward.18} parent=170 // pred_region
            // Predicated region
            $region176: #{decoder_forward.18} parent=174 // pred_check
              _
            $region177: #{decoder_forward.18} parent=174 // pred_check_branch
              %794 = sbr.rel target = $region179
            $region178: #{decoder_forward.18} parent=174 // pred_region
              // Predicated region
              $region191: #{decoder_forward.18} parent=178 // pred_check
                _
              $region192: #{decoder_forward.18} parent=178 // pred_check_branch
                %824 = sbr.rel (0) target = $region194
              $region193: #{decoder_forward.18} parent=178 // pred_region
                loop: start=0, step=1, limit=1
                $region195: #{decoder_forward.18} parent=193 // loop_pre_header
                  _
                $region196: #{decoder_forward.18} parent=193 // loop_header
                  %s826 = sphi 0, %s830
                  %p827 = scmp.ge.s32.totalorder %s826, 1
                  %s831 = sphi %s781, %s781
                  %s832 = sphi %s790, %s790
                $region197: #{decoder_forward.18} parent=193 // loop_header_branch
                  %829 = sbr.rel (%p827) target = $region201
                $region198: #{decoder_forward.18} parent=193 // loop_body
                  _
                $region199: #{decoder_forward.18} parent=193 // loop_footer
                  %s830 = sadd.s32 1, %s826
                $region200: #{decoder_forward.18} parent=193 // loop_footer_branch
                  %825 = sbr.rel target = $region196
                $region201: #{decoder_forward.18} parent=193 // loop_exit
                  _
                %s834 = ssub.s32 2, 1
                loop: start=0, step=1, limit=1
                $region202: #{decoder_forward.18} parent=193 // loop_pre_header
                  _
                $region203: #{decoder_forward.18} parent=193 // loop_header
                  %s836 = sphi 0, %s840
                  %p837 = scmp.ge.s32.totalorder %s836, 1
                  %s841 = sphi %s781, %s781
                  %s842 = sphi %s790, %s790
                $region204: #{decoder_forward.18} parent=193 // loop_header_branch
                  %839 = sbr.rel (%p837) target = $region208
                $region205: #{decoder_forward.18} parent=193 // loop_body
                  %v843 = vld [vmem:[%s841] sm:%s834]
                  %844 = vst [vmem:[%s842] sm:%s834] %v843
                  %v845 = vld [vmem:[%s841 + $0x1] sm:%s834]
                  %846 = vst [vmem:[%s842 + $0x4] sm:%s834] %v845
                  %v847 = vld [vmem:[%s841 + $0x2] sm:%s834]
                  %848 = vst [vmem:[%s842 + $0x8] sm:%s834] %v847
                  %v849 = vld [vmem:[%s841 + $0x3] sm:%s834]
                  %850 = vst [vmem:[%s842 + $0xc] sm:%s834] %v849
                  %v851 = vld [vmem:[%s841 + $0x4] sm:%s834]
                  %852 = vst [vmem:[%s842 + $0x10] sm:%s834] %v851
                  %v853 = vld [vmem:[%s841 + $0x5] sm:%s834]
                  %854 = vst [vmem:[%s842 + $0x14] sm:%s834] %v853
                  %v855 = vld [vmem:[%s841 + $0x6] sm:%s834]
                  %856 = vst [vmem:[%s842 + $0x18] sm:%s834] %v855
                  %v857 = vld [vmem:[%s841 + $0x7] sm:%s834]
                  %858 = vst [vmem:[%s842 + $0x1c] sm:%s834] %v857
                $region206: #{decoder_forward.18} parent=193 // loop_footer
                  %s840 = sadd.s32 1, %s836
                $region207: #{decoder_forward.18} parent=193 // loop_footer_branch
                  %835 = sbr.rel target = $region203
                $region208: #{decoder_forward.18} parent=193 // loop_exit
                  _
              $region194: #{decoder_forward.18} parent=178 // pred_fallthru
                _
            $region179: #{decoder_forward.18} parent=174 // pred_fallthru
              _
            // Predicated region
            $region180: #{decoder_forward.18} parent=174 // pred_check
              _
            $region181: #{decoder_forward.18} parent=174 // pred_check_branch
              %796 = sbr.rel (0) target = $region183
            $region182: #{decoder_forward.18} parent=174 // pred_region
              %s798 = ssub.s32 2, 1
              loop: start=0, step=1, limit=1
              $region184: #{decoder_forward.18} parent=182 // loop_pre_header
                _
              $region185: #{decoder_forward.18} parent=182 // loop_header
                %s800 = sphi 0, %s804
                %p801 = scmp.ge.s32.totalorder %s800, 1
                %s805 = sphi %s781, %s781
                %s806 = sphi %s790, %s790
              $region186: #{decoder_forward.18} parent=182 // loop_header_branch
                %803 = sbr.rel (%p801) target = $region190
              $region187: #{decoder_forward.18} parent=182 // loop_body
                %v807 = vld [vmem:[%s805] sm:%s798]
                %808 = vst [vmem:[%s806] sm:%s798] %v807
                %v809 = vld [vmem:[%s805 + $0x1] sm:%s798]
                %810 = vst [vmem:[%s806 + $0x4] sm:%s798] %v809
                %v811 = vld [vmem:[%s805 + $0x2] sm:%s798]
                %812 = vst [vmem:[%s806 + $0x8] sm:%s798] %v811
                %v813 = vld [vmem:[%s805 + $0x3] sm:%s798]
                %814 = vst [vmem:[%s806 + $0xc] sm:%s798] %v813
                %v815 = vld [vmem:[%s805 + $0x4] sm:%s798]
                %816 = vst [vmem:[%s806 + $0x10] sm:%s798] %v815
                %v817 = vld [vmem:[%s805 + $0x5] sm:%s798]
                %818 = vst [vmem:[%s806 + $0x14] sm:%s798] %v817
                %v819 = vld [vmem:[%s805 + $0x6] sm:%s798]
                %820 = vst [vmem:[%s806 + $0x18] sm:%s798] %v819
                %v821 = vld [vmem:[%s805 + $0x7] sm:%s798]
                %822 = vst [vmem:[%s806 + $0x1c] sm:%s798] %v821
              $region188: #{decoder_forward.18} parent=182 // loop_footer
                %s804 = sadd.s32 1, %s800
              $region189: #{decoder_forward.18} parent=182 // loop_footer_branch
                %799 = sbr.rel target = $region185
              $region190: #{decoder_forward.18} parent=182 // loop_exit
                _
            $region183: #{decoder_forward.18} parent=174 // pred_fallthru
              _
          $region175: #{decoder_forward.18} parent=170 // pred_fallthru
            _
          %859 = vnop
        $region171: #{decoder_forward.18} parent=146 // pred_fallthru
          _
      $region147: #{decoder_forward.18} parent=5 // pred_fallthru
        _
      %p860 = scmp.le.s32.totalorder 2, %s10
      // Predicated region
      $region209: #{decoder_forward.18} parent=5 // pred_check
        %p861 = pneg %p860
      $region210: #{decoder_forward.18} parent=5 // pred_check_branch
        %863 = sbr.rel (%p861) target = $region212
      $region211: #{decoder_forward.18} parent=5 // pred_region
        %s864 = ssub.s32 %s10, 2
        // Predicated region
        $region213: #{decoder_forward.18} parent=211 // pred_check
          %p865 = pneg %p193
        $region214: #{decoder_forward.18} parent=211 // pred_check_branch
          %867 = sbr.rel (%p865) target = $region216
        $region215: #{decoder_forward.18} parent=211 // pred_region
          %s868 = sand.u32 %s178, 1
          %s869 = sand.u32 %s178, 1
          %s870 = smul.addr %s869, 8
          %s871 = scalar_lea.vmem [#allocation8], %s870
        $region216: #{decoder_forward.18} parent=211 // pred_fallthru
          _
      $region212: #{decoder_forward.18} parent=5 // pred_fallthru
        _
    $region6: #{decoder_forward.18} parent=1 // loop_footer
      %s14 = sadd.s32 1, %s10
    $region7: #{decoder_forward.18} parent=1 // loop_footer_branch
      %9 = sbr.rel target = $region3
    $region8: #{decoder_forward.18} parent=1 // loop_exit
      _

// kernel: decoder_forward.20
$region0: #{decoder_forward.20}
  #allocation0 [shape = 'u32[]', space=smem, size = 0x4, offset = 0x4, fixed_abs, tag = 'smem constant byte address 0x4 - core index']
  #allocation1 [shape = 'u32[72,128]{1,0:T(1,128)}', space=vmem, size = 0x9000, scoped, tag = 'internal scratch']
  #allocation2 [shape = 'f32[16,32]{1,0:T(8,128)}', space=vmem, size = 0x2000, scoped, tag = 'scratch operand']
  %s0 = inlined_call_operand.vmem [shape: f32[16,32], index: 0, kind: input, shape index: {}]
  %s1 = inlined_call_operand.vmem [shape: f32[32,32], index: 1, kind: input, shape index: {}]
  %s2 = inlined_call_operand.vmem [shape: f32[1,32], index: 2, kind: input, shape index: {}]
  %s3 = inlined_call_operand.vmem [shape: f32[16,32], index: 3, kind: output, shape index: {}]
  %s4 = sld [smem:[#allocation0]]
  $region30: #{decoder_forward.20} parent=0
    _
  %s6 = ssub.s32 1, %s4
  %s7 = scalar_select 0, %s6, %s4
  // Predicated region
  $region2: #{decoder_forward.20} parent=0 // pred_check
    _
  $region3: #{decoder_forward.20} parent=0 // pred_check_branch
    %9 = sbr.rel (0) target = $region5
  $region4: #{decoder_forward.20} parent=0 // pred_region
    _
  $region5: #{decoder_forward.20} parent=0 // pred_fallthru
    _
  // Predicated region
  $region6: #{decoder_forward.20} parent=0 // pred_check
    _
  $region7: #{decoder_forward.20} parent=0 // pred_check_branch
    %11 = sbr.rel (0) target = $region9
  $region8: #{decoder_forward.20} parent=0 // pred_region
    _
  $region9: #{decoder_forward.20} parent=0 // pred_fallthru
    _
  // Predicated region
  $region10: #{decoder_forward.20} parent=0 // pred_check
    _
  $region11: #{decoder_forward.20} parent=0 // pred_check_branch
    %13 = sbr.rel (0) target = $region13
  $region12: #{decoder_forward.20} parent=0 // pred_region
    _
  $region13: #{decoder_forward.20} parent=0 // pred_fallthru
    _
  %p14 = scmp.eq.s32.totalorder 0, 0
  // Predicated region
  $region14: #{decoder_forward.20} parent=0 // pred_check
    %p15 = pneg %p14
  $region15: #{decoder_forward.20} parent=0 // pred_check_branch
    %17 = sbr.rel (%p15) target = $region17
  $region16: #{decoder_forward.20} parent=0 // pred_region
    %vm18 = vcmask 261120
    %19 = vst.msk [vmem:[#allocation2] sm:$0xff] %vm18, 0.0
    %20 = vst.msk [vmem:[#allocation2 + $0x8] sm:$0xff] %vm18, 0.0
  $region17: #{decoder_forward.20} parent=0 // pred_fallthru
    _
  %v21 = vld [vmem:[#allocation2] sm:$0xff]
  %v22 = vld [vmem:[#allocation2 + $0x8] sm:$0xff]
  %v23 = vld [vmem:[%s0] sm:$0xff]
  %v24 = vld [vmem:[%s0 + $0x8] sm:$0xff]
  %v25 = vld [vmem:[%s1] sm:$0xff]
  %v26 = vld [vmem:[%s1 + $0x8] sm:$0xff]
  %v27 = vld [vmem:[%s1 + $0x10] sm:$0xff]
  %v28 = vld [vmem:[%s1 + $0x18] sm:$0xff]
  %vm29 = vcmask 261120
  %v31 = vsel %vm29, %v23, 0
  %v34 = vsel %vm29, %v24, 0
  %36 = vmatpush.msra.mxu0 0.0
  %37 = vmatpush.msra.mxu0 0.0
  %38 = vmatpush.msra.mxu0 0.0
  %39 = vmatpush.msra.mxu0 0.0
  %40 = vmatpush.msra.mxu0 0.0
  %41 = vmatpush.msra.mxu0 0.0
  %42 = vmatpush.msra.mxu0 0.0
  %43 = vmatpush.msra.mxu0 0.0
  %44 = vmatpush.msra.mxu0 0.0
  %45 = vmatpush.msra.mxu0 0.0
  %46 = vmatpush.msra.mxu0 0.0
  %47 = vmatpush.msra.mxu0 0.0
  %48 = vmatpush.msra.mxu0 %v28
  %49 = vmatpush.msra.mxu0 %v27
  %50 = vmatpush.msra.mxu0 %v26
  %51 = vmatpush.msra.mxu0 %v25
  %52 = vmatmul.f32.gmra.mxu0 %v31
  %v53 = vpop.f32.mrf.mxu0
  %v54 = vadd.f32 0.0, %v53
  %55 = vmatmul.f32.gmra.mxu0 %v34
  %v56 = vpop.f32.mrf.mxu0
  %v57 = vadd.f32 0.0, %v56
  %58 = vdwg.mxu0
  %v59 = vadd.f32 %v21, %v54
  %v60 = vadd.f32 %v22, %v57
  %61 = vst.msk [vmem:[#allocation2] sm:$0xff] %vm29, %v59
  %62 = vst.msk [vmem:[#allocation2 + $0x8] sm:$0xff] %vm29, %v60
  // Predicated region
  $region18: #{decoder_forward.20} parent=0 // pred_check
    %p63 = pneg %p14
  $region19: #{decoder_forward.20} parent=0 // pred_check_branch
    %65 = sbr.rel (%p63) target = $region21
  $region20: #{decoder_forward.20} parent=0 // pred_region
    %v66 = vld [vmem:[#allocation2] sm:$0xff]
    %v67 = vld [vmem:[#allocation2 + $0x8] sm:$0xff]
    %v68 = vld [vmem:[%s2] sm:$0x1]
    %v70 = vperm.slane %v68, 0
    %v72 = vadd.f32 %v66, %v70
    %v73 = vadd.f32 %v67, %v70
    %74 = vst.msk [vmem:[%s3] sm:$0xff] %vm29, %v72
    %75 = vst.msk [vmem:[%s3 + $0x8] sm:$0xff] %vm29, %v73
  $region21: #{decoder_forward.20} parent=0 // pred_fallthru
    _
  // Predicated region
  $region22: #{decoder_forward.20} parent=0 // pred_check
    _
  $region23: #{decoder_forward.20} parent=0 // pred_check_branch
    %77 = sbr.rel (0) target = $region25
  $region24: #{decoder_forward.20} parent=0 // pred_region
    _
  $region25: #{decoder_forward.20} parent=0 // pred_fallthru
    _
  // Predicated region
  $region26: #{decoder_forward.20} parent=0 // pred_check
    _
  $region27: #{decoder_forward.20} parent=0 // pred_check_branch
    %79 = sbr.rel (0) target = $region29
  $region28: #{decoder_forward.20} parent=0 // pred_region
    _
  $region29: #{decoder_forward.20} parent=0 // pred_fallthru
    _

// kernel: decoder_forward.19
$region0: #{decoder_forward.19}
  #allocation0 [shape = 'u32[]', space=smem, size = 0x4, offset = 0x4, fixed_abs, tag = 'smem constant byte address 0x4 - core index']
  #allocation1 [shape = 'u32[72,128]{1,0:T(1,128)}', space=vmem, size = 0x9000, scoped, tag = 'internal scratch']
  #allocation2 [shape = 'f32[16,32]{1,0:T(8,128)}', space=vmem, size = 0x2000, scoped, tag = 'scratch operand']
  %s0 = inlined_call_operand.vmem [shape: f32[16,32], index: 0, kind: input, shape index: {}]
  %s1 = inlined_call_operand.vmem [shape: f32[32,32], index: 1, kind: input, shape index: {}]
  %s2 = inlined_call_operand.vmem [shape: f32[1,32], index: 2, kind: input, shape index: {}]
  %s3 = inlined_call_operand.vmem [shape: f32[16,32], index: 3, kind: input, shape index: {}]
  %s4 = inlined_call_operand.vmem [shape: f32[1,32], index: 4, kind: input, shape index: {}]
  %s5 = inlined_call_operand.vmem [shape: f32[1,32], index: 5, kind: input, shape index: {}]
  %s6 = inlined_call_operand.vmem [shape: f32[16,32], index: 6, kind: output, shape index: {}]
  %s7 = sld [smem:[#allocation0]]
  $region42: #{decoder_forward.19} parent=0
    _
  %s9 = ssub.s32 1, %s7
  %s10 = scalar_select 0, %s9, %s7
  // Predicated region
  $region2: #{decoder_forward.19} parent=0 // pred_check
    _
  $region3: #{decoder_forward.19} parent=0 // pred_check_branch
    %12 = sbr.rel (0) target = $region5
  $region4: #{decoder_forward.19} parent=0 // pred_region
    _
  $region5: #{decoder_forward.19} parent=0 // pred_fallthru
    _
  // Predicated region
  $region6: #{decoder_forward.19} parent=0 // pred_check
    _
  $region7: #{decoder_forward.19} parent=0 // pred_check_branch
    %14 = sbr.rel (0) target = $region9
  $region8: #{decoder_forward.19} parent=0 // pred_region
    _
  $region9: #{decoder_forward.19} parent=0 // pred_fallthru
    _
  // Predicated region
  $region10: #{decoder_forward.19} parent=0 // pred_check
    _
  $region11: #{decoder_forward.19} parent=0 // pred_check_branch
    %16 = sbr.rel (0) target = $region13
  $region12: #{decoder_forward.19} parent=0 // pred_region
    _
  $region13: #{decoder_forward.19} parent=0 // pred_fallthru
    _
  // Predicated region
  $region14: #{decoder_forward.19} parent=0 // pred_check
    _
  $region15: #{decoder_forward.19} parent=0 // pred_check_branch
    %18 = sbr.rel (0) target = $region17
  $region16: #{decoder_forward.19} parent=0 // pred_region
    _
  $region17: #{decoder_forward.19} parent=0 // pred_fallthru
    _
  // Predicated region
  $region18: #{decoder_forward.19} parent=0 // pred_check
    _
  $region19: #{decoder_forward.19} parent=0 // pred_check_branch
    %20 = sbr.rel (0) target = $region21
  $region20: #{decoder_forward.19} parent=0 // pred_region
    _
  $region21: #{decoder_forward.19} parent=0 // pred_fallthru
    _
  // Predicated region
  $region22: #{decoder_forward.19} parent=0 // pred_check
    _
  $region23: #{decoder_forward.19} parent=0 // pred_check_branch
    %22 = sbr.rel (0) target = $region25
  $region24: #{decoder_forward.19} parent=0 // pred_region
    _
  $region25: #{decoder_forward.19} parent=0 // pred_fallthru
    _
  %p23 = scmp.eq.s32.totalorder 0, 0
  // Predicated region
  $region26: #{decoder_forward.19} parent=0 // pred_check
    %p24 = pneg %p23
  $region27: #{decoder_forward.19} parent=0 // pred_check_branch
    %26 = sbr.rel (%p24) target = $region29
  $region28: #{decoder_forward.19} parent=0 // pred_region
    %vm27 = vcmask 261120
    %28 = vst.msk [vmem:[#allocation2] sm:$0xff] %vm27, 0.0
    %29 = vst.msk [vmem:[#allocation2 + $0x8] sm:$0xff] %vm27, 0.0
  $region29: #{decoder_forward.19} parent=0 // pred_fallthru
    _
  %v30 = vld [vmem:[#allocation2] sm:$0xff]
  %v31 = vld [vmem:[#allocation2 + $0x8] sm:$0xff]
  %v32 = vld [vmem:[%s0] sm:$0xff]
  %v33 = vld [vmem:[%s0 + $0x8] sm:$0xff]
  %v34 = vld [vmem:[%s1] sm:$0xff]
  %v35 = vld [vmem:[%s1 + $0x8] sm:$0xff]
  %v36 = vld [vmem:[%s1 + $0x10] sm:$0xff]
  %v37 = vld [vmem:[%s1 + $0x18] sm:$0xff]
  %vm38 = vcmask 261120
  %v40 = vsel %vm38, %v32, 0
  %v43 = vsel %vm38, %v33, 0
  %45 = vmatpush.msra.mxu0 0.0
  %46 = vmatpush.msra.mxu0 0.0
  %47 = vmatpush.msra.mxu0 0.0
  %48 = vmatpush.msra.mxu0 0.0
  %49 = vmatpush.msra.mxu0 0.0
  %50 = vmatpush.msra.mxu0 0.0
  %51 = vmatpush.msra.mxu0 0.0
  %52 = vmatpush.msra.mxu0 0.0
  %53 = vmatpush.msra.mxu0 0.0
  %54 = vmatpush.msra.mxu0 0.0
  %55 = vmatpush.msra.mxu0 0.0
  %56 = vmatpush.msra.mxu0 0.0
  %57 = vmatpush.msra.mxu0 %v37
  %58 = vmatpush.msra.mxu0 %v36
  %59 = vmatpush.msra.mxu0 %v35
  %60 = vmatpush.msra.mxu0 %v34
  %61 = vmatmul.f32.gmra.mxu0 %v40
  %v62 = vpop.f32.mrf.mxu0
  %v63 = vadd.f32 0.0, %v62
  %64 = vmatmul.f32.gmra.mxu0 %v43
  %v65 = vpop.f32.mrf.mxu0
  %v66 = vadd.f32 0.0, %v65
  %67 = vdwg.mxu0
  %v68 = vadd.f32 %v30, %v63
  %v69 = vadd.f32 %v31, %v66
  %70 = vst.msk [vmem:[#allocation2] sm:$0xff] %vm38, %v68
  %71 = vst.msk [vmem:[#allocation2 + $0x8] sm:$0xff] %vm38, %v69
  // Predicated region
  $region30: #{decoder_forward.19} parent=0 // pred_check
    %p72 = pneg %p23
  $region31: #{decoder_forward.19} parent=0 // pred_check_branch
    %74 = sbr.rel (%p72) target = $region33
  $region32: #{decoder_forward.19} parent=0 // pred_region
    %v75 = vld [vmem:[#allocation2] sm:$0xff]
    %v76 = vld [vmem:[#allocation2 + $0x8] sm:$0xff]
    %v77 = vld [vmem:[%s2] sm:$0x1]
    %v79 = vperm.slane %v77, 0
    %v81 = vadd.f32 %v75, %v79
    %v82 = vadd.f32 %v76, %v79
    %v83 = vld [vmem:[%s3] sm:$0xff]
    %v84 = vld [vmem:[%s3 + $0x8] sm:$0xff]
    %v85 = vadd.f32 %v81, %v83
    %v86 = vadd.f32 %v82, %v84
    %v87 = vsel %vm38, %v85, 0.0
    %88 = vadd.xlane.f32.xlu0 %v87
    %v89 = vpop.xlane.xlu0 %88
    %v90 = vsel %vm38, %v86, 0.0
    %91 = vadd.xlane.f32.xlu0 %v90
    %v92 = vpop.xlane.xlu0 %91
    %v93 = vrcp.pop 32.0
    %v94 = vmul.f32 32.0, %v93
    %v95 = vsub.f32 1.0, %v94
    %v96 = vmul.f32 %v93, %v95
    %v97 = vadd.f32 %v93, %v96
    %vm98 = vweird.f32 %v93
    %v99 = vsel %vm98, %v93, %v97
    %v100 = vmul.f32 %v89, %v99
    %v101 = vmul.f32 %v92, %v99
    %v102 = vsub.f32 %v85, %v100
    %v103 = vsub.f32 %v86, %v101
    %v104 = vmul.f32 %v102, %v102
    %v105 = vmul.f32 %v103, %v103
    %v106 = vsel %vm38, %v104, 0.0
    %107 = vadd.xlane.f32.xlu0 %v106
    %v108 = vpop.xlane.xlu0 %107
    %v109 = vsel %vm38, %v105, 0.0
    %110 = vadd.xlane.f32.xlu0 %v109
    %v111 = vpop.xlane.xlu0 %110
    %v112 = vmul.f32 %v108, %v99
    %v113 = vmul.f32 %v111, %v99
    %v114 = vadd.f32 %v112, 1e-05
    %v115 = vadd.f32 %v113, 1e-05
    %v116 = vrsqrt.pop %v114
    %v117 = vmul.f32 %v116, %v114
    %v118 = vmul.f32 %v117, %v116
    %v119 = vmul.f32 0.5, %v118
    %v120 = vsub.f32 1.5, %v119
    %v121 = vmul.f32 %v116, %v120
    %vm122 = vweird.f32 %v114
    %vm123 = vweird.f32 %v116
    %vm124 = vmor %vm122, %vm123
    %v125 = vsel %vm124, %v116, %v121
    %v126 = vrsqrt.pop %v115
    %v127 = vmul.f32 %v126, %v115
    %v128 = vmul.f32 %v127, %v126
    %v129 = vmul.f32 0.5, %v128
    %v130 = vsub.f32 1.5, %v129
    %v131 = vmul.f32 %v126, %v130
    %vm132 = vweird.f32 %v115
    %vm133 = vweird.f32 %v126
    %vm134 = vmor %vm132, %vm133
    %v135 = vsel %vm134, %v126, %v131
    %v136 = vmul.f32 %v102, %v125
    %v137 = vmul.f32 %v103, %v135
    %v138 = vld [vmem:[%s4] sm:$0x1]
    %v140 = vperm.slane %v138, 0
    %v142 = vmul.f32 %v136, %v140
    %v143 = vmul.f32 %v137, %v140
    %v144 = vld [vmem:[%s5] sm:$0x1]
    %v146 = vperm.slane %v144, 0
    %v148 = vadd.f32 %v142, %v146
    %v149 = vadd.f32 %v143, %v146
    %150 = vst.msk [vmem:[%s6] sm:$0xff] %vm38, %v148
    %151 = vst.msk [vmem:[%s6 + $0x8] sm:$0xff] %vm38, %v149
  $region33: #{decoder_forward.19} parent=0 // pred_fallthru
    _
  // Predicated region
  $region34: #{decoder_forward.19} parent=0 // pred_check
    _
  $region35: #{decoder_forward.19} parent=0 // pred_check_branch
    %153 = sbr.rel (0) target = $region37
  $region36: #{decoder_forward.19} parent=0 // pred_region
    _
  $region37: #{decoder_forward.19} parent=0 // pred_fallthru
    _
  // Predicated region
  $region38: #{decoder_forward.19} parent=0 // pred_check
    _
  $region39: #{decoder_forward.19} parent=0 // pred_check_branch
    %155 = sbr.rel (0) target = $region41
  $region40: #{decoder_forward.19} parent=0 // pred_region
    _
  $region41: #{decoder_forward.19} parent=0 // pred_fallthru
    _

// kernel: decoder_forward.21
$region0: #{decoder_forward.21}
  #allocation0 [shape = 'u32[]', space=smem, size = 0x4, offset = 0x4, fixed_abs, tag = 'smem constant byte address 0x4 - core index']
  #allocation1 [shape = 'u32[72,128]{1,0:T(1,128)}', space=vmem, size = 0x9000, scoped, tag = 'internal scratch']
  #allocation2 [shape = 'f32[16,64]{1,0:T(8,128)}', space=vmem, size = 0x2000, scoped, tag = 'scratch operand']
  %s0 = inlined_call_operand.vmem [shape: f32[16,32], index: 0, kind: input, shape index: {}]
  %s1 = inlined_call_operand.vmem [shape: f32[32,64], index: 1, kind: input, shape index: {}]
  %s2 = inlined_call_operand.vmem [shape: f32[1,64], index: 2, kind: input, shape index: {}]
  %s3 = inlined_call_operand.vmem [shape: f32[16,64], index: 3, kind: output, shape index: {}]
  %s4 = sld [smem:[#allocation0]]
  $region30: #{decoder_forward.21} parent=0
    _
  %s6 = ssub.s32 1, %s4
  %s7 = scalar_select 0, %s6, %s4
  // Predicated region
  $region2: #{decoder_forward.21} parent=0 // pred_check
    _
  $region3: #{decoder_forward.21} parent=0 // pred_check_branch
    %9 = sbr.rel (0) target = $region5
  $region4: #{decoder_forward.21} parent=0 // pred_region
    _
  $region5: #{decoder_forward.21} parent=0 // pred_fallthru
    _
  // Predicated region
  $region6: #{decoder_forward.21} parent=0 // pred_check
    _
  $region7: #{decoder_forward.21} parent=0 // pred_check_branch
    %11 = sbr.rel (0) target = $region9
  $region8: #{decoder_forward.21} parent=0 // pred_region
    _
  $region9: #{decoder_forward.21} parent=0 // pred_fallthru
    _
  // Predicated region
  $region10: #{decoder_forward.21} parent=0 // pred_check
    _
  $region11: #{decoder_forward.21} parent=0 // pred_check_branch
    %13 = sbr.rel (0) target = $region13
  $region12: #{decoder_forward.21} parent=0 // pred_region
    _
  $region13: #{decoder_forward.21} parent=0 // pred_fallthru
    _
  %p14 = scmp.eq.s32.totalorder 0, 0
  // Predicated region
  $region14: #{decoder_forward.21} parent=0 // pred_check
    %p15 = pneg %p14
  $region15: #{decoder_forward.21} parent=0 // pred_check_branch
    %17 = sbr.rel (%p15) target = $region17
  $region16: #{decoder_forward.21} parent=0 // pred_region
    %vm18 = vcmask 523264
    %19 = vst.msk [vmem:[#allocation2] sm:$0xff] %vm18, 0.0
    %20 = vst.msk [vmem:[#allocation2 + $0x8] sm:$0xff] %vm18, 0.0
  $region17: #{decoder_forward.21} parent=0 // pred_fallthru
    _
  %v21 = vld [vmem:[#allocation2] sm:$0xff]
  %v22 = vld [vmem:[#allocation2 + $0x8] sm:$0xff]
  %v23 = vld [vmem:[%s0] sm:$0xff]
  %v24 = vld [vmem:[%s0 + $0x8] sm:$0xff]
  %v25 = vld [vmem:[%s1] sm:$0xff]
  %v26 = vld [vmem:[%s1 + $0x8] sm:$0xff]
  %v27 = vld [vmem:[%s1 + $0x10] sm:$0xff]
  %v28 = vld [vmem:[%s1 + $0x18] sm:$0xff]
  %vm29 = vcmask 261120
  %v31 = vsel %vm29, %v23, 0
  %v34 = vsel %vm29, %v24, 0
  %36 = vmatpush.msra.mxu0 0.0
  %37 = vmatpush.msra.mxu0 0.0
  %38 = vmatpush.msra.mxu0 0.0
  %39 = vmatpush.msra.mxu0 0.0
  %40 = vmatpush.msra.mxu0 0.0
  %41 = vmatpush.msra.mxu0 0.0
  %42 = vmatpush.msra.mxu0 0.0
  %43 = vmatpush.msra.mxu0 0.0
  %44 = vmatpush.msra.mxu0 0.0
  %45 = vmatpush.msra.mxu0 0.0
  %46 = vmatpush.msra.mxu0 0.0
  %47 = vmatpush.msra.mxu0 0.0
  %48 = vmatpush.msra.mxu0 %v28
  %49 = vmatpush.msra.mxu0 %v27
  %50 = vmatpush.msra.mxu0 %v26
  %51 = vmatpush.msra.mxu0 %v25
  %52 = vmatmul.f32.gmra.mxu0 %v31
  %v53 = vpop.f32.mrf.mxu0
  %v54 = vadd.f32 0.0, %v53
  %55 = vmatmul.f32.gmra.mxu0 %v34
  %v56 = vpop.f32.mrf.mxu0
  %v57 = vadd.f32 0.0, %v56
  %58 = vdwg.mxu0
  %v59 = vadd.f32 %v21, %v54
  %v60 = vadd.f32 %v22, %v57
  %vm61 = vcmask 523264
  %62 = vst.msk [vmem:[#allocation2] sm:$0xff] %vm61, %v59
  %63 = vst.msk [vmem:[#allocation2 + $0x8] sm:$0xff] %vm61, %v60
  // Predicated region
  $region18: #{decoder_forward.21} parent=0 // pred_check
    %p64 = pneg %p14
  $region19: #{decoder_forward.21} parent=0 // pred_check_branch
    %66 = sbr.rel (%p64) target = $region21
  $region20: #{decoder_forward.21} parent=0 // pred_region
    %v67 = vld [vmem:[#allocation2] sm:$0xff]
    %v68 = vld [vmem:[#allocation2 + $0x8] sm:$0xff]
    %v69 = vld [vmem:[%s2] sm:$0x1]
    %v71 = vperm.slane %v69, 0
    %v73 = vadd.f32 %v67, %v71
    %v74 = vadd.f32 %v68, %v71
    %75 = vst.msk [vmem:[%s3] sm:$0xff] %vm61, %v73
    %76 = vst.msk [vmem:[%s3 + $0x8] sm:$0xff] %vm61, %v74
  $region21: #{decoder_forward.21} parent=0 // pred_fallthru
    _
  // Predicated region
  $region22: #{decoder_forward.21} parent=0 // pred_check
    _
  $region23: #{decoder_forward.21} parent=0 // pred_check_branch
    %78 = sbr.rel (0) target = $region25
  $region24: #{decoder_forward.21} parent=0 // pred_region
    _
  $region25: #{decoder_forward.21} parent=0 // pred_fallthru
    _
  // Predicated region
  $region26: #{decoder_forward.21} parent=0 // pred_check
    _
  $region27: #{decoder_forward.21} parent=0 // pred_check_branch
    %80 = sbr.rel (0) target = $region29
  $region28: #{decoder_forward.21} parent=0 // pred_region
    _
  $region29: #{decoder_forward.21} parent=0 // pred_fallthru
    _

// kernel: decoder_forward.33
$region0: #{decoder_forward.33}
  #allocation0 [shape = 'u32[]', space=smem, size = 0x4, offset = 0x4, fixed_abs, tag = 'smem constant byte address 0x4 - core index']
  #allocation1 [shape = 'u32[72,128]{1,0:T(1,128)}', space=vmem, size = 0x9000, scoped, tag = 'internal scratch']
  #allocation2 [shape = 'f32[16,50]{1,0:T(8,128)}', space=vmem, size = 0x2000, scoped, tag = 'scratch operand']
  %s0 = inlined_call_operand.vmem [shape: f32[16,32], index: 0, kind: input, shape index: {}]
  %s1 = inlined_call_operand.vmem [shape: f32[32,50], index: 1, kind: input, shape index: {}]
  %s2 = inlined_call_operand.vmem [shape: f32[1,50], index: 2, kind: input, shape index: {}]
  %s3 = inlined_call_operand.hbm [shape: f32[16,50], index: 3, kind: output, shape index: {}]
  %s4 = sld [smem:[#allocation0]]
  $region30: #{decoder_forward.33} parent=0
    _
  %s6 = ssub.s32 1, %s4
  %s7 = scalar_select 0, %s6, %s4
  $region1: #{decoder_forward.33} parent=0
    #allocation3 [shape = 'u8[8192]{0}', space=vmem, size = 0x2000, scoped, tag = 'output window, operand 0, single buffered']
    #allocation4 [shape = 's32[1]{0}', space=sflag, size = 0x4, scoped, tag = 'scoped memory for decoder_forward.33']
    %8 = vsyncpa [#allocation4], 0
    // Predicated region
    $region2: #{decoder_forward.33} parent=1 // pred_check
      _
    $region3: #{decoder_forward.33} parent=1 // pred_check_branch
      %10 = sbr.rel (0) target = $region5
    $region4: #{decoder_forward.33} parent=1 // pred_region
      _
    $region5: #{decoder_forward.33} parent=1 // pred_fallthru
      _
    // Predicated region
    $region6: #{decoder_forward.33} parent=1 // pred_check
      _
    $region7: #{decoder_forward.33} parent=1 // pred_check_branch
      %12 = sbr.rel (0) target = $region9
    $region8: #{decoder_forward.33} parent=1 // pred_region
      _
    $region9: #{decoder_forward.33} parent=1 // pred_fallthru
      _
    // Predicated region
    $region10: #{decoder_forward.33} parent=1 // pred_check
      _
    $region11: #{decoder_forward.33} parent=1 // pred_check_branch
      %14 = sbr.rel (0) target = $region13
    $region12: #{decoder_forward.33} parent=1 // pred_region
      _
    $region13: #{decoder_forward.33} parent=1 // pred_fallthru
      _
    %p15 = scmp.eq.s32.totalorder 0, 0
    // Predicated region
    $region14: #{decoder_forward.33} parent=1 // pred_check
      %p16 = pneg %p15
    $region15: #{decoder_forward.33} parent=1 // pred_check_branch
      %18 = sbr.rel (%p16) target = $region17
    $region16: #{decoder_forward.33} parent=1 // pred_region
      %vm19 = vcmask 408576
      %20 = vst.msk [vmem:[#allocation2] sm:$0xff] %vm19, 0.0
      %21 = vst.msk [vmem:[#allocation2 + $0x8] sm:$0xff] %vm19, 0.0
    $region17: #{decoder_forward.33} parent=1 // pred_fallthru
      _
    %v22 = vld [vmem:[#allocation2] sm:$0xff]
    %v23 = vld [vmem:[#allocation2 + $0x8] sm:$0xff]
    %v24 = vld [vmem:[%s0] sm:$0xff]
    %v25 = vld [vmem:[%s0 + $0x8] sm:$0xff]
    %v26 = vld [vmem:[%s1] sm:$0xff]
    %v27 = vld [vmem:[%s1 + $0x8] sm:$0xff]
    %v28 = vld [vmem:[%s1 + $0x10] sm:$0xff]
    %v29 = vld [vmem:[%s1 + $0x18] sm:$0xff]
    %vm30 = vcmask 261120
    %v32 = vsel %vm30, %v24, 0
    %v35 = vsel %vm30, %v25, 0
    %37 = vmatpush.msra.mxu0 0.0
    %38 = vmatpush.msra.mxu0 0.0
    %39 = vmatpush.msra.mxu0 0.0
    %40 = vmatpush.msra.mxu0 0.0
    %41 = vmatpush.msra.mxu0 0.0
    %42 = vmatpush.msra.mxu0 0.0
    %43 = vmatpush.msra.mxu0 0.0
    %44 = vmatpush.msra.mxu0 0.0
    %45 = vmatpush.msra.mxu0 0.0
    %46 = vmatpush.msra.mxu0 0.0
    %47 = vmatpush.msra.mxu0 0.0
    %48 = vmatpush.msra.mxu0 0.0
    %49 = vmatpush.msra.mxu0 %v29
    %50 = vmatpush.msra.mxu0 %v28
    %51 = vmatpush.msra.mxu0 %v27
    %52 = vmatpush.msra.mxu0 %v26
    %53 = vmatmul.f32.gmra.mxu0 %v32
    %v54 = vpop.f32.mrf.mxu0
    %v55 = vadd.f32 0.0, %v54
    %56 = vmatmul.f32.gmra.mxu0 %v35
    %v57 = vpop.f32.mrf.mxu0
    %v58 = vadd.f32 0.0, %v57
    %59 = vdwg.mxu0
    %v60 = vadd.f32 %v22, %v55
    %v61 = vadd.f32 %v23, %v58
    %vm62 = vcmask 408576
    %63 = vst.msk [vmem:[#allocation2] sm:$0xff] %vm62, %v60
    %64 = vst.msk [vmem:[#allocation2 + $0x8] sm:$0xff] %vm62, %v61
    // Predicated region
    $region18: #{decoder_forward.33} parent=1 // pred_check
      %p65 = pneg %p15
    $region19: #{decoder_forward.33} parent=1 // pred_check_branch
      %67 = sbr.rel (%p65) target = $region21
    $region20: #{decoder_forward.33} parent=1 // pred_region
      %v68 = vld [vmem:[#allocation2] sm:$0xff]
      %v69 = vld [vmem:[#allocation2 + $0x8] sm:$0xff]
      %v70 = vld [vmem:[%s2] sm:$0x1]
      %v72 = vperm.slane %v70, 0
      %v74 = vadd.f32 %v68, %v72
      %v75 = vadd.f32 %v69, %v72
      %76 = vst.msk [vmem:[#allocation3] sm:$0xff] %vm62, %v74
      %77 = vst.msk [vmem:[#allocation3 + $0x8] sm:$0xff] %vm62, %v75
    $region21: #{decoder_forward.33} parent=1 // pred_fallthru
      _
    // Predicated region
    $region22: #{decoder_forward.33} parent=1 // pred_check
      _
    $region23: #{decoder_forward.33} parent=1 // pred_check_branch
      %79 = sbr.rel (0) target = $region25
    $region24: #{decoder_forward.33} parent=1 // pred_region
      %81 = vsyncadd [#allocation4], 0
      %s82 = sshll.u32 [#allocation3], 4
      %s83 = int_to_ptr.vmem [resolvable:$true] %s82
      %s84 = sshll.u32 %s3, 4
      %s85 = int_to_ptr.hbm [resolvable:$true] %s84
      %90 = dma.vmem_to_hbm [thread:$0]  %s83, 256, %s85, [#allocation4], 128, 128, 8
    $region25: #{decoder_forward.33} parent=1 // pred_fallthru
      _
    // Predicated region
    $region26: #{decoder_forward.33} parent=1 // pred_check
      _
    $region27: #{decoder_forward.33} parent=1 // pred_check_branch
      %92 = sbr.rel (0) target = $region29
    $region28: #{decoder_forward.33} parent=1 // pred_region
      %94 = dma.done [#allocation4], 256
    $region29: #{decoder_forward.33} parent=1 // pred_fallthru
      _
    %95 = vsyncpa [#allocation4], 1

// kernel: decoder_forward.24
$region0: #{decoder_forward.24}
  #allocation0 [shape = 'u32[]', space=smem, size = 0x4, offset = 0x4, fixed_abs, tag = 'smem constant byte address 0x4 - core index']
  #allocation1 [shape = 'u32[72,128]{1,0:T(1,128)}', space=vmem, size = 0x9000, scoped, tag = 'internal scratch']
  #allocation2 [shape = 'f32[16,32]{1,0:T(8,128)}', space=vmem, size = 0x2000, scoped, tag = 'scratch operand']
  %s0 = inlined_call_operand.vmem [shape: f32[16,32], index: 0, kind: input, shape index: {}]
  %s1 = inlined_call_operand.vmem [shape: f32[32,128], index: 1, kind: input, shape index: {}]
  %s2 = inlined_call_operand.vmem [shape: f32[1,128], index: 2, kind: input, shape index: {}]
  %s3 = inlined_call_operand.vmem [shape: f32[128,32], index: 3, kind: input, shape index: {}]
  %s4 = inlined_call_operand.vmem [shape: f32[1,32], index: 4, kind: input, shape index: {}]
  %s5 = inlined_call_operand.vmem [shape: f32[1,32], index: 5, kind: input, shape index: {}]
  %s6 = inlined_call_operand.vmem [shape: f32[1,32], index: 6, kind: input, shape index: {}]
  %s7 = inlined_call_operand.vmem [shape: f32[16,32], index: 7, kind: output, shape index: {}]
  %s8 = sld [smem:[#allocation0]]
  $region46: #{decoder_forward.24} parent=0
    _
  %s10 = ssub.s32 1, %s8
  %s11 = scalar_select 0, %s10, %s8
  // Predicated region
  $region2: #{decoder_forward.24} parent=0 // pred_check
    _
  $region3: #{decoder_forward.24} parent=0 // pred_check_branch
    %13 = sbr.rel (0) target = $region5
  $region4: #{decoder_forward.24} parent=0 // pred_region
    _
  $region5: #{decoder_forward.24} parent=0 // pred_fallthru
    _
  // Predicated region
  $region6: #{decoder_forward.24} parent=0 // pred_check
    _
  $region7: #{decoder_forward.24} parent=0 // pred_check_branch
    %15 = sbr.rel (0) target = $region9
  $region8: #{decoder_forward.24} parent=0 // pred_region
    _
  $region9: #{decoder_forward.24} parent=0 // pred_fallthru
    _
  // Predicated region
  $region10: #{decoder_forward.24} parent=0 // pred_check
    _
  $region11: #{decoder_forward.24} parent=0 // pred_check_branch
    %17 = sbr.rel (0) target = $region13
  $region12: #{decoder_forward.24} parent=0 // pred_region
    _
  $region13: #{decoder_forward.24} parent=0 // pred_fallthru
    _
  // Predicated region
  $region14: #{decoder_forward.24} parent=0 // pred_check
    _
  $region15: #{decoder_forward.24} parent=0 // pred_check_branch
    %19 = sbr.rel (0) target = $region17
  $region16: #{decoder_forward.24} parent=0 // pred_region
    _
  $region17: #{decoder_forward.24} parent=0 // pred_fallthru
    _
  // Predicated region
  $region18: #{decoder_forward.24} parent=0 // pred_check
    _
  $region19: #{decoder_forward.24} parent=0 // pred_check_branch
    %21 = sbr.rel (0) target = $region21
  $region20: #{decoder_forward.24} parent=0 // pred_region
    _
  $region21: #{decoder_forward.24} parent=0 // pred_fallthru
    _
  // Predicated region
  $region22: #{decoder_forward.24} parent=0 // pred_check
    _
  $region23: #{decoder_forward.24} parent=0 // pred_check_branch
    %23 = sbr.rel (0) target = $region25
  $region24: #{decoder_forward.24} parent=0 // pred_region
    _
  $region25: #{decoder_forward.24} parent=0 // pred_fallthru
    _
  // Predicated region
  $region26: #{decoder_forward.24} parent=0 // pred_check
    _
  $region27: #{decoder_forward.24} parent=0 // pred_check_branch
    %25 = sbr.rel (0) target = $region29
  $region28: #{decoder_forward.24} parent=0 // pred_region
    _
  $region29: #{decoder_forward.24} parent=0 // pred_fallthru
    _
  %p26 = scmp.eq.s32.totalorder 0, 0
  // Predicated region
  $region30: #{decoder_forward.24} parent=0 // pred_check
    %p27 = pneg %p26
  $region31: #{decoder_forward.24} parent=0 // pred_check_branch
    %29 = sbr.rel (%p27) target = $region33
  $region32: #{decoder_forward.24} parent=0 // pred_region
    %vm30 = vcmask 261120
    %31 = vst.msk [vmem:[#allocation2] sm:$0xff] %vm30, 0.0
    %32 = vst.msk [vmem:[#allocation2 + $0x8] sm:$0xff] %vm30, 0.0
  $region33: #{decoder_forward.24} parent=0 // pred_fallthru
    _
  %v33 = vld [vmem:[%s0] sm:$0xff]
  %v34 = vld [vmem:[%s0 + $0x8] sm:$0xff]
  %v35 = vld [vmem:[%s1] sm:$0xff]
  %v36 = vld [vmem:[%s1 + $0x8] sm:$0xff]
  %v37 = vld [vmem:[%s1 + $0x10] sm:$0xff]
  %v38 = vld [vmem:[%s1 + $0x18] sm:$0xff]
  %v39 = vld [vmem:[%s2] sm:$0x1]
  %v41 = vperm.slane %v39, 0
  %vm43 = vcmask 261120
  %v45 = vsel %vm43, %v33, 0
  %v48 = vsel %vm43, %v34, 0
  %50 = vmatpush.msra.mxu0 0.0
  %51 = vmatpush.msra.mxu0 0.0
  %52 = vmatpush.msra.mxu0 0.0
  %53 = vmatpush.msra.mxu0 0.0
  %54 = vmatpush.msra.mxu0 0.0
  %55 = vmatpush.msra.mxu0 0.0
  %56 = vmatpush.msra.mxu0 0.0
  %57 = vmatpush.msra.mxu0 0.0
  %58 = vmatpush.msra.mxu0 0.0
  %59 = vmatpush.msra.mxu0 0.0
  %60 = vmatpush.msra.mxu0 0.0
  %61 = vmatpush.msra.mxu0 0.0
  %62 = vmatpush.msra.mxu0 %v38
  %63 = vmatpush.msra.mxu0 %v37
  %64 = vmatpush.msra.mxu0 %v36
  %65 = vmatpush.msra.mxu0 %v35
  %66 = vmatmul.f32.gmra.mxu0 %v45
  %v67 = vpop.f32.mrf.mxu0
  %v68 = vadd.f32 %v41, %v67
  %69 = vmatmul.f32.gmra.mxu0 %v48
  %v70 = vpop.f32.mrf.mxu0
  %v71 = vadd.f32 %v41, %v70
  %72 = vdwg.mxu0
  %v73 = vmax.f32 %v68, 0.0
  %v74 = vmax.f32 %v71, 0.0
  %v75 = vld [vmem:[#allocation2] sm:$0xff]
  %v76 = vld [vmem:[#allocation2 + $0x8] sm:$0xff]
  %v77 = vld [vmem:[%s3] sm:$0xff]
  %v78 = vld [vmem:[%s3 + $0x8] sm:$0xff]
  %v79 = vld [vmem:[%s3 + $0x10] sm:$0xff]
  %v80 = vld [vmem:[%s3 + $0x18] sm:$0xff]
  %v81 = vld [vmem:[%s3 + $0x20] sm:$0xff]
  %v82 = vld [vmem:[%s3 + $0x28] sm:$0xff]
  %v83 = vld [vmem:[%s3 + $0x30] sm:$0xff]
  %v84 = vld [vmem:[%s3 + $0x38] sm:$0xff]
  %v85 = vld [vmem:[%s3 + $0x40] sm:$0xff]
  %v86 = vld [vmem:[%s3 + $0x48] sm:$0xff]
  %v87 = vld [vmem:[%s3 + $0x50] sm:$0xff]
  %v88 = vld [vmem:[%s3 + $0x58] sm:$0xff]
  %v89 = vld [vmem:[%s3 + $0x60] sm:$0xff]
  %v90 = vld [vmem:[%s3 + $0x68] sm:$0xff]
  %v91 = vld [vmem:[%s3 + $0x70] sm:$0xff]
  %v92 = vld [vmem:[%s3 + $0x78] sm:$0xff]
  %93 = vmatpush.msra.mxu0 %v92
  %94 = vmatpush.msra.mxu0 %v91
  %95 = vmatpush.msra.mxu0 %v90
  %96 = vmatpush.msra.mxu0 %v89
  %97 = vmatpush.msra.mxu0 %v88
  %98 = vmatpush.msra.mxu0 %v87
  %99 = vmatpush.msra.mxu0 %v86
  %100 = vmatpush.msra.mxu0 %v85
  %101 = vmatpush.msra.mxu0 %v84
  %102 = vmatpush.msra.mxu0 %v83
  %103 = vmatpush.msra.mxu0 %v82
  %104 = vmatpush.msra.mxu0 %v81
  %105 = vmatpush.msra.mxu0 %v80
  %106 = vmatpush.msra.mxu0 %v79
  %107 = vmatpush.msra.mxu0 %v78
  %108 = vmatpush.msra.mxu0 %v77
  %109 = vmatmul.f32.gmra.mxu0 %v73
  %v110 = vpop.f32.mrf.mxu0
  %v111 = vadd.f32 0.0, %v110
  %112 = vmatmul.f32.gmra.mxu0 %v74
  %v113 = vpop.f32.mrf.mxu0
  %v114 = vadd.f32 0.0, %v113
  %115 = vdwg.mxu0
  %v116 = vadd.f32 %v75, %v111
  %v117 = vadd.f32 %v76, %v114
  %118 = vst.msk [vmem:[#allocation2] sm:$0xff] %vm43, %v116
  %119 = vst.msk [vmem:[#allocation2 + $0x8] sm:$0xff] %vm43, %v117
  // Predicated region
  $region34: #{decoder_forward.24} parent=0 // pred_check
    %p120 = pneg %p26
  $region35: #{decoder_forward.24} parent=0 // pred_check_branch
    %122 = sbr.rel (%p120) target = $region37
  $region36: #{decoder_forward.24} parent=0 // pred_region
    %v123 = vld [vmem:[#allocation2] sm:$0xff]
    %v124 = vld [vmem:[#allocation2 + $0x8] sm:$0xff]
    %v125 = vld [vmem:[%s4] sm:$0x1]
    %v127 = vperm.slane %v125, 0
    %v129 = vadd.f32 %v123, %v127
    %v130 = vadd.f32 %v124, %v127
    %v131 = vld [vmem:[%s0] sm:$0xff]
    %v132 = vld [vmem:[%s0 + $0x8] sm:$0xff]
    %v133 = vadd.f32 %v129, %v131
    %v134 = vadd.f32 %v130, %v132
    %v135 = vsel %vm43, %v133, 0.0
    %136 = vadd.xlane.f32.xlu0 %v135
    %v137 = vpop.xlane.xlu0 %136
    %v138 = vsel %vm43, %v134, 0.0
    %139 = vadd.xlane.f32.xlu0 %v138
    %v140 = vpop.xlane.xlu0 %139
    %v141 = vrcp.pop 32.0
    %v142 = vmul.f32 32.0, %v141
    %v143 = vsub.f32 1.0, %v142
    %v144 = vmul.f32 %v141, %v143
    %v145 = vadd.f32 %v141, %v144
    %vm146 = vweird.f32 %v141
    %v147 = vsel %vm146, %v141, %v145
    %v148 = vmul.f32 %v137, %v147
    %v149 = vmul.f32 %v140, %v147
    %v150 = vsub.f32 %v133, %v148
    %v151 = vsub.f32 %v134, %v149
    %v152 = vmul.f32 %v150, %v150
    %v153 = vmul.f32 %v151, %v151
    %v154 = vsel %vm43, %v152, 0.0
    %155 = vadd.xlane.f32.xlu0 %v154
    %v156 = vpop.xlane.xlu0 %155
    %v157 = vsel %vm43, %v153, 0.0
    %158 = vadd.xlane.f32.xlu0 %v157
    %v159 = vpop.xlane.xlu0 %158
    %v160 = vmul.f32 %v156, %v147
    %v161 = vmul.f32 %v159, %v147
    %v162 = vadd.f32 %v160, 1e-05
    %v163 = vadd.f32 %v161, 1e-05
    %v164 = vrsqrt.pop %v162
    %v165 = vmul.f32 %v164, %v162
    %v166 = vmul.f32 %v165, %v164
    %v167 = vmul.f32 0.5, %v166
    %v168 = vsub.f32 1.5, %v167
    %v169 = vmul.f32 %v164, %v168
    %vm170 = vweird.f32 %v162
    %vm171 = vweird.f32 %v164
    %vm172 = vmor %vm170, %vm171
    %v173 = vsel %vm172, %v164, %v169
    %v174 = vrsqrt.pop %v163
    %v175 = vmul.f32 %v174, %v163
    %v176 = vmul.f32 %v175, %v174
    %v177 = vmul.f32 0.5, %v176
    %v178 = vsub.f32 1.5, %v177
    %v179 = vmul.f32 %v174, %v178
    %vm180 = vweird.f32 %v163
    %vm181 = vweird.f32 %v174
    %vm182 = vmor %vm180, %vm181
    %v183 = vsel %vm182, %v174, %v179
    %v184 = vmul.f32 %v150, %v173
    %v185 = vmul.f32 %v151, %v183
    %v186 = vld [vmem:[%s5] sm:$0x1]
    %v188 = vperm.slane %v186, 0
    %v190 = vmul.f32 %v184, %v188
    %v191 = vmul.f32 %v185, %v188
    %v192 = vld [vmem:[%s6] sm:$0x1]
    %v194 = vperm.slane %v192, 0
    %v196 = vadd.f32 %v190, %v194
    %v197 = vadd.f32 %v191, %v194
    %198 = vst.msk [vmem:[%s7] sm:$0xff] %vm43, %v196
    %199 = vst.msk [vmem:[%s7 + $0x8] sm:$0xff] %vm43, %v197
  $region37: #{decoder_forward.24} parent=0 // pred_fallthru
    _
  // Predicated region
  $region38: #{decoder_forward.24} parent=0 // pred_check
    _
  $region39: #{decoder_forward.24} parent=0 // pred_check_branch
    %201 = sbr.rel (0) target = $region41
  $region40: #{decoder_forward.24} parent=0 // pred_region
    _
  $region41: #{decoder_forward.24} parent=0 // pred_fallthru
    _
  // Predicated region
  $region42: #{decoder_forward.24} parent=0 // pred_check
    _
  $region43: #{decoder_forward.24} parent=0 // pred_check_branch
    %203 = sbr.rel (0) target = $region45
  $region44: #{decoder_forward.24} parent=0 // pred_region
    _
  $region45: #{decoder_forward.24} parent=0 // pred_fallthru
    _

// kernel: decoder_forward.22
$region0: #{decoder_forward.22}
  #allocation0 [shape = 'u32[]', space=smem, size = 0x4, offset = 0x4, fixed_abs, tag = 'smem constant byte address 0x4 - core index']
  #allocation1 [shape = 'u32[72,128]{1,0:T(1,128)}', space=vmem, size = 0x9000, scoped, tag = 'internal scratch']
  #allocation2 [shape = 'f32[8,1]{1,0:T(8,128)}', space=vmem, size = 0x1000, scoped, tag = 'scratch operand']
  #allocation3 [shape = 'f32[8,1]{1,0:T(8,128)}', space=vmem, size = 0x1000, scoped, tag = 'scratch operand']
  #allocation4 [shape = 'f32[8,8]{1,0:T(8,128)}', space=vmem, size = 0x1000, scoped, tag = 'scratch operand']
  %s0 = inlined_call_operand.vmem [shape: f32[2,8,4,1,8], index: 0, kind: input, shape index: {}]
  %s1 = inlined_call_operand.vmem [shape: f32[2,8,8,1,8], index: 1, kind: input, shape index: {}, may-alias: {1,2}]
  %s2 = inlined_call_operand.vmem [shape: f32[2,8,8,1,8], index: 2, kind: input, shape index: {}, may-alias: {1,2}]
  %s3 = inlined_call_operand.vmem [shape: f32[2,1,1,8], index: 3, kind: input, shape index: {}]
  %s4 = inlined_call_operand.vmem [shape: f32[2,8,4,1,8], index: 4, kind: output, shape index: {}]
  %s5 = sld [smem:[#allocation0]]
  $region217: #{decoder_forward.22} parent=0
    _
  %s7 = ssub.s32 1, %s5
  %s8 = scalar_select 0, %s7, %s5
  $region1: #{decoder_forward.22} parent=0
    #allocation5 [shape = 'u8[8192]{0}', space=vmem, size = 0x2000, scoped, tag = 'input window, operand 0']
    #allocation6 [shape = 'u8[8192]{0}', space=vmem, size = 0x2000, scoped, tag = 'input window, operand 1']
    #allocation7 [shape = 'u8[8192]{0}', space=vmem, size = 0x2000, scoped, tag = 'input window, operand 2']
    #allocation8 [shape = 'u8[8192]{0}', space=vmem, size = 0x2000, scoped, tag = 'output window, operand 0']
    loop: start=0, step=1, limit=10
    $region2: #{decoder_forward.22} parent=1 // loop_pre_header
      _
    $region3: #{decoder_forward.22} parent=1 // loop_header
      %s10 = sphi 0, %s14
      %p11 = scmp.ge.s32.totalorder %s10, 10
      %s17 = sphi 0, %s43
      %s18 = sphi 0, %s39
      %s19 = sphi 0, %s35
      %s20 = sphi 0, %s31
      %s21 = sphi 0, %s17
      %s22 = sphi 0, %s18
      %s23 = sphi 0, %s19
      %s24 = sphi 0, %s20
      %s25 = sphi 0, %s21
      %s26 = sphi 0, %s22
      %s27 = sphi 0, %s23
      %s28 = sphi 0, %s24
      %s50 = sphi 0, %s52
      %s53 = sphi 0, %s50
      %s54 = sphi 0, %s53
      %s70 = sphi 0, %s54
      %s80 = sphi 0, %s82
      %s83 = sphi 0, %s80
      %s84 = sphi 0, %s83
      %s100 = sphi 0, %s84
      %s112 = sphi 0, %s114
      %s115 = sphi 0, %s112
      %s116 = sphi 0, %s115
      %s132 = sphi 0, %s116
      %s140 = sphi 0, %s142
      %s143 = sphi 0, %s140
      %s144 = sphi 0, %s143
      %s160 = sphi 0, %s144
      %s170 = sphi 0, %s172
      %s173 = sphi 0, %s170
      %s174 = sphi 0, %s173
      %s190 = sphi 0, %s174
    $region4: #{decoder_forward.22} parent=1 // loop_header_branch
      %13 = sbr.rel (%p11) target = $region8
    $region5: #{decoder_forward.22} parent=1 // loop_body
      %s15 = ssub.s32 %s10, 1
      %s16 = ssub.s32 %s10, 2
      %s29 = sadd.s32 1, %s20
      %p30 = scmp.ge.s32.totalorder %s29, 1
      %s31 = scalar_select %p30, 0, %s29
      %s32 = sadd.s32 1, %s19
      %s33 = scalar_select %p30, %s32, %s19
      %p34 = scmp.ge.s32.totalorder %s33, 1
      %s35 = scalar_select %p34, 0, %s33
      %s36 = sadd.s32 1, %s18
      %s37 = scalar_select %p34, %s36, %s18
      %p38 = scmp.ge.s32.totalorder %s37, 4
      %s39 = scalar_select %p38, 0, %s37
      %s40 = sadd.s32 1, %s17
      %s41 = scalar_select %p38, %s40, %s17
      %p42 = scmp.ge.s32.totalorder %s41, 2
      %s43 = scalar_select %p42, 0, %s41
      %s44 = ssub.s32 %s17, %s43
      %s45 = ssub.s32 %s19, %s35
      %s46 = sor.u32 %s44, %s45
      %s47 = ssub.s32 %s18, %s39
      %s48 = sor.u32 %s46, %s47
      %p49 = scmp.eq.s32.totalorder %s48, 0
      %s51 = sadd.s32 %s50, 1
      %s52 = scalar_select %p49, %s50, %s51
      %p55 = pneg %p49
      %p56 = scmp.eq.s32.totalorder %s10, 7
      %p57 = por %p55, %p56
      %p58 = scmp.ne.s32.totalorder %s50, %s53
      %p59 = scmp.eq.s32.totalorder %s10, 0
      %p60 = por %p58, %p59
      %p61 = scmp.ne.s32.totalorder %s50, %s53
      %p62 = scmp.eq.s32.totalorder %s15, 7
      %p63 = por %p61, %p62
      %p64 = scmp.ne.s32.totalorder %s53, %s54
      %p65 = scmp.eq.s32.totalorder %s15, 0
      %p66 = por %p64, %p65
      %p67 = scmp.ne.s32.totalorder %s53, %s54
      %p68 = scmp.eq.s32.totalorder %s16, 7
      %p69 = por %p67, %p68
      %p71 = scmp.ne.s32.totalorder %s54, %s70
      %p72 = scmp.eq.s32.totalorder %s16, 0
      %p73 = por %p71, %p72
      %s74 = ssub.s32 %s17, %s43
      %s75 = ssub.s32 %s20, %s31
      %s76 = sor.u32 %s74, %s75
      %s77 = ssub.s32 %s18, %s39
      %s78 = sor.u32 %s76, %s77
      %p79 = scmp.eq.s32.totalorder %s78, 0
      %s81 = sadd.s32 %s80, 1
      %s82 = scalar_select %p79, %s80, %s81
      %p85 = pneg %p79
      %p86 = scmp.eq.s32.totalorder %s10, 7
      %p87 = por %p85, %p86
      %p88 = scmp.ne.s32.totalorder %s80, %s83
      %p89 = scmp.eq.s32.totalorder %s10, 0
      %p90 = por %p88, %p89
      %p91 = scmp.ne.s32.totalorder %s80, %s83
      %p92 = scmp.eq.s32.totalorder %s15, 7
      %p93 = por %p91, %p92
      %p94 = scmp.ne.s32.totalorder %s83, %s84
      %p95 = scmp.eq.s32.totalorder %s15, 0
      %p96 = por %p94, %p95
      %p97 = scmp.ne.s32.totalorder %s83, %s84
      %p98 = scmp.eq.s32.totalorder %s16, 7
      %p99 = por %p97, %p98
      %p101 = scmp.ne.s32.totalorder %s84, %s100
      %p102 = scmp.eq.s32.totalorder %s16, 0
      %p103 = por %p101, %p102
      %s104 = sadd.s32 %s18, 4
      %s105 = sadd.s32 %s39, 4
      %s106 = ssub.s32 %s17, %s43
      %s107 = ssub.s32 %s20, %s31
      %s108 = sor.u32 %s106, %s107
      %s109 = ssub.s32 %s104, %s105
      %s110 = sor.u32 %s108, %s109
      %p111 = scmp.eq.s32.totalorder %s110, 0
      %s113 = sadd.s32 %s112, 1
      %s114 = scalar_select %p111, %s112, %s113
      %p117 = pneg %p111
      %p118 = scmp.eq.s32.totalorder %s10, 7
      %p119 = por %p117, %p118
      %p120 = scmp.ne.s32.totalorder %s112, %s115
      %p121 = scmp.eq.s32.totalorder %s10, 0
      %p122 = por %p120, %p121
      %p123 = scmp.ne.s32.totalorder %s112, %s115
      %p124 = scmp.eq.s32.totalorder %s15, 7
      %p125 = por %p123, %p124
      %p126 = scmp.ne.s32.totalorder %s115, %s116
      %p127 = scmp.eq.s32.totalorder %s15, 0
      %p128 = por %p126, %p127
      %p129 = scmp.ne.s32.totalorder %s115, %s116
      %p130 = scmp.eq.s32.totalorder %s16, 7
      %p131 = por %p129, %p130
      %p133 = scmp.ne.s32.totalorder %s116, %s132
      %p134 = scmp.eq.s32.totalorder %s16, 0
      %p135 = por %p133, %p134
      %s136 = ssub.s32 %s17, %s43
      %s137 = ssub.s32 %s20, %s31
      %s138 = sor.u32 %s136, %s137
      %p139 = scmp.eq.s32.totalorder %s138, 0
      %s141 = sadd.s32 %s140, 1
      %s142 = scalar_select %p139, %s140, %s141
      %p145 = pneg %p139
      %p146 = scmp.eq.s32.totalorder %s10, 7
      %p147 = por %p145, %p146
      %p148 = scmp.ne.s32.totalorder %s140, %s143
      %p149 = scmp.eq.s32.totalorder %s10, 0
      %p150 = por %p148, %p149
      %p151 = scmp.ne.s32.totalorder %s140, %s143
      %p152 = scmp.eq.s32.totalorder %s15, 7
      %p153 = por %p151, %p152
      %p154 = scmp.ne.s32.totalorder %s143, %s144
      %p155 = scmp.eq.s32.totalorder %s15, 0
      %p156 = por %p154, %p155
      %p157 = scmp.ne.s32.totalorder %s143, %s144
      %p158 = scmp.eq.s32.totalorder %s16, 7
      %p159 = por %p157, %p158
      %p161 = scmp.ne.s32.totalorder %s144, %s160
      %p162 = scmp.eq.s32.totalorder %s16, 0
      %p163 = por %p161, %p162
      %s164 = ssub.s32 %s17, %s43
      %s165 = ssub.s32 %s19, %s35
      %s166 = sor.u32 %s164, %s165
      %s167 = ssub.s32 %s18, %s39
      %s168 = sor.u32 %s166, %s167
      %p169 = scmp.eq.s32.totalorder %s168, 0
      %s171 = sadd.s32 %s170, 1
      %s172 = scalar_select %p169, %s170, %s171
      %p175 = pneg %p169
      %p176 = scmp.eq.s32.totalorder %s10, 7
      %p177 = por %p175, %p176
      %p178 = scmp.ne.s32.totalorder %s170, %s173
      %p179 = scmp.eq.s32.totalorder %s10, 0
      %p180 = por %p178, %p179
      %p181 = scmp.ne.s32.totalorder %s170, %s173
      %p182 = scmp.eq.s32.totalorder %s15, 7
      %p183 = por %p181, %p182
      %p184 = scmp.ne.s32.totalorder %s173, %s174
      %p185 = scmp.eq.s32.totalorder %s15, 0
      %p186 = por %p184, %p185
      %p187 = scmp.ne.s32.totalorder %s173, %s174
      %p188 = scmp.eq.s32.totalorder %s16, 7
      %p189 = por %p187, %p188
      %p191 = scmp.ne.s32.totalorder %s174, %s190
      %p192 = scmp.eq.s32.totalorder %s16, 0
      %p193 = por %p191, %p192
      %p194 = scmp.le.s32.totalorder 1, %s10
      %p195 = scmp.lt.s32.totalorder %s10, 9
      %p196 = pnand %p194, %p195
      %p197 = pneg %p196
      // Predicated region
      $region9: #{decoder_forward.22} parent=5 // pred_check
        _
      $region10: #{decoder_forward.22} parent=5 // pred_check_branch
        %199 = sbr.rel (%p196) target = $region12
      $region11: #{decoder_forward.22} parent=5 // pred_region
        %s200 = ssub.s32 %s10, 1
      $region12: #{decoder_forward.22} parent=5 // pred_fallthru
        _
      %p201 = scmp.lt.s32.totalorder %s10, 8
      // Predicated region
      $region13: #{decoder_forward.22} parent=5 // pred_check
        %p202 = pneg %p201
      $region14: #{decoder_forward.22} parent=5 // pred_check_branch
        %204 = sbr.rel (%p202) target = $region16
      $region15: #{decoder_forward.22} parent=5 // pred_region
        // Predicated region
        $region17: #{decoder_forward.22} parent=15 // pred_check
          %p205 = pneg %p60
        $region18: #{decoder_forward.22} parent=15 // pred_check_branch
          %207 = sbr.rel (%p205) target = $region20
        $region19: #{decoder_forward.22} parent=15 // pred_region
          %s208 = sand.u32 %s50, 1
          %s209 = sand.u32 %s50, 1
          %s210 = smul.addr %s209, 8
          %s211 = scalar_lea.vmem [#allocation5], %s210
          %s212 = smul.u32 8, %s19
          %s213 = smul.addr %s212, 4
          %s214 = sadd.s32 %s18, %s213
          %s215 = smul.addr %s17, 32
          %s216 = sadd.s32 %s214, %s215
          %s217 = scalar_lea.vmem %s0, %s216
          // Predicated region
          $region21: #{decoder_forward.22} parent=19 // pred_check
            _
          $region22: #{decoder_forward.22} parent=19 // pred_check_branch
            %219 = sbr.rel (0) target = $region24
          $region23: #{decoder_forward.22} parent=19 // pred_region
            // Predicated region
            $region25: #{decoder_forward.22} parent=23 // pred_check
              _
            $region26: #{decoder_forward.22} parent=23 // pred_check_branch
              %221 = sbr.rel target = $region28
            $region27: #{decoder_forward.22} parent=23 // pred_region
              // Predicated region
              $region40: #{decoder_forward.22} parent=27 // pred_check
                _
              $region41: #{decoder_forward.22} parent=27 // pred_check_branch
                %251 = sbr.rel (0) target = $region43
              $region42: #{decoder_forward.22} parent=27 // pred_region
                loop: start=0, step=1, limit=1
                $region44: #{decoder_forward.22} parent=42 // loop_pre_header
                  _
                $region45: #{decoder_forward.22} parent=42 // loop_header
                  %s253 = sphi 0, %s257
                  %p254 = scmp.ge.s32.totalorder %s253, 1
                  %s258 = sphi %s217, %s217
                  %s259 = sphi %s211, %s211
                $region46: #{decoder_forward.22} parent=42 // loop_header_branch
                  %256 = sbr.rel (%p254) target = $region50
                $region47: #{decoder_forward.22} parent=42 // loop_body
                  _
                $region48: #{decoder_forward.22} parent=42 // loop_footer
                  %s257 = sadd.s32 1, %s253
                $region49: #{decoder_forward.22} parent=42 // loop_footer_branch
                  %252 = sbr.rel target = $region45
                $region50: #{decoder_forward.22} parent=42 // loop_exit
                  _
                %s261 = ssub.s32 2, 1
                loop: start=0, step=1, limit=1
                $region51: #{decoder_forward.22} parent=42 // loop_pre_header
                  _
                $region52: #{decoder_forward.22} parent=42 // loop_header
                  %s263 = sphi 0, %s267
                  %p264 = scmp.ge.s32.totalorder %s263, 1
                  %s268 = sphi %s217, %s217
                  %s269 = sphi %s211, %s211
                $region53: #{decoder_forward.22} parent=42 // loop_header_branch
                  %266 = sbr.rel (%p264) target = $region57
                $region54: #{decoder_forward.22} parent=42 // loop_body
                  %v270 = vld [vmem:[%s268] sm:%s261]
                  %271 = vst [vmem:[%s269] sm:%s261] %v270
                  %v272 = vld [vmem:[%s268 + $0x4] sm:%s261]
                  %273 = vst [vmem:[%s269 + $0x1] sm:%s261] %v272
                  %v274 = vld [vmem:[%s268 + $0x8] sm:%s261]
                  %275 = vst [vmem:[%s269 + $0x2] sm:%s261] %v274
                  %v276 = vld [vmem:[%s268 + $0xc] sm:%s261]
                  %277 = vst [vmem:[%s269 + $0x3] sm:%s261] %v276
                  %v278 = vld [vmem:[%s268 + $0x10] sm:%s261]
                  %279 = vst [vmem:[%s269 + $0x4] sm:%s261] %v278
                  %v280 = vld [vmem:[%s268 + $0x14] sm:%s261]
                  %281 = vst [vmem:[%s269 + $0x5] sm:%s261] %v280
                  %v282 = vld [vmem:[%s268 + $0x18] sm:%s261]
                  %283 = vst [vmem:[%s269 + $0x6] sm:%s261] %v282
                  %v284 = vld [vmem:[%s268 + $0x1c] sm:%s261]
                  %285 = vst [vmem:[%s269 + $0x7] sm:%s261] %v284
                $region55: #{decoder_forward.22} parent=42 // loop_footer
                  %s267 = sadd.s32 1, %s263
                $region56: #{decoder_forward.22} parent=42 // loop_footer_branch
                  %262 = sbr.rel target = $region52
                $region57: #{decoder_forward.22} parent=42 // loop_exit
                  _
              $region43: #{decoder_forward.22} parent=27 // pred_fallthru
                _
            $region28: #{decoder_forward.22} parent=23 // pred_fallthru
              _
            // Predicated region
            $region29: #{decoder_forward.22} parent=23 // pred_check
              _
            $region30: #{decoder_forward.22} parent=23 // pred_check_branch
              %223 = sbr.rel (0) target = $region32
            $region31: #{decoder_forward.22} parent=23 // pred_region
              %s225 = ssub.s32 2, 1
              loop: start=0, step=1, limit=1
              $region33: #{decoder_forward.22} parent=31 // loop_pre_header
                _
              $region34: #{decoder_forward.22} parent=31 // loop_header
                %s227 = sphi 0, %s231
                %p228 = scmp.ge.s32.totalorder %s227, 1
                %s232 = sphi %s217, %s217
                %s233 = sphi %s211, %s211
              $region35: #{decoder_forward.22} parent=31 // loop_header_branch
                %230 = sbr.rel (%p228) target = $region39
              $region36: #{decoder_forward.22} parent=31 // loop_body
                %v234 = vld [vmem:[%s232] sm:%s225]
                %235 = vst [vmem:[%s233] sm:%s225] %v234
                %v236 = vld [vmem:[%s232 + $0x4] sm:%s225]
                %237 = vst [vmem:[%s233 + $0x1] sm:%s225] %v236
                %v238 = vld [vmem:[%s232 + $0x8] sm:%s225]
                %239 = vst [vmem:[%s233 + $0x2] sm:%s225] %v238
                %v240 = vld [vmem:[%s232 + $0xc] sm:%s225]
                %241 = vst [vmem:[%s233 + $0x3] sm:%s225] %v240
                %v242 = vld [vmem:[%s232 + $0x10] sm:%s225]
                %243 = vst [vmem:[%s233 + $0x4] sm:%s225] %v242
                %v244 = vld [vmem:[%s232 + $0x14] sm:%s225]
                %245 = vst [vmem:[%s233 + $0x5] sm:%s225] %v244
                %v246 = vld [vmem:[%s232 + $0x18] sm:%s225]
                %247 = vst [vmem:[%s233 + $0x6] sm:%s225] %v246
                %v248 = vld [vmem:[%s232 + $0x1c] sm:%s225]
                %249 = vst [vmem:[%s233 + $0x7] sm:%s225] %v248
              $region37: #{decoder_forward.22} parent=31 // loop_footer
                %s231 = sadd.s32 1, %s227
              $region38: #{decoder_forward.22} parent=31 // loop_footer_branch
                %226 = sbr.rel target = $region34
              $region39: #{decoder_forward.22} parent=31 // loop_exit
                _
            $region32: #{decoder_forward.22} parent=23 // pred_fallthru
              _
          $region24: #{decoder_forward.22} parent=19 // pred_fallthru
            _
          %286 = vnop
        $region20: #{decoder_forward.22} parent=15 // pred_fallthru
          _
        // Predicated region
        $region58: #{decoder_forward.22} parent=15 // pred_check
          %p287 = pneg %p90
        $region59: #{decoder_forward.22} parent=15 // pred_check_branch
          %289 = sbr.rel (%p287) target = $region61
        $region60: #{decoder_forward.22} parent=15 // pred_region
          %s290 = sand.u32 %s80, 1
          %s291 = sand.u32 %s80, 1
          %s292 = smul.addr %s291, 8
          %s293 = scalar_lea.vmem [#allocation6], %s292
          %s294 = smul.u32 8, %s20
          %s295 = smul.addr %s294, 8
          %s296 = sadd.s32 %s18, %s295
          %s297 = smul.addr %s17, 64
          %s298 = sadd.s32 %s296, %s297
          %s299 = scalar_lea.vmem %s1, %s298
          // Predicated region
          $region62: #{decoder_forward.22} parent=60 // pred_check
            _
          $region63: #{decoder_forward.22} parent=60 // pred_check_branch
            %301 = sbr.rel (0) target = $region65
          $region64: #{decoder_forward.22} parent=60 // pred_region
            // Predicated region
            $region66: #{decoder_forward.22} parent=64 // pred_check
              _
            $region67: #{decoder_forward.22} parent=64 // pred_check_branch
              %303 = sbr.rel target = $region69
            $region68: #{decoder_forward.22} parent=64 // pred_region
              // Predicated region
              $region81: #{decoder_forward.22} parent=68 // pred_check
                _
              $region82: #{decoder_forward.22} parent=68 // pred_check_branch
                %333 = sbr.rel (0) target = $region84
              $region83: #{decoder_forward.22} parent=68 // pred_region
                loop: start=0, step=1, limit=1
                $region85: #{decoder_forward.22} parent=83 // loop_pre_header
                  _
                $region86: #{decoder_forward.22} parent=83 // loop_header
                  %s335 = sphi 0, %s339
                  %p336 = scmp.ge.s32.totalorder %s335, 1
                  %s340 = sphi %s299, %s299
                  %s341 = sphi %s293, %s293
                $region87: #{decoder_forward.22} parent=83 // loop_header_branch
                  %338 = sbr.rel (%p336) target = $region91
                $region88: #{decoder_forward.22} parent=83 // loop_body
                  _
                $region89: #{decoder_forward.22} parent=83 // loop_footer
                  %s339 = sadd.s32 1, %s335
                $region90: #{decoder_forward.22} parent=83 // loop_footer_branch
                  %334 = sbr.rel target = $region86
                $region91: #{decoder_forward.22} parent=83 // loop_exit
                  _
                %s343 = ssub.s32 2, 1
                loop: start=0, step=1, limit=1
                $region92: #{decoder_forward.22} parent=83 // loop_pre_header
                  _
                $region93: #{decoder_forward.22} parent=83 // loop_header
                  %s345 = sphi 0, %s349
                  %p346 = scmp.ge.s32.totalorder %s345, 1
                  %s350 = sphi %s299, %s299
                  %s351 = sphi %s293, %s293
                $region94: #{decoder_forward.22} parent=83 // loop_header_branch
                  %348 = sbr.rel (%p346) target = $region98
                $region95: #{decoder_forward.22} parent=83 // loop_body
                  %v352 = vld [vmem:[%s350] sm:%s343]
                  %353 = vst [vmem:[%s351] sm:%s343] %v352
                  %v354 = vld [vmem:[%s350 + $0x8] sm:%s343]
                  %355 = vst [vmem:[%s351 + $0x1] sm:%s343] %v354
                  %v356 = vld [vmem:[%s350 + $0x10] sm:%s343]
                  %357 = vst [vmem:[%s351 + $0x2] sm:%s343] %v356
                  %v358 = vld [vmem:[%s350 + $0x18] sm:%s343]
                  %359 = vst [vmem:[%s351 + $0x3] sm:%s343] %v358
                  %v360 = vld [vmem:[%s350 + $0x20] sm:%s343]
                  %361 = vst [vmem:[%s351 + $0x4] sm:%s343] %v360
                  %v362 = vld [vmem:[%s350 + $0x28] sm:%s343]
                  %363 = vst [vmem:[%s351 + $0x5] sm:%s343] %v362
                  %v364 = vld [vmem:[%s350 + $0x30] sm:%s343]
                  %365 = vst [vmem:[%s351 + $0x6] sm:%s343] %v364
                  %v366 = vld [vmem:[%s350 + $0x38] sm:%s343]
                  %367 = vst [vmem:[%s351 + $0x7] sm:%s343] %v366
                $region96: #{decoder_forward.22} parent=83 // loop_footer
                  %s349 = sadd.s32 1, %s345
                $region97: #{decoder_forward.22} parent=83 // loop_footer_branch
                  %344 = sbr.rel target = $region93
                $region98: #{decoder_forward.22} parent=83 // loop_exit
                  _
              $region84: #{decoder_forward.22} parent=68 // pred_fallthru
                _
            $region69: #{decoder_forward.22} parent=64 // pred_fallthru
              _
            // Predicated region
            $region70: #{decoder_forward.22} parent=64 // pred_check
              _
            $region71: #{decoder_forward.22} parent=64 // pred_check_branch
              %305 = sbr.rel (0) target = $region73
            $region72: #{decoder_forward.22} parent=64 // pred_region
              %s307 = ssub.s32 2, 1
              loop: start=0, step=1, limit=1
              $region74: #{decoder_forward.22} parent=72 // loop_pre_header
                _
              $region75: #{decoder_forward.22} parent=72 // loop_header
                %s309 = sphi 0, %s313
                %p310 = scmp.ge.s32.totalorder %s309, 1
                %s314 = sphi %s299, %s299
                %s315 = sphi %s293, %s293
              $region76: #{decoder_forward.22} parent=72 // loop_header_branch
                %312 = sbr.rel (%p310) target = $region80
              $region77: #{decoder_forward.22} parent=72 // loop_body
                %v316 = vld [vmem:[%s314] sm:%s307]
                %317 = vst [vmem:[%s315] sm:%s307] %v316
                %v318 = vld [vmem:[%s314 + $0x8] sm:%s307]
                %319 = vst [vmem:[%s315 + $0x1] sm:%s307] %v318
                %v320 = vld [vmem:[%s314 + $0x10] sm:%s307]
                %321 = vst [vmem:[%s315 + $0x2] sm:%s307] %v320
                %v322 = vld [vmem:[%s314 + $0x18] sm:%s307]
                %323 = vst [vmem:[%s315 + $0x3] sm:%s307] %v322
                %v324 = vld [vmem:[%s314 + $0x20] sm:%s307]
                %325 = vst [vmem:[%s315 + $0x4] sm:%s307] %v324
                %v326 = vld [vmem:[%s314 + $0x28] sm:%s307]
                %327 = vst [vmem:[%s315 + $0x5] sm:%s307] %v326
                %v328 = vld [vmem:[%s314 + $0x30] sm:%s307]
                %329 = vst [vmem:[%s315 + $0x6] sm:%s307] %v328
                %v330 = vld [vmem:[%s314 + $0x38] sm:%s307]
                %331 = vst [vmem:[%s315 + $0x7] sm:%s307] %v330
              $region78: #{decoder_forward.22} parent=72 // loop_footer
                %s313 = sadd.s32 1, %s309
              $region79: #{decoder_forward.22} parent=72 // loop_footer_branch
                %308 = sbr.rel target = $region75
              $region80: #{decoder_forward.22} parent=72 // loop_exit
                _
            $region73: #{decoder_forward.22} parent=64 // pred_fallthru
              _
          $region65: #{decoder_forward.22} parent=60 // pred_fallthru
            _
          %368 = vnop
        $region61: #{decoder_forward.22} parent=15 // pred_fallthru
          _
        // Predicated region
        $region99: #{decoder_forward.22} parent=15 // pred_check
          %p369 = pneg %p122
        $region100: #{decoder_forward.22} parent=15 // pred_check_branch
          %371 = sbr.rel (%p369) target = $region102
        $region101: #{decoder_forward.22} parent=15 // pred_region
          %s372 = sand.u32 %s112, 1
          %s373 = sand.u32 %s112, 1
          %s374 = smul.addr %s373, 8
          %s375 = scalar_lea.vmem [#allocation7], %s374
          %s376 = sadd.s32 %s18, 4
          %s377 = smul.u32 8, %s20
          %s378 = smul.addr %s377, 8
          %s379 = sadd.s32 %s376, %s378
          %s380 = smul.addr %s17, 64
          %s381 = sadd.s32 %s379, %s380
          %s382 = scalar_lea.vmem %s2, %s381
          // Predicated region
          $region103: #{decoder_forward.22} parent=101 // pred_check
            _
          $region104: #{decoder_forward.22} parent=101 // pred_check_branch
            %384 = sbr.rel (0) target = $region106
          $region105: #{decoder_forward.22} parent=101 // pred_region
            // Predicated region
            $region107: #{decoder_forward.22} parent=105 // pred_check
              _
            $region108: #{decoder_forward.22} parent=105 // pred_check_branch
              %386 = sbr.rel target = $region110
            $region109: #{decoder_forward.22} parent=105 // pred_region
              // Predicated region
              $region122: #{decoder_forward.22} parent=109 // pred_check
                _
              $region123: #{decoder_forward.22} parent=109 // pred_check_branch
                %416 = sbr.rel (0) target = $region125
              $region124: #{decoder_forward.22} parent=109 // pred_region
                loop: start=0, step=1, limit=1
                $region126: #{decoder_forward.22} parent=124 // loop_pre_header
                  _
                $region127: #{decoder_forward.22} parent=124 // loop_header
                  %s418 = sphi 0, %s422
                  %p419 = scmp.ge.s32.totalorder %s418, 1
                  %s423 = sphi %s382, %s382
                  %s424 = sphi %s375, %s375
                $region128: #{decoder_forward.22} parent=124 // loop_header_branch
                  %421 = sbr.rel (%p419) target = $region132
                $region129: #{decoder_forward.22} parent=124 // loop_body
                  _
                $region130: #{decoder_forward.22} parent=124 // loop_footer
                  %s422 = sadd.s32 1, %s418
                $region131: #{decoder_forward.22} parent=124 // loop_footer_branch
                  %417 = sbr.rel target = $region127
                $region132: #{decoder_forward.22} parent=124 // loop_exit
                  _
                %s426 = ssub.s32 2, 1
                loop: start=0, step=1, limit=1
                $region133: #{decoder_forward.22} parent=124 // loop_pre_header
                  _
                $region134: #{decoder_forward.22} parent=124 // loop_header
                  %s428 = sphi 0, %s432
                  %p429 = scmp.ge.s32.totalorder %s428, 1
                  %s433 = sphi %s382, %s382
                  %s434 = sphi %s375, %s375
                $region135: #{decoder_forward.22} parent=124 // loop_header_branch
                  %431 = sbr.rel (%p429) target = $region139
                $region136: #{decoder_forward.22} parent=124 // loop_body
                  %v435 = vld [vmem:[%s433] sm:%s426]
                  %436 = vst [vmem:[%s434] sm:%s426] %v435
                  %v437 = vld [vmem:[%s433 + $0x8] sm:%s426]
                  %438 = vst [vmem:[%s434 + $0x1] sm:%s426] %v437
                  %v439 = vld [vmem:[%s433 + $0x10] sm:%s426]
                  %440 = vst [vmem:[%s434 + $0x2] sm:%s426] %v439
                  %v441 = vld [vmem:[%s433 + $0x18] sm:%s426]
                  %442 = vst [vmem:[%s434 + $0x3] sm:%s426] %v441
                  %v443 = vld [vmem:[%s433 + $0x20] sm:%s426]
                  %444 = vst [vmem:[%s434 + $0x4] sm:%s426] %v443
                  %v445 = vld [vmem:[%s433 + $0x28] sm:%s426]
                  %446 = vst [vmem:[%s434 + $0x5] sm:%s426] %v445
                  %v447 = vld [vmem:[%s433 + $0x30] sm:%s426]
                  %448 = vst [vmem:[%s434 + $0x6] sm:%s426] %v447
                  %v449 = vld [vmem:[%s433 + $0x38] sm:%s426]
                  %450 = vst [vmem:[%s434 + $0x7] sm:%s426] %v449
                $region137: #{decoder_forward.22} parent=124 // loop_footer
                  %s432 = sadd.s32 1, %s428
                $region138: #{decoder_forward.22} parent=124 // loop_footer_branch
                  %427 = sbr.rel target = $region134
                $region139: #{decoder_forward.22} parent=124 // loop_exit
                  _
              $region125: #{decoder_forward.22} parent=109 // pred_fallthru
                _
            $region110: #{decoder_forward.22} parent=105 // pred_fallthru
              _
            // Predicated region
            $region111: #{decoder_forward.22} parent=105 // pred_check
              _
            $region112: #{decoder_forward.22} parent=105 // pred_check_branch
              %388 = sbr.rel (0) target = $region114
            $region113: #{decoder_forward.22} parent=105 // pred_region
              %s390 = ssub.s32 2, 1
              loop: start=0, step=1, limit=1
              $region115: #{decoder_forward.22} parent=113 // loop_pre_header
                _
              $region116: #{decoder_forward.22} parent=113 // loop_header
                %s392 = sphi 0, %s396
                %p393 = scmp.ge.s32.totalorder %s392, 1
                %s397 = sphi %s382, %s382
                %s398 = sphi %s375, %s375
              $region117: #{decoder_forward.22} parent=113 // loop_header_branch
                %395 = sbr.rel (%p393) target = $region121
              $region118: #{decoder_forward.22} parent=113 // loop_body
                %v399 = vld [vmem:[%s397] sm:%s390]
                %400 = vst [vmem:[%s398] sm:%s390] %v399
                %v401 = vld [vmem:[%s397 + $0x8] sm:%s390]
                %402 = vst [vmem:[%s398 + $0x1] sm:%s390] %v401
                %v403 = vld [vmem:[%s397 + $0x10] sm:%s390]
                %404 = vst [vmem:[%s398 + $0x2] sm:%s390] %v403
                %v405 = vld [vmem:[%s397 + $0x18] sm:%s390]
                %406 = vst [vmem:[%s398 + $0x3] sm:%s390] %v405
                %v407 = vld [vmem:[%s397 + $0x20] sm:%s390]
                %408 = vst [vmem:[%s398 + $0x4] sm:%s390] %v407
                %v409 = vld [vmem:[%s397 + $0x28] sm:%s390]
                %410 = vst [vmem:[%s398 + $0x5] sm:%s390] %v409
                %v411 = vld [vmem:[%s397 + $0x30] sm:%s390]
                %412 = vst [vmem:[%s398 + $0x6] sm:%s390] %v411
                %v413 = vld [vmem:[%s397 + $0x38] sm:%s390]
                %414 = vst [vmem:[%s398 + $0x7] sm:%s390] %v413
              $region119: #{decoder_forward.22} parent=113 // loop_footer
                %s396 = sadd.s32 1, %s392
              $region120: #{decoder_forward.22} parent=113 // loop_footer_branch
                %391 = sbr.rel target = $region116
              $region121: #{decoder_forward.22} parent=113 // loop_exit
                _
            $region114: #{decoder_forward.22} parent=105 // pred_fallthru
              _
          $region106: #{decoder_forward.22} parent=101 // pred_fallthru
            _
          %451 = vnop
        $region102: #{decoder_forward.22} parent=15 // pred_fallthru
          _
        // Predicated region
        $region140: #{decoder_forward.22} parent=15 // pred_check
          %p452 = pneg %p150
        $region141: #{decoder_forward.22} parent=15 // pred_check_branch
          %454 = sbr.rel (%p452) target = $region143
        $region142: #{decoder_forward.22} parent=15 // pred_region
          %p455 = scmp.lt.s32.totalorder %s17, 1
          %s456 = scalar_select %p455, %s17, 1
          %p457 = scmp.lt.s32.totalorder %s20, 0
          %s458 = scalar_select %p457, %s20, 0
          %s459 = sadd.s32 %s458, %s456
          %s460 = scalar_lea.vmem %s3, %s459
        $region143: #{decoder_forward.22} parent=15 // pred_fallthru
          _
      $region16: #{decoder_forward.22} parent=5 // pred_fallthru
        _
      %p461 = scmp.le.s32.totalorder 1, %s10
      %p462 = scmp.lt.s32.totalorder %s10, 9
      %p463 = pnand %p461, %p462
      %p464 = pneg %p463
      // Predicated region
      $region144: #{decoder_forward.22} parent=5 // pred_check
        _
      $region145: #{decoder_forward.22} parent=5 // pred_check_branch
        %466 = sbr.rel (%p463) target = $region147
      $region146: #{decoder_forward.22} parent=5 // pred_region
        %s467 = ssub.s32 %s10, 1
        %s468 = sand.u32 %s53, 1
        %s469 = sand.u32 %s53, 1
        %s470 = smul.addr %s469, 8
        %s471 = scalar_lea.vmem [#allocation5], %s470
        // Predicated region
        $region148: #{decoder_forward.22} parent=146 // pred_check
          %p472 = pneg %p66
        $region149: #{decoder_forward.22} parent=146 // pred_check_branch
          %474 = sbr.rel (%p472) target = $region151
        $region150: #{decoder_forward.22} parent=146 // pred_region
          _
        $region151: #{decoder_forward.22} parent=146 // pred_fallthru
          _
        %s475 = sand.u32 %s83, 1
        %s476 = sand.u32 %s83, 1
        %s477 = smul.addr %s476, 8
        %s478 = scalar_lea.vmem [#allocation6], %s477
        // Predicated region
        $region152: #{decoder_forward.22} parent=146 // pred_check
          %p479 = pneg %p96
        $region153: #{decoder_forward.22} parent=146 // pred_check_branch
          %481 = sbr.rel (%p479) target = $region155
        $region154: #{decoder_forward.22} parent=146 // pred_region
          _
        $region155: #{decoder_forward.22} parent=146 // pred_fallthru
          _
        %s482 = sand.u32 %s115, 1
        %s483 = sand.u32 %s115, 1
        %s484 = smul.addr %s483, 8
        %s485 = scalar_lea.vmem [#allocation7], %s484
        // Predicated region
        $region156: #{decoder_forward.22} parent=146 // pred_check
          %p486 = pneg %p128
        $region157: #{decoder_forward.22} parent=146 // pred_check_branch
          %488 = sbr.rel (%p486) target = $region159
        $region158: #{decoder_forward.22} parent=146 // pred_region
          _
        $region159: #{decoder_forward.22} parent=146 // pred_fallthru
          _
        %s489 = sand.u32 %s53, 1
        %s490 = sand.u32 %s53, 1
        %s491 = smul.addr %s490, 8
        %s492 = scalar_lea.vmem [#allocation5], %s491
        %p493 = pneg %p66
        %p494 = pneg %p63
        %s495 = sand.u32 %s83, 1
        %s496 = sand.u32 %s83, 1
        %s497 = smul.addr %s496, 8
        %s498 = scalar_lea.vmem [#allocation6], %s497
        %p499 = pneg %p96
        %p500 = pneg %p93
        %s501 = sand.u32 %s115, 1
        %s502 = sand.u32 %s115, 1
        %s503 = smul.addr %s502, 8
        %s504 = scalar_lea.vmem [#allocation7], %s503
        %p505 = pneg %p128
        %p506 = pneg %p125
        %p507 = scmp.lt.s32.totalorder %s21, 1
        %s508 = scalar_select %p507, %s21, 1
        %p509 = scmp.lt.s32.totalorder %s24, 0
        %s510 = scalar_select %p509, %s24, 0
        %s511 = sadd.s32 %s510, %s508
        %s512 = scalar_lea.vmem %s3, %s511
        %p513 = pneg %p156
        %p514 = pneg %p153
        %p515 = pneg %p186
        %p516 = pneg %p183
        %s517 = sand.u32 %s173, 1
        %s518 = sand.u32 %s173, 1
        %s519 = smul.addr %s518, 8
        %s520 = scalar_lea.vmem [#allocation8], %s519
        %s521 = smul.u32 8, %s23
        %s522 = smul.u32 8, %s24
        %s523 = sadd.s32 %s22, 4
        %s524 = smul.u32 8, %s24
        %p525 = scmp.lt.s32.totalorder %s21, 1
        %s526 = scalar_select %p525, %s21, 1
        %p527 = scmp.lt.s32.totalorder %s24, 0
        %s528 = scalar_select %p527, %s24, 0
        %s529 = sadd.s32 %s528, %s526
        %s530 = scalar_lea.vmem %s3, %s529
        %s531 = smul.u32 8, %s23
        %p532 = scmp.eq.s32.totalorder %s24, 0
        // Predicated region
        $region160: #{decoder_forward.22} parent=146 // pred_check
          %p533 = pneg %p532
        $region161: #{decoder_forward.22} parent=146 // pred_check_branch
          %535 = sbr.rel (%p533) target = $region163
        $region162: #{decoder_forward.22} parent=146 // pred_region
          %vm536 = vcmask 7168
          %537 = vst.msk [vmem:[#allocation2] sm:$0xff] %vm536, -inf
          %538 = vst.msk [vmem:[#allocation3] sm:$0xff] %vm536, 0.0
          %vm539 = vcmask 64512
          %540 = vst.msk [vmem:[#allocation4] sm:$0xff] %vm539, 0.0
        $region163: #{decoder_forward.22} parent=146 // pred_fallthru
          _
        %v541 = vld [vmem:[%s471] sm:$0x1]
        %v542 = vld [vmem:[%s471 + $0x1] sm:$0x1]
        %v543 = vld [vmem:[%s471 + $0x2] sm:$0x1]
        %v544 = vld [vmem:[%s471 + $0x3] sm:$0x1]
        %v545 = vld [vmem:[%s471 + $0x4] sm:$0x1]
        %v546 = vld [vmem:[%s471 + $0x5] sm:$0x1]
        %v547 = vld [vmem:[%s471 + $0x6] sm:$0x1]
        %v548 = vld [vmem:[%s471 + $0x7] sm:$0x1]
        %v549 = vld [vmem:[%s478] sm:$0x1]
        %v550 = vld [vmem:[%s478 + $0x1] sm:$0x1]
        %v551 = vld [vmem:[%s478 + $0x2] sm:$0x1]
        %v552 = vld [vmem:[%s478 + $0x3] sm:$0x1]
        %v553 = vld [vmem:[%s478 + $0x4] sm:$0x1]
        %v554 = vld [vmem:[%s478 + $0x5] sm:$0x1]
        %v555 = vld [vmem:[%s478 + $0x6] sm:$0x1]
        %v556 = vld [vmem:[%s478 + $0x7] sm:$0x1]
        %v557 = vld [vmem:[%s485] sm:$0x1]
        %v558 = vld [vmem:[%s485 + $0x1] sm:$0x1]
        %v559 = vld [vmem:[%s485 + $0x2] sm:$0x1]
        %v560 = vld [vmem:[%s485 + $0x3] sm:$0x1]
        %v561 = vld [vmem:[%s485 + $0x4] sm:$0x1]
        %v562 = vld [vmem:[%s485 + $0x5] sm:$0x1]
        %v563 = vld [vmem:[%s485 + $0x6] sm:$0x1]
        %v564 = vld [vmem:[%s485 + $0x7] sm:$0x1]
        %v565 = vld [vmem:[%s530] sm:$0x1]
        %574 = vst [vmem:[#allocation1] ss:$9 sm:$0xff] %v541
        %s575 = scalar_lea.vmem [#allocation1], 1
        %576 = vst [vmem:[%s575] ss:$9 sm:$0xff] %v542
        %s577 = scalar_lea.vmem [#allocation1], 2
        %578 = vst [vmem:[%s577] ss:$9 sm:$0xff] %v543
        %s579 = scalar_lea.vmem [#allocation1], 3
        %580 = vst [vmem:[%s579] ss:$9 sm:$0xff] %v544
        %s581 = scalar_lea.vmem [#allocation1], 4
        %582 = vst [vmem:[%s581] ss:$9 sm:$0xff] %v545
        %s583 = scalar_lea.vmem [#allocation1], 5
        %584 = vst [vmem:[%s583] ss:$9 sm:$0xff] %v546
        %s585 = scalar_lea.vmem [#allocation1], 6
        %586 = vst [vmem:[%s585] ss:$9 sm:$0xff] %v547
        %s587 = scalar_lea.vmem [#allocation1], 7
        %588 = vst [vmem:[%s587] ss:$9 sm:$0xff] %v548
        %v589 = vld [vmem:[#allocation1] sm:$0xff]
        %598 = vst [vmem:[#allocation1] ss:$9 sm:$0xff] %v549
        %s599 = scalar_lea.vmem [#allocation1], 1
        %600 = vst [vmem:[%s599] ss:$9 sm:$0xff] %v550
        %s601 = scalar_lea.vmem [#allocation1], 2
        %602 = vst [vmem:[%s601] ss:$9 sm:$0xff] %v551
        %s603 = scalar_lea.vmem [#allocation1], 3
        %604 = vst [vmem:[%s603] ss:$9 sm:$0xff] %v552
        %s605 = scalar_lea.vmem [#allocation1], 4
        %606 = vst [vmem:[%s605] ss:$9 sm:$0xff] %v553
        %s607 = scalar_lea.vmem [#allocation1], 5
        %608 = vst [vmem:[%s607] ss:$9 sm:$0xff] %v554
        %s609 = scalar_lea.vmem [#allocation1], 6
        %610 = vst [vmem:[%s609] ss:$9 sm:$0xff] %v555
        %s611 = scalar_lea.vmem [#allocation1], 7
        %612 = vst [vmem:[%s611] ss:$9 sm:$0xff] %v556
        %v613 = vld [vmem:[#allocation1] sm:$0xff]
        %vm614 = vcmask 64512
        %v615 = vsel %vm614, %v589, 0
        %v617 = vsel %vm614, %v613, 0
        %619 = vmatpush.xpose.msra.mxu0 0.0
        %620 = vmatpush.xpose.msra.mxu0 0.0
        %621 = vmatpush.xpose.msra.mxu0 0.0
        %622 = vmatpush.xpose.msra.mxu0 0.0
        %623 = vmatpush.xpose.msra.mxu0 0.0
        %624 = vmatpush.xpose.msra.mxu0 0.0
        %625 = vmatpush.xpose.msra.mxu0 0.0
        %626 = vmatpush.xpose.msra.mxu0 0.0
        %627 = vmatpush.xpose.msra.mxu0 0.0
        %628 = vmatpush.xpose.msra.mxu0 0.0
        %629 = vmatpush.xpose.msra.mxu0 0.0
        %630 = vmatpush.xpose.msra.mxu0 0.0
        %631 = vmatpush.xpose.msra.mxu0 0.0
        %632 = vmatpush.xpose.msra.mxu0 0.0
        %633 = vmatpush.xpose.msra.mxu0 0.0
        %634 = vmatpush.xpose.msra.mxu0 %v617
        %635 = vmatmul.f32.gmra.mxu0 %v615
        %v636 = vpop.f32.mrf.mxu0
        %v637 = vadd.f32 0.0, %v636
        %638 = vdwg.mxu0
        %vm639 = vcmp.eq.f32.partialorder %v565, 0.0
        %v640 = vsel %vm639, 1, 0
        %v641 = vperm.slane %v640, 0
        %vm642 = vcmp.eq.s32.totalorder %v641, 1
        %v643 = vsel %vm642, -1e+20, %v637
        %v644 = vmul.f32 %v643, 0.17677669
        %v645 = vld [vmem:[#allocation2] sm:$0xff]
        %v646 = vsel %vm614, %v644, -inf
        %647 = vmax.xlane.f32.xlu0 %v646
        %v648 = vpop.xlane.xlu0 %647
        %v649 = vmax.f32 %v645, %v648
        %v650 = vsub.f32 %v645, %v649
        %v651 = vmul.f32 %v650, 1.442695
        %v652 = vpow.pop %v651
        %654 = vset.pattern.permute.xlu0 0
        %655 = vperm.xlu0 %654, %v649
        %v656 = vpop.permute.xlu0 %655
        %v658 = vsub.f32 %v644, %v656
        %v659 = vmul.f32 %v658, 1.442695
        %v660 = vpow.pop %v659
        %v661 = vld [vmem:[#allocation3] sm:$0xff]
        %v662 = vmul.f32 %v652, %v661
        %v663 = vsel %vm614, %v660, 0.0
        %664 = vadd.xlane.f32.xlu0 %v663
        %v665 = vpop.xlane.xlu0 %664
        %v666 = vadd.f32 %v662, %v665
        %vm667 = vcmask 7168
        %668 = vst.msk [vmem:[#allocation3] sm:$0xff] %vm667, %v666
        %v669 = vld [vmem:[#allocation4] sm:$0xff]
        %671 = vset.pattern.permute.xlu0 0
        %672 = vperm.xlu0 %671, %v652
        %v673 = vpop.permute.xlu0 %672
        %v675 = vmul.f32 %v673, %v669
        %684 = vst [vmem:[#allocation1] ss:$9 sm:$0xff] %v557
        %s685 = scalar_lea.vmem [#allocation1], 1
        %686 = vst [vmem:[%s685] ss:$9 sm:$0xff] %v558
        %s687 = scalar_lea.vmem [#allocation1], 2
        %688 = vst [vmem:[%s687] ss:$9 sm:$0xff] %v559
        %s689 = scalar_lea.vmem [#allocation1], 3
        %690 = vst [vmem:[%s689] ss:$9 sm:$0xff] %v560
        %s691 = scalar_lea.vmem [#allocation1], 4
        %692 = vst [vmem:[%s691] ss:$9 sm:$0xff] %v561
        %s693 = scalar_lea.vmem [#allocation1], 5
        %694 = vst [vmem:[%s693] ss:$9 sm:$0xff] %v562
        %s695 = scalar_lea.vmem [#allocation1], 6
        %696 = vst [vmem:[%s695] ss:$9 sm:$0xff] %v563
        %s697 = scalar_lea.vmem [#allocation1], 7
        %698 = vst [vmem:[%s697] ss:$9 sm:$0xff] %v564
        %v699 = vld [vmem:[#allocation1] sm:$0xff]
        %v702 = vsel %vm614, %v660, 0
        %704 = vmatpush.msra.mxu0 0.0
        %705 = vmatpush.msra.mxu0 0.0
        %706 = vmatpush.msra.mxu0 0.0
        %707 = vmatpush.msra.mxu0 0.0
        %708 = vmatpush.msra.mxu0 0.0
        %709 = vmatpush.msra.mxu0 0.0
        %710 = vmatpush.msra.mxu0 0.0
        %711 = vmatpush.msra.mxu0 0.0
        %712 = vmatpush.msra.mxu0 0.0
        %713 = vmatpush.msra.mxu0 0.0
        %714 = vmatpush.msra.mxu0 0.0
        %715 = vmatpush.msra.mxu0 0.0
        %716 = vmatpush.msra.mxu0 0.0
        %717 = vmatpush.msra.mxu0 0.0
        %718 = vmatpush.msra.mxu0 0.0
        %719 = vmatpush.msra.mxu0 %v699
        %720 = vmatmul.f32.gmra.mxu0 %v702
        %v721 = vpop.f32.mrf.mxu0
        %v722 = vadd.f32 0.0, %v721
        %723 = vdwg.mxu0
        %v724 = vadd.f32 %v675, %v722
        %725 = vst.msk [vmem:[#allocation4] sm:$0xff] %vm614, %v724
        %726 = vst.msk [vmem:[#allocation2] sm:$0xff] %vm667, %v649
        // Predicated region
        $region164: #{decoder_forward.22} parent=146 // pred_check
          %p727 = pneg %p532
        $region165: #{decoder_forward.22} parent=146 // pred_check_branch
          %729 = sbr.rel (%p727) target = $region167
        $region166: #{decoder_forward.22} parent=146 // pred_region
          %v730 = vld [vmem:[#allocation3] sm:$0xff]
          %v731 = vrcp.pop %v730
          %v732 = vld [vmem:[#allocation4] sm:$0xff]
          %734 = vset.pattern.permute.xlu0 0
          %735 = vperm.xlu0 %734, %v731
          %v736 = vpop.permute.xlu0 %735
          %v738 = vmul.f32 %v732, %v736
          %v740 = vrot.slane %v738, 1
          %v741 = vrot.slane %v738, 2
          %v742 = vrot.slane %v738, 3
          %v743 = vrot.slane %v738, 4
          %v744 = vrot.slane %v738, 5
          %v745 = vrot.slane %v738, 6
          %v746 = vrot.slane %v738, 7
          %vm754 = vcmask 57344
          %755 = vst.msk [vmem:[%s520] sm:$0x1] %vm754, %v738
          %756 = vst.msk [vmem:[%s520 + $0x1] sm:$0x1] %vm754, %v740
          %757 = vst.msk [vmem:[%s520 + $0x2] sm:$0x1] %vm754, %v741
          %758 = vst.msk [vmem:[%s520 + $0x3] sm:$0x1] %vm754, %v742
          %759 = vst.msk [vmem:[%s520 + $0x4] sm:$0x1] %vm754, %v743
          %760 = vst.msk [vmem:[%s520 + $0x5] sm:$0x1] %vm754, %v744
          %761 = vst.msk [vmem:[%s520 + $0x6] sm:$0x1] %vm754, %v745
          %762 = vst.msk [vmem:[%s520 + $0x7] sm:$0x1] %vm754, %v746
        $region167: #{decoder_forward.22} parent=146 // pred_fallthru
          _
        %s763 = sand.u32 %s173, 1
        %s764 = sand.u32 %s173, 1
        %s765 = smul.addr %s764, 8
        %s766 = scalar_lea.vmem [#allocation8], %s765
        // Predicated region
        $region168: #{decoder_forward.22} parent=146 // pred_check
          %p767 = pneg %p183
        $region169: #{decoder_forward.22} parent=146 // pred_check_branch
          %769 = sbr.rel (%p767) target = $region171
        $region170: #{decoder_forward.22} parent=146 // pred_region
          %s770 = smul.u32 8, %s23
          %s771 = smul.addr %s770, 4
          %s772 = sadd.s32 %s22, %s771
          %s773 = smul.addr %s21, 32
          %s774 = sadd.s32 %s772, %s773
          %s775 = scalar_lea.vmem %s4, %s774
          // Predicated region
          $region172: #{decoder_forward.22} parent=170 // pred_check
            _
          $region173: #{decoder_forward.22} parent=170 // pred_check_branch
            %777 = sbr.rel (0) target = $region175
          $region174: #{decoder_forward.22} parent=170 // pred_region
            // Predicated region
            $region176: #{decoder_forward.22} parent=174 // pred_check
              _
            $region177: #{decoder_forward.22} parent=174 // pred_check_branch
              %779 = sbr.rel target = $region179
            $region178: #{decoder_forward.22} parent=174 // pred_region
              // Predicated region
              $region191: #{decoder_forward.22} parent=178 // pred_check
                _
              $region192: #{decoder_forward.22} parent=178 // pred_check_branch
                %809 = sbr.rel (0) target = $region194
              $region193: #{decoder_forward.22} parent=178 // pred_region
                loop: start=0, step=1, limit=1
                $region195: #{decoder_forward.22} parent=193 // loop_pre_header
                  _
                $region196: #{decoder_forward.22} parent=193 // loop_header
                  %s811 = sphi 0, %s815
                  %p812 = scmp.ge.s32.totalorder %s811, 1
                  %s816 = sphi %s766, %s766
                  %s817 = sphi %s775, %s775
                $region197: #{decoder_forward.22} parent=193 // loop_header_branch
                  %814 = sbr.rel (%p812) target = $region201
                $region198: #{decoder_forward.22} parent=193 // loop_body
                  _
                $region199: #{decoder_forward.22} parent=193 // loop_footer
                  %s815 = sadd.s32 1, %s811
                $region200: #{decoder_forward.22} parent=193 // loop_footer_branch
                  %810 = sbr.rel target = $region196
                $region201: #{decoder_forward.22} parent=193 // loop_exit
                  _
                %s819 = ssub.s32 2, 1
                loop: start=0, step=1, limit=1
                $region202: #{decoder_forward.22} parent=193 // loop_pre_header
                  _
                $region203: #{decoder_forward.22} parent=193 // loop_header
                  %s821 = sphi 0, %s825
                  %p822 = scmp.ge.s32.totalorder %s821, 1
                  %s826 = sphi %s766, %s766
                  %s827 = sphi %s775, %s775
                $region204: #{decoder_forward.22} parent=193 // loop_header_branch
                  %824 = sbr.rel (%p822) target = $region208
                $region205: #{decoder_forward.22} parent=193 // loop_body
                  %v828 = vld [vmem:[%s826] sm:%s819]
                  %829 = vst [vmem:[%s827] sm:%s819] %v828
                  %v830 = vld [vmem:[%s826 + $0x1] sm:%s819]
                  %831 = vst [vmem:[%s827 + $0x4] sm:%s819] %v830
                  %v832 = vld [vmem:[%s826 + $0x2] sm:%s819]
                  %833 = vst [vmem:[%s827 + $0x8] sm:%s819] %v832
                  %v834 = vld [vmem:[%s826 + $0x3] sm:%s819]
                  %835 = vst [vmem:[%s827 + $0xc] sm:%s819] %v834
                  %v836 = vld [vmem:[%s826 + $0x4] sm:%s819]
                  %837 = vst [vmem:[%s827 + $0x10] sm:%s819] %v836
                  %v838 = vld [vmem:[%s826 + $0x5] sm:%s819]
                  %839 = vst [vmem:[%s827 + $0x14] sm:%s819] %v838
                  %v840 = vld [vmem:[%s826 + $0x6] sm:%s819]
                  %841 = vst [vmem:[%s827 + $0x18] sm:%s819] %v840
                  %v842 = vld [vmem:[%s826 + $0x7] sm:%s819]
                  %843 = vst [vmem:[%s827 + $0x1c] sm:%s819] %v842
                $region206: #{decoder_forward.22} parent=193 // loop_footer
                  %s825 = sadd.s32 1, %s821
                $region207: #{decoder_forward.22} parent=193 // loop_footer_branch
                  %820 = sbr.rel target = $region203
                $region208: #{decoder_forward.22} parent=193 // loop_exit
                  _
              $region194: #{decoder_forward.22} parent=178 // pred_fallthru
                _
            $region179: #{decoder_forward.22} parent=174 // pred_fallthru
              _
            // Predicated region
            $region180: #{decoder_forward.22} parent=174 // pred_check
              _
            $region181: #{decoder_forward.22} parent=174 // pred_check_branch
              %781 = sbr.rel (0) target = $region183
            $region182: #{decoder_forward.22} parent=174 // pred_region
              %s783 = ssub.s32 2, 1
              loop: start=0, step=1, limit=1
              $region184: #{decoder_forward.22} parent=182 // loop_pre_header
                _
              $region185: #{decoder_forward.22} parent=182 // loop_header
                %s785 = sphi 0, %s789
                %p786 = scmp.ge.s32.totalorder %s785, 1
                %s790 = sphi %s766, %s766
                %s791 = sphi %s775, %s775
              $region186: #{decoder_forward.22} parent=182 // loop_header_branch
                %788 = sbr.rel (%p786) target = $region190
              $region187: #{decoder_forward.22} parent=182 // loop_body
                %v792 = vld [vmem:[%s790] sm:%s783]
                %793 = vst [vmem:[%s791] sm:%s783] %v792
                %v794 = vld [vmem:[%s790 + $0x1] sm:%s783]
                %795 = vst [vmem:[%s791 + $0x4] sm:%s783] %v794
                %v796 = vld [vmem:[%s790 + $0x2] sm:%s783]
                %797 = vst [vmem:[%s791 + $0x8] sm:%s783] %v796
                %v798 = vld [vmem:[%s790 + $0x3] sm:%s783]
                %799 = vst [vmem:[%s791 + $0xc] sm:%s783] %v798
                %v800 = vld [vmem:[%s790 + $0x4] sm:%s783]
                %801 = vst [vmem:[%s791 + $0x10] sm:%s783] %v800
                %v802 = vld [vmem:[%s790 + $0x5] sm:%s783]
                %803 = vst [vmem:[%s791 + $0x14] sm:%s783] %v802
                %v804 = vld [vmem:[%s790 + $0x6] sm:%s783]
                %805 = vst [vmem:[%s791 + $0x18] sm:%s783] %v804
                %v806 = vld [vmem:[%s790 + $0x7] sm:%s783]
                %807 = vst [vmem:[%s791 + $0x1c] sm:%s783] %v806
              $region188: #{decoder_forward.22} parent=182 // loop_footer
                %s789 = sadd.s32 1, %s785
              $region189: #{decoder_forward.22} parent=182 // loop_footer_branch
                %784 = sbr.rel target = $region185
              $region190: #{decoder_forward.22} parent=182 // loop_exit
                _
            $region183: #{decoder_forward.22} parent=174 // pred_fallthru
              _
          $region175: #{decoder_forward.22} parent=170 // pred_fallthru
            _
          %844 = vnop
        $region171: #{decoder_forward.22} parent=146 // pred_fallthru
          _
      $region147: #{decoder_forward.22} parent=5 // pred_fallthru
        _
      %p845 = scmp.le.s32.totalorder 2, %s10
      // Predicated region
      $region209: #{decoder_forward.22} parent=5 // pred_check
        %p846 = pneg %p845
      $region210: #{decoder_forward.22} parent=5 // pred_check_branch
        %848 = sbr.rel (%p846) target = $region212
      $region211: #{decoder_forward.22} parent=5 // pred_region
        %s849 = ssub.s32 %s10, 2
        // Predicated region
        $region213: #{decoder_forward.22} parent=211 // pred_check
          %p850 = pneg %p189
        $region214: #{decoder_forward.22} parent=211 // pred_check_branch
          %852 = sbr.rel (%p850) target = $region216
        $region215: #{decoder_forward.22} parent=211 // pred_region
          %s853 = sand.u32 %s174, 1
          %s854 = sand.u32 %s174, 1
          %s855 = smul.addr %s854, 8
          %s856 = scalar_lea.vmem [#allocation8], %s855
        $region216: #{decoder_forward.22} parent=211 // pred_fallthru
          _
      $region212: #{decoder_forward.22} parent=5 // pred_fallthru
        _
    $region6: #{decoder_forward.22} parent=1 // loop_footer
      %s14 = sadd.s32 1, %s10
    $region7: #{decoder_forward.22} parent=1 // loop_footer_branch
      %9 = sbr.rel target = $region3
    $region8: #{decoder_forward.22} parent=1 // loop_exit
      _

</llo_original>
